<compile_context>
chip_gen: v7x
topology: tpu7x:2x2x1
jax: 0.10.0
libtpu: 0.0.40
codegen_flags: <defaults>
</compile_context>

<pallas_src>
import math
from dataclasses import dataclass
from functools import partial
from typing import Optional

import numpy as np
import jax
import jax.numpy as jnp
from jax.experimental import pallas as pl
from jax.experimental.pallas import tpu as pltpu


# ----------------------------- model config ---------------------------------

@dataclass
class ModelArgs:
    dim: int = 256
    n_layers: int = 2
    n_heads: int = 4
    n_kv_heads: Optional[int] = 2
    vocab_size: int = 512
    multiple_of: int = 128
    ffn_dim_multiplier: Optional[float] = None
    norm_eps: float = 1e-5
    max_batch_size: int = 2
    max_seq_len: int = 16


def ffn_hidden_dim(args: ModelArgs) -> int:
    hidden = 4 * args.dim
    hidden = int(2 * hidden / 3)
    if args.ffn_dim_multiplier is not None:
        hidden = int(args.ffn_dim_multiplier * hidden)
    hidden = args.multiple_of * ((hidden + args.multiple_of - 1) // args.multiple_of)
    return hidden


# ----------------------------- fused decode-step kernel -----------------------

def _decode_step_kernel(sp_ref,                                   # scalar prefetch (SMEM)
                        h0_ref, ag_ref, fg_ref, wqkv_ref, wo_ref, w13_ref, w2_ref,
                        cos_ref, sin_ref, kc_ref, vc_ref, fng_ref, wout_ref,   # inputs
                        logits_ref, kout_ref, vout_ref,            # outputs
                        h_scr,                                     # VMEM scratch
                        *, eps, n_heads, n_kv, head_dim, hidden, T):
    """One grid step == one transformer layer; last step also does norm + LM head."""
    l = pl.program_id(0)
    sp = sp_ref[0]                                   # runtime decode position (int32)
    hd = head_dim
    half = hd // 2
    n_rep = n_heads // n_kv
    QW = n_heads * hd
    KVW = n_kv * hd
    scale = 1.0 / math.sqrt(hd)
    f32 = jnp.float32

    @pl.when(l == 0)
    def _():
        h_scr[...] = h0_ref[...]                     # residual enters VMEM once

    h = h_scr[...]                                   # (B, dim) f32
    B = h.shape[0]

    # ---------------- attention sub-block ----------------
    xn = h * jax.lax.rsqrt(jnp.mean(h * h, axis=-1, keepdims=True) + eps) * ag_ref[0]
    # fused QKV projection at M=B, bf16 weights, f32 accumulation
    qkv = jnp.dot(xn.astype(wqkv_ref.dtype), wqkv_ref[0], preferred_element_type=f32)
    q = qkv[:, :QW]                                  # [all-heads-even | all-heads-odd]
    k = qkv[:, QW:QW + KVW]                          # [all-kv-even    | all-kv-odd]
    v = qkv[:, QW + KVW:]                            # natural per-kv-head layout

    # RoPE on the split slabs (pure VPU; cos/sin rows selected by start_pos BlockSpec)
    cos = cos_ref[0]                                 # (1, QW//2)
    sin = sin_ref[0]
    q_e, q_o = q[:, :QW // 2], q[:, QW // 2:]
    k_e, k_o = k[:, :KVW // 2], k[:, KVW // 2:]
    cos_k, sin_k = cos[:, :KVW // 2], sin[:, :KVW // 2]
    q_er = q_e * cos - q_o * sin
    q_or = q_e * sin + q_o * cos
    k_er = k_e * cos_k - k_o * sin_k
    k_or = k_e * sin_k + k_o * cos_k

    # Row-granular KV-cache write: the aliased output block is exactly row `sp`.
    kout_ref[0, 0] = jnp.concatenate([k_er, k_or], axis=1).astype(kout_ref.dtype)
    vout_ref[0, 0] = v.astype(vout_ref.dtype)

    kc = kc_ref[0]                                   # (T, B, KVW) bf16 history
    vc = vc_ref[0]
    pos_ids = jax.lax.broadcasted_iota(jnp.int32, (1, T), 1)
    hist_valid = pos_ids < sp                        # history rows [0, sp); fresh row handled below

    rows = []
    for b in range(B):                               # small unrolled batch loop (attention only)
        pieces = []
        for g in range(n_kv):                        # per KV group: n_rep heads at once
            khe = kc[:, b, g * half:(g + 1) * half].astype(f32)                        # (T, half)
            kho = kc[:, b, KVW // 2 + g * half:KVW // 2 + (g + 1) * half].astype(f32)  # (T, half)
            vh = vc[:, b, g * hd:(g + 1) * hd]                                          # (T, hd) bf16
            qge = jnp.concatenate(
                [q_er[b:b + 1, (g * n_rep + r) * half:(g * n_rep + r + 1) * half]
                 for r in range(n_rep)], axis=0)                                        # (n_rep, half)
            qgo = jnp.concatenate(
                [q_or[b:b + 1, (g * n_rep + r) * half:(g * n_rep + r + 1) * half]
                 for r in range(n_rep)], axis=0)
            s_h = (jnp.einsum('nd,td->nt', qge, khe, preferred_element_type=f32)
                   + jnp.einsum('nd,td->nt', qgo, kho, preferred_element_type=f32)) * scale
            s_h = jnp.where(hist_valid, s_h, -1e30)                                     # (n_rep, T)
            kfe = k_er[b:b + 1, g * half:(g + 1) * half]
            kfo = k_or[b:b + 1, g * half:(g + 1) * half]
            s_c = (jnp.einsum('nd,td->nt', qge, kfe, preferred_element_type=f32)
                   + jnp.einsum('nd,td->nt', qgo, kfo, preferred_element_type=f32)) * scale
            s = jnp.concatenate([s_h, s_c], axis=1)                                     # (n_rep, T+1)
            s = s - jnp.max(s, axis=-1, keepdims=True)
            p = jnp.exp(s)
            p = p * pl.reciprocal(jnp.sum(p, axis=-1, keepdims=True), approx=True)
            vf = v[b:b + 1, g * hd:(g + 1) * hd]                                        # (1, hd) f32
            og = (jnp.dot(p[:, :T].astype(vh.dtype), vh, preferred_element_type=f32)
                  + p[:, T:T + 1] * vf)                                                 # (n_rep, hd)
            pieces.extend([og[r:r + 1] for r in range(n_rep)])
        rows.append(jnp.concatenate(pieces, axis=1))                                    # (1, QW)
    attn = jnp.concatenate(rows, axis=0)                                                # (B, QW)
    # single Wo matmul for all heads & batch rows + residual add
    h = h + jnp.dot(attn.astype(wo_ref.dtype), wo_ref[0], preferred_element_type=f32)

    # ---------------- FFN sub-block ----------------
    xn2 = h * jax.lax.rsqrt(jnp.mean(h * h, axis=-1, keepdims=True) + eps) * fg_ref[0]
    h13 = jnp.dot(xn2.astype(w13_ref.dtype), w13_ref[0], preferred_element_type=f32)    # (B, 2*hidden)
    h1, h3 = h13[:, :hidden], h13[:, hidden:]
    gact = h1 * jax.nn.sigmoid(h1) * h3                                                 # SwiGLU (f32)
    h = h + jnp.dot(gact.astype(w2_ref.dtype), w2_ref[0], preferred_element_type=f32)

    h_scr[...] = h                                   # residual carried to next layer in VMEM

    # ---------------- final norm + LM head (last layer only) ----------------
    @pl.when(l == pl.num_programs(0) - 1)
    def _():
        xnf = h * jax.lax.rsqrt(jnp.mean(h * h, axis=-1, keepdims=True) + eps) * fng_ref[...]
        logits_ref[...] = jnp.dot(xnf.astype(wout_ref.dtype), wout_ref[...],
                                  preferred_element_type=f32)


# ----------------------------- kernel wrapper ---------------------------------

def transformer_forward(params, cache_k, cache_v, tokens, start_pos, args: ModelArgs):
    B, S = tokens.shape
    assert S == 1, "Only one token at a time can be processed"
    dim = args.dim
    hd = dim // args.n_heads
    n_kv = args.n_kv_heads if args.n_kv_heads is not None else args.n_heads
    QW = args.n_heads * hd
    KVW = n_kv * hd
    hidden = params["w2_s"].shape[1]
    L = args.n_layers
    T = cache_k.shape[1]
    V = args.vocab_size

    # Embedding gather stays as one XLA take (per-token DMAs are below the DMA floor).
    h0 = jnp.take(params["tok_emb"], tokens[:, 0], axis=0)          # (B, dim) f32
    sp = jnp.asarray(start_pos, jnp.int32).reshape(1)                # runtime scalar

    kernel = partial(_decode_step_kernel, eps=args.norm_eps, n_heads=args.n_heads,
                     n_kv=n_kv, head_dim=hd, hidden=hidden, T=T)

    grid_spec = pltpu.PrefetchScalarGridSpec(
        num_scalar_prefetch=1,
        grid=(L,),
        in_specs=[
            pl.BlockSpec((B, dim), lambda l, sp: (0, 0)),                  # h0 (resident)
            pl.BlockSpec((1, 1, dim), lambda l, sp: (l, 0, 0)),            # attn norm gamma
            pl.BlockSpec((1, 1, dim), lambda l, sp: (l, 0, 0)),            # ffn norm gamma
            pl.BlockSpec((1, dim, QW + 2 * KVW), lambda l, sp: (l, 0, 0)),  # wqkv (bf16)
            pl.BlockSpec((1, QW, dim), lambda l, sp: (l, 0, 0)),           # wo   (bf16)
            pl.BlockSpec((1, dim, 2 * hidden), lambda l, sp: (l, 0, 0)),   # w1|w3 (bf16)
            pl.BlockSpec((1, hidden, dim), lambda l, sp: (l, 0, 0)),       # w2   (bf16)
            pl.BlockSpec((1, 1, QW // 2), lambda l, sp: (sp[0], 0, 0)),    # RoPE cos row
            pl.BlockSpec((1, 1, QW // 2), lambda l, sp: (sp[0], 0, 0)),    # RoPE sin row
            pl.BlockSpec((1, T, B, KVW), lambda l, sp: (l, 0, 0, 0)),      # K cache (read)
            pl.BlockSpec((1, T, B, KVW), lambda l, sp: (l, 0, 0, 0)),      # V cache (read)
            pl.BlockSpec((1, dim), lambda l, sp: (0, 0)),                  # final norm gamma
            pl.BlockSpec((dim, V), lambda l, sp: (0, 0)),                  # output proj (resident)
        ],
        out_specs=(
            pl.BlockSpec((B, V), lambda l, sp: (0, 0)),                    # logits (written at l=L-1)
            pl.BlockSpec((1, 1, B, KVW), lambda l, sp: (l, sp[0], 0, 0)),  # new K row (in place)
            pl.BlockSpec((1, 1, B, KVW), lambda l, sp: (l, sp[0], 0, 0)),  # new V row (in place)
        ),
        scratch_shapes=[pltpu.VMEM((B, dim), jnp.float32)],                # residual h across layers
    )

    logits, new_k, new_v = pl.pallas_call(
        kernel,
        grid_spec=grid_spec,
        out_shape=(jax.ShapeDtypeStruct((B, V), jnp.float32),
                   jax.ShapeDtypeStruct(cache_k.shape, cache_k.dtype),
                   jax.ShapeDtypeStruct(cache_v.shape, cache_v.dtype)),
        # operand indices include the scalar-prefetch arg: 10 = cache_k, 11 = cache_v
        input_output_aliases={10: 1, 11: 2},
        compiler_params=pltpu.CompilerParams(dimension_semantics=("arbitrary",)),
    )(sp, h0, params["attn_g"], params["ffn_g"], params["wqkv_s"], params["wo_s"],
      params["w13_s"], params["w2_s"], params["rope_cos"], params["rope_sin"],
      cache_k, cache_v, params["final_norm2"], params["output_bf16"])

    return logits.reshape(B, S, V), new_k, new_v


# ----------------------------- parameters ------------------------------------

def init_params(key, args: ModelArgs):
    hd = args.dim // args.n_heads
    half = hd // 2
    n_heads = args.n_heads
    n_kv = args.n_kv_heads if args.n_kv_heads is not None else args.n_heads
    hidden = ffn_hidden_dim(args)
    QW = n_heads * hd
    KVW = n_kv * hd
    L = args.n_layers
    P = args.max_seq_len * 2

    def w(k, shape, scale=0.02):
        return scale * jax.random.normal(k, shape, dtype=jnp.float32)

    keys = jax.random.split(key, 2 + L)
    params = {
        "tok_emb": w(keys[0], (args.vocab_size, args.dim)),
        "output_t": w(keys[1], (args.dim, args.vocab_size)),
        "final_norm": jnp.ones((args.dim,), jnp.float32),
    }
    params["final_norm2"] = params["final_norm"].reshape(1, args.dim)
    params["output_bf16"] = params["output_t"].astype(jnp.bfloat16)

    # Column permutation so q/k come out of the matmul as [all-heads-even | all-heads-odd];
    # valid because q.k is invariant under a common column permutation.
    def even_odd_perm(nh):
        ev = (np.arange(nh)[:, None] * hd + 2 * np.arange(half)[None, :]).reshape(-1)
        return np.concatenate([ev, ev + 1])

    perm_q = even_odd_perm(n_heads)
    perm_k = even_odd_perm(n_kv)

    layers, wqkv_s, wo_s, w13_s, w2_s = [], [], [], [], []
    for li in range(L):
        lk = jax.random.split(keys[2 + li], 7)
        wq_t = w(lk[0], (args.dim, QW))
        wk_t = w(lk[1], (args.dim, KVW))
        wv_t = w(lk[2], (args.dim, KVW))
        wo_t = w(lk[3], (QW, args.dim))
        w1_t = w(lk[4], (args.dim, hidden))
        w3_t = w(lk[5], (args.dim, hidden))
        w2_t = w(lk[6], (hidden, args.dim))
        layers.append({
            "attn_norm": jnp.ones((args.dim,), jnp.float32),
            "ffn_norm": jnp.ones((args.dim,), jnp.float32),
            "wq_t": wq_t, "wk_t": wk_t, "wv_t": wv_t, "wo_t": wo_t,
            "w1_t": w1_t, "w3_t": w3_t, "w2_t": w2_t,
        })
        wqkv_s.append(jnp.concatenate([wq_t[:, perm_q], wk_t[:, perm_k], wv_t], axis=1))
        wo_s.append(wo_t)
        w13_s.append(jnp.concatenate([w1_t, w3_t], axis=1))
        w2_s.append(w2_t)
    params["layers"] = layers                                    # raw f32 (reference only)
    params["wqkv_s"] = jnp.stack(wqkv_s).astype(jnp.bfloat16)    # (L, dim, QW+2*KVW)
    params["wo_s"] = jnp.stack(wo_s).astype(jnp.bfloat16)        # (L, QW, dim)
    params["w13_s"] = jnp.stack(w13_s).astype(jnp.bfloat16)      # (L, dim, 2*hidden)
    params["w2_s"] = jnp.stack(w2_s).astype(jnp.bfloat16)        # (L, hidden, dim)
    params["attn_g"] = jnp.stack([lp["attn_norm"] for lp in layers]).reshape(L, 1, args.dim)
    params["ffn_g"] = jnp.stack([lp["ffn_norm"] for lp in layers]).reshape(L, 1, args.dim)

    # RoPE tables laid out for the de-interleaved slabs: one row per position,
    # tiled per head (k uses the first KVW/2 columns of the same row).
    theta = 1.0 / (10000.0 ** (jnp.arange(0, hd, 2, dtype=jnp.float32) / hd))   # (half,)
    pos = jnp.arange(P, dtype=jnp.float32)
    ang = jnp.outer(pos, theta)                                                 # (P, half)
    params["rope_cos"] = jnp.tile(jnp.cos(ang), (1, n_heads)).reshape(P, 1, QW // 2)
    params["rope_sin"] = jnp.tile(jnp.sin(ang), (1, n_heads)).reshape(P, 1, QW // 2)
    return params


# ----------------------------- pure-JAX reference -----------------------------

def reference_forward(params, tokens, start_pos, args: ModelArgs):
    """Torch-convention implementation; mirrors the kernel's bf16 matmul casts."""
    B, S = tokens.shape
    hd = args.dim // args.n_heads
    n_kv = args.n_kv_heads if args.n_kv_heads is not None else args.n_heads
    n_rep = args.n_heads // n_kv
    f32 = jnp.float32

    def mm(x, w):
        return jnp.dot(x.astype(jnp.bfloat16), w.astype(jnp.bfloat16),
                       preferred_element_type=f32)

    def rms(x, g):
        return x * jax.lax.rsqrt(jnp.mean(x * x, -1, keepdims=True) + args.norm_eps) * g

    theta = 1.0 / (10000.0 ** (jnp.arange(0, hd, 2, dtype=f32) / hd))
    ang = start_pos * theta
    cos, sin = jnp.cos(ang), jnp.sin(ang)

    def rope(x):  # interleaved pairs, like the torch module
        xr = x.reshape(*x.shape[:-1], hd // 2, 2)
        xe, xo = xr[..., 0], xr[..., 1]
        return jnp.stack([xe * cos - xo * sin, xe * sin + xo * cos], -1).reshape(x.shape)

    h = params["tok_emb"][tokens]
    cache_k = jnp.zeros((args.n_layers, B, args.max_seq_len, n_kv, hd), f32)
    cache_v = jnp.zeros_like(cache_k)
    for li in range(args.n_layers):
        lp = params["layers"][li]
        xn = rms(h, lp["attn_norm"])
        xq = rope(mm(xn, lp["wq_t"]).reshape(B, S, args.n_heads, hd))
        xk = rope(mm(xn, lp["wk_t"]).reshape(B, S, n_kv, hd))
        xv = mm(xn, lp["wv_t"]).reshape(B, S, n_kv, hd)
        cache_k = cache_k.at[li, :, start_pos:start_pos + S].set(xk)
        cache_v = cache_v.at[li, :, start_pos:start_pos + S].set(xv)
        keys = jnp.repeat(cache_k[li, :, :start_pos + S], n_rep, axis=2)
        vals = jnp.repeat(cache_v[li, :, :start_pos + S], n_rep, axis=2)
        q = jnp.transpose(xq, (0, 2, 1, 3))
        k = jnp.transpose(keys, (0, 2, 1, 3))
        v = jnp.transpose(vals, (0, 2, 1, 3))
        s = (q @ jnp.swapaxes(k, 2, 3)) / math.sqrt(hd)
        out = jax.nn.softmax(s, axis=-1) @ v
        out = jnp.transpose(out, (0, 2, 1, 3)).reshape(B, S, -1)
        h = h + mm(out, lp["wo_t"])
        hn = rms(h, lp["ffn_norm"])
        h = h + mm(jax.nn.silu(mm(hn, lp["w1_t"])) * mm(hn, lp["w3_t"]), lp["w2_t"])
    h = rms(h, params["final_norm"])
    return mm(h, params["output_t"])


# ----------------------------- driver ------------------------------------------

if __name__ == "__main__":
    args = ModelArgs(dim=256, n_layers=2, n_heads=4, n_kv_heads=2, vocab_size=512,
                     multiple_of=128, norm_eps=1e-5, max_batch_size=2, max_seq_len=16)
    hd = args.dim // args.n_heads
    n_kv = args.n_kv_heads if args.n_kv_heads is not None else args.n_heads
    KVW = n_kv * hd
    B = args.max_batch_size
    L = args.n_layers
    T = args.max_seq_len

    key = jax.random.PRNGKey(0)
    pkey, tkey = jax.random.split(key)
    params = init_params(pkey, args)

    # KV cache: bf16, layout (L, T, B, KVW); K columns in [all-kv-even | all-kv-odd] order.
    cache_k = jnp.zeros((L, T, B, KVW), jnp.bfloat16)
    cache_v = jnp.zeros((L, T, B, KVW), jnp.bfloat16)

    start_pos = 2                  # decode position; earlier cache slots are zeros
    tokens = jax.random.randint(tkey, (B, 1), 0, args.vocab_size, dtype=jnp.int32)
    sp_arr = jnp.array([start_pos], dtype=jnp.int32)   # runtime scalar -> no recompiles

    fwd = jax.jit(partial(transformer_forward, args=args))
    logits, cache_k, cache_v = fwd(params, cache_k, cache_v, tokens, sp_arr)
    logits = jax.block_until_ready(logits)

    ref = reference_forward(params, tokens, start_pos, args)

    assert logits.shape == (B, 1, args.vocab_size)
    assert bool(jnp.all(jnp.isfinite(logits)))
    max_err = float(jnp.max(jnp.abs(logits - ref)))
    assert max_err < 2e-2, f"max_err={max_err}"
    print("KERNEL_OK")
</pallas_src>

<mosaic_0001>
module attributes {stable_mosaic.version = 11 : i64} {
  func.func @_decode_step_kernel(%arg0: i32, %arg1: memref<1xi32, #tpu.memory_space<smem>>, %arg2: memref<2x256xf32, #tpu.memory_space<vmem>>, %arg3: memref<1x1x256xf32, #tpu.memory_space<vmem>>, %arg4: memref<1x1x256xf32, #tpu.memory_space<vmem>>, %arg5: memref<1x256x512xbf16, #tpu.memory_space<vmem>>, %arg6: memref<1x256x256xbf16, #tpu.memory_space<vmem>>, %arg7: memref<1x256x1536xbf16, #tpu.memory_space<vmem>>, %arg8: memref<1x768x256xbf16, #tpu.memory_space<vmem>>, %arg9: memref<1x1x128xf32, #tpu.memory_space<vmem>>, %arg10: memref<1x1x128xf32, #tpu.memory_space<vmem>>, %arg11: memref<1x16x2x128xbf16, #tpu.memory_space<vmem>>, %arg12: memref<1x16x2x128xbf16, #tpu.memory_space<vmem>>, %arg13: memref<1x256xf32, #tpu.memory_space<vmem>>, %arg14: memref<256x512xbf16, #tpu.memory_space<vmem>>, %arg15: memref<2x512xf32, #tpu.memory_space<vmem>>, %arg16: memref<1x1x2x128xbf16, #tpu.memory_space<vmem>>, %arg17: memref<1x1x2x128xbf16, #tpu.memory_space<vmem>>, %arg18: memref<2x256xf32, #tpu.memory_space<vmem>>) attributes {dimension_semantics = [#tpu.dimension_semantics<arbitrary>], iteration_bounds = array<i64: 2>, scalar_prefetch = 1 : i64, scratch_operands = 1 : i64, tpu.core_type = #tpu.core_type<tc>, window_params = [{pipeline_mode = #tpu.pipeline_mode<synchronous>, transform_indices = @transform_0, window_bounds = array<i64: 2, 256>}, {transform_indices = @transform_1, window_bounds = array<i64: 1, 1, 256>}, {transform_indices = @transform_2, window_bounds = array<i64: 1, 1, 256>}, {transform_indices = @transform_3, window_bounds = array<i64: 1, 256, 512>}, {transform_indices = @transform_4, window_bounds = array<i64: 1, 256, 256>}, {transform_indices = @transform_5, window_bounds = array<i64: 1, 256, 1536>}, {transform_indices = @transform_6, window_bounds = array<i64: 1, 768, 256>}, {transform_indices = @transform_7, window_bounds = array<i64: 1, 1, 128>}, {transform_indices = @transform_8, window_bounds = array<i64: 1, 1, 128>}, {transform_indices = @transform_9, window_bounds = array<i64: 1, 16, 2, 128>}, {transform_indices = @transform_10, window_bounds = array<i64: 1, 16, 2, 128>}, {pipeline_mode = #tpu.pipeline_mode<synchronous>, transform_indices = @transform_11, window_bounds = array<i64: 1, 256>}, {pipeline_mode = #tpu.pipeline_mode<synchronous>, transform_indices = @transform_12, window_bounds = array<i64: 256, 512>}, {pipeline_mode = #tpu.pipeline_mode<synchronous>, transform_indices = @transform_13, window_bounds = array<i64: 2, 512>}, {transform_indices = @transform_14, window_bounds = array<i64: 1, 1, 2, 128>}, {transform_indices = @transform_15, window_bounds = array<i64: 1, 1, 2, 128>}]} {
    %c0 = arith.constant 0 : index
    %0 = memref.load %arg1[%c0] : memref<1xi32, #tpu.memory_space<smem>>
    %c0_i32 = arith.constant 0 : i32
    %1 = arith.cmpi eq, %arg0, %c0_i32 : i32
    %2 = arith.extui %1 : i1 to i32
    %c0_i32_0 = arith.constant 0 : i32
    %3 = arith.cmpi ne, %2, %c0_i32_0 : i32
    scf.if %3 {
      %c0_96 = arith.constant 0 : index
      %c0_97 = arith.constant 0 : index
      %324 = vector.load %arg2[%c0_96, %c0_97] : memref<2x256xf32, #tpu.memory_space<vmem>>, vector<2x256xf32>
      %c0_98 = arith.constant 0 : index
      %c0_99 = arith.constant 0 : index
      %325 = vector.load %arg18[%c0_98, %c0_99] : memref<2x256xf32, #tpu.memory_space<vmem>>, vector<2x256xf32>
      tpu.vector_store %arg18[%c0_98, %c0_99], %324 {strides = array<i32>} : memref<2x256xf32, #tpu.memory_space<vmem>>, vector<2x256xf32>,
    } else {
    }
    %c0_1 = arith.constant 0 : index
    %c0_2 = arith.constant 0 : index
    %4 = vector.load %arg18[%c0_1, %c0_2] : memref<2x256xf32, #tpu.memory_space<vmem>>, vector<2x256xf32>
    %5 = arith.mulf %4, %4 : vector<2x256xf32>
    %cst = arith.constant dense<0.000000e+00> : vector<2xf32>
    %6 = vector.multi_reduction <add>, %5, %cst [1] : vector<2x256xf32> to vector<2xf32>
    %7 = vector.shape_cast %6 : vector<2xf32> to vector<2x1xf32>
    %cst_3 = arith.constant 2.560000e+02 : f32
    %8 = vector.broadcast %cst_3 : f32 to vector<2x1xf32>
    %9 = arith.divf %7, %8 : vector<2x1xf32>
    %cst_4 = arith.constant 9.99999974E-6 : f32
    %10 = vector.broadcast %cst_4 : f32 to vector<2x1xf32>
    %11 = arith.addf %9, %10 : vector<2x1xf32>
    %12 = math.rsqrt %11 : vector<2x1xf32>
    %13 = vector.broadcast %12 : vector<2x1xf32> to vector<2x256xf32>
    %14 = arith.mulf %4, %13 : vector<2x256xf32>
    %c0_5 = arith.constant 0 : index
    %c0_6 = arith.constant 0 : index
    %c0_7 = arith.constant 0 : index
    %15 = vector.load %arg3[%c0_5, %c0_6, %c0_7] : memref<1x1x256xf32, #tpu.memory_space<vmem>>, vector<1x1x256xf32>
    %16 = vector.shape_cast %15 : vector<1x1x256xf32> to vector<1x256xf32>
    %17 = vector.broadcast %16 : vector<1x256xf32> to vector<2x256xf32>
    %18 = arith.mulf %14, %17 : vector<2x256xf32>
    %19 = arith.truncf %18 : vector<2x256xf32> to vector<2x256xbf16>
    %c0_8 = arith.constant 0 : index
    %c0_9 = arith.constant 0 : index
    %c0_10 = arith.constant 0 : index
    %20 = vector.load %arg5[%c0_8, %c0_9, %c0_10] : memref<1x256x512xbf16, #tpu.memory_space<vmem>>, vector<1x256x512xbf16>
    %21 = vector.shape_cast %20 : vector<1x256x512xbf16> to vector<256x512xbf16>
    %cst_11 = arith.constant dense<0.000000e+00> : vector<2x512xf32>
    %22 = tpu.matmul %19, %21, %cst_11 {dimension_numbers = #tpu.dot_dimension_numbers<[1], [0], [0], [1], [0, 0, 1, 1], [], []>} : vector<2x256xbf16>, vector<256x512xbf16>, vector<2x512xf32> -> vector<2x512xf32>
    %23 = vector.extract_strided_slice %22 {offsets = [0, 0], sizes = [2, 256], strides = [1, 1]} : vector<2x512xf32> to vector<2x256xf32>
    %24 = vector.extract_strided_slice %22 {offsets = [0, 256], sizes = [2, 128], strides = [1, 1]} : vector<2x512xf32> to vector<2x128xf32>
    %25 = vector.extract_strided_slice %22 {offsets = [0, 384], sizes = [2, 128], strides = [1, 1]} : vector<2x512xf32> to vector<2x128xf32>
    %c0_12 = arith.constant 0 : index
    %c0_13 = arith.constant 0 : index
    %c0_14 = arith.constant 0 : index
    %26 = vector.load %arg9[%c0_12, %c0_13, %c0_14] : memref<1x1x128xf32, #tpu.memory_space<vmem>>, vector<1x1x128xf32>
    %27 = vector.shape_cast %26 : vector<1x1x128xf32> to vector<1x128xf32>
    %c0_15 = arith.constant 0 : index
    %c0_16 = arith.constant 0 : index
    %c0_17 = arith.constant 0 : index
    %28 = vector.load %arg10[%c0_15, %c0_16, %c0_17] : memref<1x1x128xf32, #tpu.memory_space<vmem>>, vector<1x1x128xf32>
    %29 = vector.shape_cast %28 : vector<1x1x128xf32> to vector<1x128xf32>
    %30 = vector.extract_strided_slice %23 {offsets = [0, 0], sizes = [2, 128], strides = [1, 1]} : vector<2x256xf32> to vector<2x128xf32>
    %31 = vector.extract_strided_slice %23 {offsets = [0, 128], sizes = [2, 128], strides = [1, 1]} : vector<2x256xf32> to vector<2x128xf32>
    %32 = vector.extract_strided_slice %24 {offsets = [0, 0], sizes = [2, 64], strides = [1, 1]} : vector<2x128xf32> to vector<2x64xf32>
    %33 = vector.extract_strided_slice %24 {offsets = [0, 64], sizes = [2, 64], strides = [1, 1]} : vector<2x128xf32> to vector<2x64xf32>
    %34 = vector.extract_strided_slice %27 {offsets = [0, 0], sizes = [1, 64], strides = [1, 1]} : vector<1x128xf32> to vector<1x64xf32>
    %35 = vector.extract_strided_slice %29 {offsets = [0, 0], sizes = [1, 64], strides = [1, 1]} : vector<1x128xf32> to vector<1x64xf32>
    %36 = vector.broadcast %27 : vector<1x128xf32> to vector<2x128xf32>
    %37 = arith.mulf %30, %36 : vector<2x128xf32>
    %38 = vector.broadcast %29 : vector<1x128xf32> to vector<2x128xf32>
    %39 = arith.mulf %31, %38 : vector<2x128xf32>
    %40 = arith.subf %37, %39 : vector<2x128xf32>
    %41 = vector.broadcast %29 : vector<1x128xf32> to vector<2x128xf32>
    %42 = arith.mulf %30, %41 : vector<2x128xf32>
    %43 = vector.broadcast %27 : vector<1x128xf32> to vector<2x128xf32>
    %44 = arith.mulf %31, %43 : vector<2x128xf32>
    %45 = arith.addf %42, %44 : vector<2x128xf32>
    %46 = vector.broadcast %34 : vector<1x64xf32> to vector<2x64xf32>
    %47 = arith.mulf %32, %46 : vector<2x64xf32>
    %48 = vector.broadcast %35 : vector<1x64xf32> to vector<2x64xf32>
    %49 = arith.mulf %33, %48 : vector<2x64xf32>
    %50 = arith.subf %47, %49 : vector<2x64xf32>
    %51 = vector.broadcast %35 : vector<1x64xf32> to vector<2x64xf32>
    %52 = arith.mulf %32, %51 : vector<2x64xf32>
    %53 = vector.broadcast %34 : vector<1x64xf32> to vector<2x64xf32>
    %54 = arith.mulf %33, %53 : vector<2x64xf32>
    %55 = arith.addf %52, %54 : vector<2x64xf32>
    %56 = tpu.concatenate %50, %55 in 1 : vector<2x64xf32>, vector<2x64xf32> -> vector<2x128xf32>
    %57 = arith.truncf %56 : vector<2x128xf32> to vector<2x128xbf16>
    %c0_18 = arith.constant 0 : index
    %c0_19 = arith.constant 0 : index
    %c0_20 = arith.constant 0 : index
    %c0_21 = arith.constant 0 : index
    %58 = vector.load %arg16[%c0_18, %c0_19, %c0_20, %c0_21] : memref<1x1x2x128xbf16, #tpu.memory_space<vmem>>, vector<1x1x2x128xbf16>
    %59 = vector.shape_cast %58 : vector<1x1x2x128xbf16> to vector<2x128xbf16>
    %60 = vector.shape_cast %57 : vector<2x128xbf16> to vector<1x1x2x128xbf16>
    tpu.vector_store %arg16[%c0_18, %c0_19, %c0_20, %c0_21], %60 {strides = array<i32>} : memref<1x1x2x128xbf16, #tpu.memory_space<vmem>>, vector<1x1x2x128xbf16>,
    %61 = arith.truncf %25 : vector<2x128xf32> to vector<2x128xbf16>
    %c0_22 = arith.constant 0 : index
    %c0_23 = arith.constant 0 : index
    %c0_24 = arith.constant 0 : index
    %c0_25 = arith.constant 0 : index
    %62 = vector.load %arg17[%c0_22, %c0_23, %c0_24, %c0_25] : memref<1x1x2x128xbf16, #tpu.memory_space<vmem>>, vector<1x1x2x128xbf16>
    %63 = vector.shape_cast %62 : vector<1x1x2x128xbf16> to vector<2x128xbf16>
    %64 = vector.shape_cast %61 : vector<2x128xbf16> to vector<1x1x2x128xbf16>
    tpu.vector_store %arg17[%c0_22, %c0_23, %c0_24, %c0_25], %64 {strides = array<i32>} : memref<1x1x2x128xbf16, #tpu.memory_space<vmem>>, vector<1x1x2x128xbf16>,
    %c0_26 = arith.constant 0 : index
    %c0_27 = arith.constant 0 : index
    %c0_28 = arith.constant 0 : index
    %c0_29 = arith.constant 0 : index
    %65 = vector.load %arg11[%c0_26, %c0_27, %c0_28, %c0_29] : memref<1x16x2x128xbf16, #tpu.memory_space<vmem>>, vector<1x16x2x128xbf16>
    %66 = vector.shape_cast %65 : vector<1x16x2x128xbf16> to vector<16x2x128xbf16>
    %c0_30 = arith.constant 0 : index
    %c0_31 = arith.constant 0 : index
    %c0_32 = arith.constant 0 : index
    %c0_33 = arith.constant 0 : index
    %67 = vector.load %arg12[%c0_30, %c0_31, %c0_32, %c0_33] : memref<1x16x2x128xbf16, #tpu.memory_space<vmem>>, vector<1x16x2x128xbf16>
    %68 = vector.shape_cast %67 : vector<1x16x2x128xbf16> to vector<16x2x128xbf16>
    %69 = tpu.iota {dimensions = array<i32: 1>} : vector<1x16xi32>
    %70 = vector.broadcast %0 : i32 to vector<1x16xi32>
    %71 = arith.cmpi slt, %69, %70 : vector<1x16xi32>
    %72 = vector.extract_strided_slice %66 {offsets = [0, 0, 0], sizes = [16, 1, 32], strides = [1, 1, 1]} : vector<16x2x128xbf16> to vector<16x1x32xbf16>
    %73 = vector.shape_cast %72 : vector<16x1x32xbf16> to vector<16x32xbf16>
    %74 = arith.extf %73 : vector<16x32xbf16> to vector<16x32xf32>
    %75 = vector.extract_strided_slice %66 {offsets = [0, 0, 64], sizes = [16, 1, 32], strides = [1, 1, 1]} : vector<16x2x128xbf16> to vector<16x1x32xbf16>
    %76 = vector.shape_cast %75 : vector<16x1x32xbf16> to vector<16x32xbf16>
    %77 = arith.extf %76 : vector<16x32xbf16> to vector<16x32xf32>
    %78 = vector.extract_strided_slice %68 {offsets = [0, 0, 0], sizes = [16, 1, 64], strides = [1, 1, 1]} : vector<16x2x128xbf16> to vector<16x1x64xbf16>
    %79 = vector.shape_cast %78 : vector<16x1x64xbf16> to vector<16x64xbf16>
    %80 = vector.extract_strided_slice %40 {offsets = [0, 0], sizes = [1, 32], strides = [1, 1]} : vector<2x128xf32> to vector<1x32xf32>
    %81 = vector.extract_strided_slice %40 {offsets = [0, 32], sizes = [1, 32], strides = [1, 1]} : vector<2x128xf32> to vector<1x32xf32>
    %82 = tpu.concatenate %80, %81 in 0 : vector<1x32xf32>, vector<1x32xf32> -> vector<2x32xf32>
    %83 = vector.extract_strided_slice %45 {offsets = [0, 0], sizes = [1, 32], strides = [1, 1]} : vector<2x128xf32> to vector<1x32xf32>
    %84 = vector.extract_strided_slice %45 {offsets = [0, 32], sizes = [1, 32], strides = [1, 1]} : vector<2x128xf32> to vector<1x32xf32>
    %85 = tpu.concatenate %83, %84 in 0 : vector<1x32xf32>, vector<1x32xf32> -> vector<2x32xf32>
    "tpu.trace_start"() <{level = 10 : i32, message = "nd,td->nt"}> : () -> ()
    %cst_34 = arith.constant dense<0.000000e+00> : vector<2x16xf32>
    %86 = tpu.matmul %82, %74, %cst_34 {dimension_numbers = #tpu.dot_dimension_numbers<[1], [1], [0], [0], [0, 0, 1, 0], [], []>} : vector<2x32xf32>, vector<16x32xf32>, vector<2x16xf32> -> vector<2x16xf32>
    %cst_35 = arith.constant dense<0.000000e+00> : vector<2x16xf32>
    %87 = tpu.matmul %85, %77, %cst_35 {dimension_numbers = #tpu.dot_dimension_numbers<[1], [1], [0], [0], [0, 0, 1, 0], [], []>} : vector<2x32xf32>, vector<16x32xf32>, vector<2x16xf32> -> vector<2x16xf32>
    "tpu.trace_stop"() : () -> ()
    %88 = arith.addf %86, %87 : vector<2x16xf32>
    %cst_36 = arith.constant 1.250000e-01 : f32
    %89 = vector.broadcast %cst_36 : f32 to vector<2x16xf32>
    %90 = arith.mulf %88, %89 : vector<2x16xf32>
    %cst_37 = arith.constant -1.000000e+30 : f32
    %91 = vector.shape_cast %71 : vector<1x16xi1> to vector<1x16xi1>
    %92 = vector.broadcast %91 : vector<1x16xi1> to vector<2x16xi1>
    %93 = vector.broadcast %cst_37 : f32 to vector<2x16xf32>
    %94 = arith.select %92, %90, %93 : vector<2x16xi1>, vector<2x16xf32>
    %95 = vector.extract_strided_slice %50 {offsets = [0, 0], sizes = [1, 32], strides = [1, 1]} : vector<2x64xf32> to vector<1x32xf32>
    %96 = vector.extract_strided_slice %55 {offsets = [0, 0], sizes = [1, 32], strides = [1, 1]} : vector<2x64xf32> to vector<1x32xf32>
    "tpu.trace_start"() <{level = 10 : i32, message = "nd,td->nt"}> : () -> ()
    %cst_38 = arith.constant dense<0.000000e+00> : vector<2x1xf32>
    %97 = tpu.matmul %82, %95, %cst_38 {dimension_numbers = #tpu.dot_dimension_numbers<[1], [1], [0], [0], [0, 0, 1, 0], [], []>} : vector<2x32xf32>, vector<1x32xf32>, vector<2x1xf32> -> vector<2x1xf32>
    %cst_39 = arith.constant dense<0.000000e+00> : vector<2x1xf32>
    %98 = tpu.matmul %85, %96, %cst_39 {dimension_numbers = #tpu.dot_dimension_numbers<[1], [1], [0], [0], [0, 0, 1, 0], [], []>} : vector<2x32xf32>, vector<1x32xf32>, vector<2x1xf32> -> vector<2x1xf32>
    "tpu.trace_stop"() : () -> ()
    %99 = arith.addf %97, %98 : vector<2x1xf32>
    %cst_40 = arith.constant 1.250000e-01 : f32
    %100 = vector.broadcast %cst_40 : f32 to vector<2x1xf32>
    %101 = arith.mulf %99, %100 : vector<2x1xf32>
    %102 = tpu.concatenate %94, %101 in 1 : vector<2x16xf32>, vector<2x1xf32> -> vector<2x17xf32>
    %cst_41 = arith.constant dense<0xFF800000> : vector<2xf32>
    %103 = vector.multi_reduction <maximumf>, %102, %cst_41 [1] : vector<2x17xf32> to vector<2xf32>
    %104 = vector.shape_cast %103 : vector<2xf32> to vector<2x1xf32>
    %105 = vector.broadcast %104 : vector<2x1xf32> to vector<2x17xf32>
    %106 = arith.subf %102, %105 : vector<2x17xf32>
    %107 = math.exp %106 : vector<2x17xf32>
    %cst_42 = arith.constant dense<0.000000e+00> : vector<2xf32>
    %108 = vector.multi_reduction <add>, %107, %cst_42 [1] : vector<2x17xf32> to vector<2xf32>
    %109 = vector.shape_cast %108 : vector<2xf32> to vector<2x1xf32>
    %110 = tpu.reciprocal %109 {approx = true} : vector<2x1xf32> -> vector<2x1xf32>
    %111 = vector.broadcast %110 : vector<2x1xf32> to vector<2x17xf32>
    %112 = arith.mulf %107, %111 : vector<2x17xf32>
    %113 = vector.extract_strided_slice %25 {offsets = [0, 0], sizes = [1, 64], strides = [1, 1]} : vector<2x128xf32> to vector<1x64xf32>
    %114 = vector.extract_strided_slice %112 {offsets = [0, 0], sizes = [2, 16], strides = [1, 1]} : vector<2x17xf32> to vector<2x16xf32>
    %115 = arith.truncf %114 : vector<2x16xf32> to vector<2x16xbf16>
    %cst_43 = arith.constant dense<0.000000e+00> : vector<2x64xf32>
    %116 = tpu.matmul %115, %79, %cst_43 {dimension_numbers = #tpu.dot_dimension_numbers<[1], [0], [0], [1], [0, 0, 1, 1], [], []>} : vector<2x16xbf16>, vector<16x64xbf16>, vector<2x64xf32> -> vector<2x64xf32>
    %117 = vector.extract_strided_slice %112 {offsets = [0, 16], sizes = [2, 1], strides = [1, 1]} : vector<2x17xf32> to vector<2x1xf32>
    %118 = vector.broadcast %117 : vector<2x1xf32> to vector<2x64xf32>
    %119 = vector.broadcast %113 : vector<1x64xf32> to vector<2x64xf32>
    %120 = arith.mulf %118, %119 : vector<2x64xf32>
    %121 = arith.addf %116, %120 : vector<2x64xf32>
    %122 = vector.extract_strided_slice %121 {offsets = [0, 0], sizes = [1, 64], strides = [1, 1]} : vector<2x64xf32> to vector<1x64xf32>
    %123 = vector.extract_strided_slice %121 {offsets = [1, 0], sizes = [1, 64], strides = [1, 1]} : vector<2x64xf32> to vector<1x64xf32>
    %124 = vector.extract_strided_slice %66 {offsets = [0, 0, 32], sizes = [16, 1, 32], strides = [1, 1, 1]} : vector<16x2x128xbf16> to vector<16x1x32xbf16>
    %125 = vector.shape_cast %124 : vector<16x1x32xbf16> to vector<16x32xbf16>
    %126 = arith.extf %125 : vector<16x32xbf16> to vector<16x32xf32>
    %127 = vector.extract_strided_slice %66 {offsets = [0, 0, 96], sizes = [16, 1, 32], strides = [1, 1, 1]} : vector<16x2x128xbf16> to vector<16x1x32xbf16>
    %128 = vector.shape_cast %127 : vector<16x1x32xbf16> to vector<16x32xbf16>
    %129 = arith.extf %128 : vector<16x32xbf16> to vector<16x32xf32>
    %130 = vector.extract_strided_slice %68 {offsets = [0, 0, 64], sizes = [16, 1, 64], strides = [1, 1, 1]} : vector<16x2x128xbf16> to vector<16x1x64xbf16>
    %131 = vector.shape_cast %130 : vector<16x1x64xbf16> to vector<16x64xbf16>
    %132 = vector.extract_strided_slice %40 {offsets = [0, 64], sizes = [1, 32], strides = [1, 1]} : vector<2x128xf32> to vector<1x32xf32>
    %133 = vector.extract_strided_slice %40 {offsets = [0, 96], sizes = [1, 32], strides = [1, 1]} : vector<2x128xf32> to vector<1x32xf32>
    %134 = tpu.concatenate %132, %133 in 0 : vector<1x32xf32>, vector<1x32xf32> -> vector<2x32xf32>
    %135 = vector.extract_strided_slice %45 {offsets = [0, 64], sizes = [1, 32], strides = [1, 1]} : vector<2x128xf32> to vector<1x32xf32>
    %136 = vector.extract_strided_slice %45 {offsets = [0, 96], sizes = [1, 32], strides = [1, 1]} : vector<2x128xf32> to vector<1x32xf32>
    %137 = tpu.concatenate %135, %136 in 0 : vector<1x32xf32>, vector<1x32xf32> -> vector<2x32xf32>
    "tpu.trace_start"() <{level = 10 : i32, message = "nd,td->nt"}> : () -> ()
    %cst_44 = arith.constant dense<0.000000e+00> : vector<2x16xf32>
    %138 = tpu.matmul %134, %126, %cst_44 {dimension_numbers = #tpu.dot_dimension_numbers<[1], [1], [0], [0], [0, 0, 1, 0], [], []>} : vector<2x32xf32>, vector<16x32xf32>, vector<2x16xf32> -> vector<2x16xf32>
    %cst_45 = arith.constant dense<0.000000e+00> : vector<2x16xf32>
    %139 = tpu.matmul %137, %129, %cst_45 {dimension_numbers = #tpu.dot_dimension_numbers<[1], [1], [0], [0], [0, 0, 1, 0], [], []>} : vector<2x32xf32>, vector<16x32xf32>, vector<2x16xf32> -> vector<2x16xf32>
    "tpu.trace_stop"() : () -> ()
    %140 = arith.addf %138, %139 : vector<2x16xf32>
    %cst_46 = arith.constant 1.250000e-01 : f32
    %141 = vector.broadcast %cst_46 : f32 to vector<2x16xf32>
    %142 = arith.mulf %140, %141 : vector<2x16xf32>
    %cst_47 = arith.constant -1.000000e+30 : f32
    %143 = vector.shape_cast %71 : vector<1x16xi1> to vector<1x16xi1>
    %144 = vector.broadcast %143 : vector<1x16xi1> to vector<2x16xi1>
    %145 = vector.broadcast %cst_47 : f32 to vector<2x16xf32>
    %146 = arith.select %144, %142, %145 : vector<2x16xi1>, vector<2x16xf32>
    %147 = vector.extract_strided_slice %50 {offsets = [0, 32], sizes = [1, 32], strides = [1, 1]} : vector<2x64xf32> to vector<1x32xf32>
    %148 = vector.extract_strided_slice %55 {offsets = [0, 32], sizes = [1, 32], strides = [1, 1]} : vector<2x64xf32> to vector<1x32xf32>
    "tpu.trace_start"() <{level = 10 : i32, message = "nd,td->nt"}> : () -> ()
    %cst_48 = arith.constant dense<0.000000e+00> : vector<2x1xf32>
    %149 = tpu.matmul %134, %147, %cst_48 {dimension_numbers = #tpu.dot_dimension_numbers<[1], [1], [0], [0], [0, 0, 1, 0], [], []>} : vector<2x32xf32>, vector<1x32xf32>, vector<2x1xf32> -> vector<2x1xf32>
    %cst_49 = arith.constant dense<0.000000e+00> : vector<2x1xf32>
    %150 = tpu.matmul %137, %148, %cst_49 {dimension_numbers = #tpu.dot_dimension_numbers<[1], [1], [0], [0], [0, 0, 1, 0], [], []>} : vector<2x32xf32>, vector<1x32xf32>, vector<2x1xf32> -> vector<2x1xf32>
    "tpu.trace_stop"() : () -> ()
    %151 = arith.addf %149, %150 : vector<2x1xf32>
    %cst_50 = arith.constant 1.250000e-01 : f32
    %152 = vector.broadcast %cst_50 : f32 to vector<2x1xf32>
    %153 = arith.mulf %151, %152 : vector<2x1xf32>
    %154 = tpu.concatenate %146, %153 in 1 : vector<2x16xf32>, vector<2x1xf32> -> vector<2x17xf32>
    %cst_51 = arith.constant dense<0xFF800000> : vector<2xf32>
    %155 = vector.multi_reduction <maximumf>, %154, %cst_51 [1] : vector<2x17xf32> to vector<2xf32>
    %156 = vector.shape_cast %155 : vector<2xf32> to vector<2x1xf32>
    %157 = vector.broadcast %156 : vector<2x1xf32> to vector<2x17xf32>
    %158 = arith.subf %154, %157 : vector<2x17xf32>
    %159 = math.exp %158 : vector<2x17xf32>
    %cst_52 = arith.constant dense<0.000000e+00> : vector<2xf32>
    %160 = vector.multi_reduction <add>, %159, %cst_52 [1] : vector<2x17xf32> to vector<2xf32>
    %161 = vector.shape_cast %160 : vector<2xf32> to vector<2x1xf32>
    %162 = tpu.reciprocal %161 {approx = true} : vector<2x1xf32> -> vector<2x1xf32>
    %163 = vector.broadcast %162 : vector<2x1xf32> to vector<2x17xf32>
    %164 = arith.mulf %159, %163 : vector<2x17xf32>
    %165 = vector.extract_strided_slice %25 {offsets = [0, 64], sizes = [1, 64], strides = [1, 1]} : vector<2x128xf32> to vector<1x64xf32>
    %166 = vector.extract_strided_slice %164 {offsets = [0, 0], sizes = [2, 16], strides = [1, 1]} : vector<2x17xf32> to vector<2x16xf32>
    %167 = arith.truncf %166 : vector<2x16xf32> to vector<2x16xbf16>
    %cst_53 = arith.constant dense<0.000000e+00> : vector<2x64xf32>
    %168 = tpu.matmul %167, %131, %cst_53 {dimension_numbers = #tpu.dot_dimension_numbers<[1], [0], [0], [1], [0, 0, 1, 1], [], []>} : vector<2x16xbf16>, vector<16x64xbf16>, vector<2x64xf32> -> vector<2x64xf32>
    %169 = vector.extract_strided_slice %164 {offsets = [0, 16], sizes = [2, 1], strides = [1, 1]} : vector<2x17xf32> to vector<2x1xf32>
    %170 = vector.broadcast %169 : vector<2x1xf32> to vector<2x64xf32>
    %171 = vector.broadcast %165 : vector<1x64xf32> to vector<2x64xf32>
    %172 = arith.mulf %170, %171 : vector<2x64xf32>
    %173 = arith.addf %168, %172 : vector<2x64xf32>
    %174 = vector.extract_strided_slice %173 {offsets = [0, 0], sizes = [1, 64], strides = [1, 1]} : vector<2x64xf32> to vector<1x64xf32>
    %175 = vector.extract_strided_slice %173 {offsets = [1, 0], sizes = [1, 64], strides = [1, 1]} : vector<2x64xf32> to vector<1x64xf32>
    %176 = tpu.concatenate %122, %123, %174, %175 in 1 : vector<1x64xf32>, vector<1x64xf32>, vector<1x64xf32>, vector<1x64xf32> -> vector<1x256xf32>
    %177 = vector.extract_strided_slice %66 {offsets = [0, 1, 0], sizes = [16, 1, 32], strides = [1, 1, 1]} : vector<16x2x128xbf16> to vector<16x1x32xbf16>
    %178 = vector.shape_cast %177 : vector<16x1x32xbf16> to vector<16x32xbf16>
    %179 = arith.extf %178 : vector<16x32xbf16> to vector<16x32xf32>
    %180 = vector.extract_strided_slice %66 {offsets = [0, 1, 64], sizes = [16, 1, 32], strides = [1, 1, 1]} : vector<16x2x128xbf16> to vector<16x1x32xbf16>
    %181 = vector.shape_cast %180 : vector<16x1x32xbf16> to vector<16x32xbf16>
    %182 = arith.extf %181 : vector<16x32xbf16> to vector<16x32xf32>
    %183 = vector.extract_strided_slice %68 {offsets = [0, 1, 0], sizes = [16, 1, 64], strides = [1, 1, 1]} : vector<16x2x128xbf16> to vector<16x1x64xbf16>
    %184 = vector.shape_cast %183 : vector<16x1x64xbf16> to vector<16x64xbf16>
    %185 = vector.extract_strided_slice %40 {offsets = [1, 0], sizes = [1, 32], strides = [1, 1]} : vector<2x128xf32> to vector<1x32xf32>
    %186 = vector.extract_strided_slice %40 {offsets = [1, 32], sizes = [1, 32], strides = [1, 1]} : vector<2x128xf32> to vector<1x32xf32>
    %187 = tpu.concatenate %185, %186 in 0 : vector<1x32xf32>, vector<1x32xf32> -> vector<2x32xf32>
    %188 = vector.extract_strided_slice %45 {offsets = [1, 0], sizes = [1, 32], strides = [1, 1]} : vector<2x128xf32> to vector<1x32xf32>
    %189 = vector.extract_strided_slice %45 {offsets = [1, 32], sizes = [1, 32], strides = [1, 1]} : vector<2x128xf32> to vector<1x32xf32>
    %190 = tpu.concatenate %188, %189 in 0 : vector<1x32xf32>, vector<1x32xf32> -> vector<2x32xf32>
    "tpu.trace_start"() <{level = 10 : i32, message = "nd,td->nt"}> : () -> ()
    %cst_54 = arith.constant dense<0.000000e+00> : vector<2x16xf32>
    %191 = tpu.matmul %187, %179, %cst_54 {dimension_numbers = #tpu.dot_dimension_numbers<[1], [1], [0], [0], [0, 0, 1, 0], [], []>} : vector<2x32xf32>, vector<16x32xf32>, vector<2x16xf32> -> vector<2x16xf32>
    %cst_55 = arith.constant dense<0.000000e+00> : vector<2x16xf32>
    %192 = tpu.matmul %190, %182, %cst_55 {dimension_numbers = #tpu.dot_dimension_numbers<[1], [1], [0], [0], [0, 0, 1, 0], [], []>} : vector<2x32xf32>, vector<16x32xf32>, vector<2x16xf32> -> vector<2x16xf32>
    "tpu.trace_stop"() : () -> ()
    %193 = arith.addf %191, %192 : vector<2x16xf32>
    %cst_56 = arith.constant 1.250000e-01 : f32
    %194 = vector.broadcast %cst_56 : f32 to vector<2x16xf32>
    %195 = arith.mulf %193, %194 : vector<2x16xf32>
    %cst_57 = arith.constant -1.000000e+30 : f32
    %196 = vector.shape_cast %71 : vector<1x16xi1> to vector<1x16xi1>
    %197 = vector.broadcast %196 : vector<1x16xi1> to vector<2x16xi1>
    %198 = vector.broadcast %cst_57 : f32 to vector<2x16xf32>
    %199 = arith.select %197, %195, %198 : vector<2x16xi1>, vector<2x16xf32>
    %200 = vector.extract_strided_slice %50 {offsets = [1, 0], sizes = [1, 32], strides = [1, 1]} : vector<2x64xf32> to vector<1x32xf32>
    %201 = vector.extract_strided_slice %55 {offsets = [1, 0], sizes = [1, 32], strides = [1, 1]} : vector<2x64xf32> to vector<1x32xf32>
    "tpu.trace_start"() <{level = 10 : i32, message = "nd,td->nt"}> : () -> ()
    %cst_58 = arith.constant dense<0.000000e+00> : vector<2x1xf32>
    %202 = tpu.matmul %187, %200, %cst_58 {dimension_numbers = #tpu.dot_dimension_numbers<[1], [1], [0], [0], [0, 0, 1, 0], [], []>} : vector<2x32xf32>, vector<1x32xf32>, vector<2x1xf32> -> vector<2x1xf32>
    %cst_59 = arith.constant dense<0.000000e+00> : vector<2x1xf32>
    %203 = tpu.matmul %190, %201, %cst_59 {dimension_numbers = #tpu.dot_dimension_numbers<[1], [1], [0], [0], [0, 0, 1, 0], [], []>} : vector<2x32xf32>, vector<1x32xf32>, vector<2x1xf32> -> vector<2x1xf32>
    "tpu.trace_stop"() : () -> ()
    %204 = arith.addf %202, %203 : vector<2x1xf32>
    %cst_60 = arith.constant 1.250000e-01 : f32
    %205 = vector.broadcast %cst_60 : f32 to vector<2x1xf32>
    %206 = arith.mulf %204, %205 : vector<2x1xf32>
    %207 = tpu.concatenate %199, %206 in 1 : vector<2x16xf32>, vector<2x1xf32> -> vector<2x17xf32>
    %cst_61 = arith.constant dense<0xFF800000> : vector<2xf32>
    %208 = vector.multi_reduction <maximumf>, %207, %cst_61 [1] : vector<2x17xf32> to vector<2xf32>
    %209 = vector.shape_cast %208 : vector<2xf32> to vector<2x1xf32>
    %210 = vector.broadcast %209 : vector<2x1xf32> to vector<2x17xf32>
    %211 = arith.subf %207, %210 : vector<2x17xf32>
    %212 = math.exp %211 : vector<2x17xf32>
    %cst_62 = arith.constant dense<0.000000e+00> : vector<2xf32>
    %213 = vector.multi_reduction <add>, %212, %cst_62 [1] : vector<2x17xf32> to vector<2xf32>
    %214 = vector.shape_cast %213 : vector<2xf32> to vector<2x1xf32>
    %215 = tpu.reciprocal %214 {approx = true} : vector<2x1xf32> -> vector<2x1xf32>
    %216 = vector.broadcast %215 : vector<2x1xf32> to vector<2x17xf32>
    %217 = arith.mulf %212, %216 : vector<2x17xf32>
    %218 = vector.extract_strided_slice %25 {offsets = [1, 0], sizes = [1, 64], strides = [1, 1]} : vector<2x128xf32> to vector<1x64xf32>
    %219 = vector.extract_strided_slice %217 {offsets = [0, 0], sizes = [2, 16], strides = [1, 1]} : vector<2x17xf32> to vector<2x16xf32>
    %220 = arith.truncf %219 : vector<2x16xf32> to vector<2x16xbf16>
    %cst_63 = arith.constant dense<0.000000e+00> : vector<2x64xf32>
    %221 = tpu.matmul %220, %184, %cst_63 {dimension_numbers = #tpu.dot_dimension_numbers<[1], [0], [0], [1], [0, 0, 1, 1], [], []>} : vector<2x16xbf16>, vector<16x64xbf16>, vector<2x64xf32> -> vector<2x64xf32>
    %222 = vector.extract_strided_slice %217 {offsets = [0, 16], sizes = [2, 1], strides = [1, 1]} : vector<2x17xf32> to vector<2x1xf32>
    %223 = vector.broadcast %222 : vector<2x1xf32> to vector<2x64xf32>
    %224 = vector.broadcast %218 : vector<1x64xf32> to vector<2x64xf32>
    %225 = arith.mulf %223, %224 : vector<2x64xf32>
    %226 = arith.addf %221, %225 : vector<2x64xf32>
    %227 = vector.extract_strided_slice %226 {offsets = [0, 0], sizes = [1, 64], strides = [1, 1]} : vector<2x64xf32> to vector<1x64xf32>
    %228 = vector.extract_strided_slice %226 {offsets = [1, 0], sizes = [1, 64], strides = [1, 1]} : vector<2x64xf32> to vector<1x64xf32>
    %229 = vector.extract_strided_slice %66 {offsets = [0, 1, 32], sizes = [16, 1, 32], strides = [1, 1, 1]} : vector<16x2x128xbf16> to vector<16x1x32xbf16>
    %230 = vector.shape_cast %229 : vector<16x1x32xbf16> to vector<16x32xbf16>
    %231 = arith.extf %230 : vector<16x32xbf16> to vector<16x32xf32>
    %232 = vector.extract_strided_slice %66 {offsets = [0, 1, 96], sizes = [16, 1, 32], strides = [1, 1, 1]} : vector<16x2x128xbf16> to vector<16x1x32xbf16>
    %233 = vector.shape_cast %232 : vector<16x1x32xbf16> to vector<16x32xbf16>
    %234 = arith.extf %233 : vector<16x32xbf16> to vector<16x32xf32>
    %235 = vector.extract_strided_slice %68 {offsets = [0, 1, 64], sizes = [16, 1, 64], strides = [1, 1, 1]} : vector<16x2x128xbf16> to vector<16x1x64xbf16>
    %236 = vector.shape_cast %235 : vector<16x1x64xbf16> to vector<16x64xbf16>
    %237 = vector.extract_strided_slice %40 {offsets = [1, 64], sizes = [1, 32], strides = [1, 1]} : vector<2x128xf32> to vector<1x32xf32>
    %238 = vector.extract_strided_slice %40 {offsets = [1, 96], sizes = [1, 32], strides = [1, 1]} : vector<2x128xf32> to vector<1x32xf32>
    %239 = tpu.concatenate %237, %238 in 0 : vector<1x32xf32>, vector<1x32xf32> -> vector<2x32xf32>
    %240 = vector.extract_strided_slice %45 {offsets = [1, 64], sizes = [1, 32], strides = [1, 1]} : vector<2x128xf32> to vector<1x32xf32>
    %241 = vector.extract_strided_slice %45 {offsets = [1, 96], sizes = [1, 32], strides = [1, 1]} : vector<2x128xf32> to vector<1x32xf32>
    %242 = tpu.concatenate %240, %241 in 0 : vector<1x32xf32>, vector<1x32xf32> -> vector<2x32xf32>
    "tpu.trace_start"() <{level = 10 : i32, message = "nd,td->nt"}> : () -> ()
    %cst_64 = arith.constant dense<0.000000e+00> : vector<2x16xf32>
    %243 = tpu.matmul %239, %231, %cst_64 {dimension_numbers = #tpu.dot_dimension_numbers<[1], [1], [0], [0], [0, 0, 1, 0], [], []>} : vector<2x32xf32>, vector<16x32xf32>, vector<2x16xf32> -> vector<2x16xf32>
    %cst_65 = arith.constant dense<0.000000e+00> : vector<2x16xf32>
    %244 = tpu.matmul %242, %234, %cst_65 {dimension_numbers = #tpu.dot_dimension_numbers<[1], [1], [0], [0], [0, 0, 1, 0], [], []>} : vector<2x32xf32>, vector<16x32xf32>, vector<2x16xf32> -> vector<2x16xf32>
    "tpu.trace_stop"() : () -> ()
    %245 = arith.addf %243, %244 : vector<2x16xf32>
    %cst_66 = arith.constant 1.250000e-01 : f32
    %246 = vector.broadcast %cst_66 : f32 to vector<2x16xf32>
    %247 = arith.mulf %245, %246 : vector<2x16xf32>
    %cst_67 = arith.constant -1.000000e+30 : f32
    %248 = vector.shape_cast %71 : vector<1x16xi1> to vector<1x16xi1>
    %249 = vector.broadcast %248 : vector<1x16xi1> to vector<2x16xi1>
    %250 = vector.broadcast %cst_67 : f32 to vector<2x16xf32>
    %251 = arith.select %249, %247, %250 : vector<2x16xi1>, vector<2x16xf32>
    %252 = vector.extract_strided_slice %50 {offsets = [1, 32], sizes = [1, 32], strides = [1, 1]} : vector<2x64xf32> to vector<1x32xf32>
    %253 = vector.extract_strided_slice %55 {offsets = [1, 32], sizes = [1, 32], strides = [1, 1]} : vector<2x64xf32> to vector<1x32xf32>
    "tpu.trace_start"() <{level = 10 : i32, message = "nd,td->nt"}> : () -> ()
    %cst_68 = arith.constant dense<0.000000e+00> : vector<2x1xf32>
    %254 = tpu.matmul %239, %252, %cst_68 {dimension_numbers = #tpu.dot_dimension_numbers<[1], [1], [0], [0], [0, 0, 1, 0], [], []>} : vector<2x32xf32>, vector<1x32xf32>, vector<2x1xf32> -> vector<2x1xf32>
    %cst_69 = arith.constant dense<0.000000e+00> : vector<2x1xf32>
    %255 = tpu.matmul %242, %253, %cst_69 {dimension_numbers = #tpu.dot_dimension_numbers<[1], [1], [0], [0], [0, 0, 1, 0], [], []>} : vector<2x32xf32>, vector<1x32xf32>, vector<2x1xf32> -> vector<2x1xf32>
    "tpu.trace_stop"() : () -> ()
    %256 = arith.addf %254, %255 : vector<2x1xf32>
    %cst_70 = arith.constant 1.250000e-01 : f32
    %257 = vector.broadcast %cst_70 : f32 to vector<2x1xf32>
    %258 = arith.mulf %256, %257 : vector<2x1xf32>
    %259 = tpu.concatenate %251, %258 in 1 : vector<2x16xf32>, vector<2x1xf32> -> vector<2x17xf32>
    %cst_71 = arith.constant dense<0xFF800000> : vector<2xf32>
    %260 = vector.multi_reduction <maximumf>, %259, %cst_71 [1] : vector<2x17xf32> to vector<2xf32>
    %261 = vector.shape_cast %260 : vector<2xf32> to vector<2x1xf32>
    %262 = vector.broadcast %261 : vector<2x1xf32> to vector<2x17xf32>
    %263 = arith.subf %259, %262 : vector<2x17xf32>
    %264 = math.exp %263 : vector<2x17xf32>
    %cst_72 = arith.constant dense<0.000000e+00> : vector<2xf32>
    %265 = vector.multi_reduction <add>, %264, %cst_72 [1] : vector<2x17xf32> to vector<2xf32>
    %266 = vector.shape_cast %265 : vector<2xf32> to vector<2x1xf32>
    %267 = tpu.reciprocal %266 {approx = true} : vector<2x1xf32> -> vector<2x1xf32>
    %268 = vector.broadcast %267 : vector<2x1xf32> to vector<2x17xf32>
    %269 = arith.mulf %264, %268 : vector<2x17xf32>
    %270 = vector.extract_strided_slice %25 {offsets = [1, 64], sizes = [1, 64], strides = [1, 1]} : vector<2x128xf32> to vector<1x64xf32>
    %271 = vector.extract_strided_slice %269 {offsets = [0, 0], sizes = [2, 16], strides = [1, 1]} : vector<2x17xf32> to vector<2x16xf32>
    %272 = arith.truncf %271 : vector<2x16xf32> to vector<2x16xbf16>
    %cst_73 = arith.constant dense<0.000000e+00> : vector<2x64xf32>
    %273 = tpu.matmul %272, %236, %cst_73 {dimension_numbers = #tpu.dot_dimension_numbers<[1], [0], [0], [1], [0, 0, 1, 1], [], []>} : vector<2x16xbf16>, vector<16x64xbf16>, vector<2x64xf32> -> vector<2x64xf32>
    %274 = vector.extract_strided_slice %269 {offsets = [0, 16], sizes = [2, 1], strides = [1, 1]} : vector<2x17xf32> to vector<2x1xf32>
    %275 = vector.broadcast %274 : vector<2x1xf32> to vector<2x64xf32>
    %276 = vector.broadcast %270 : vector<1x64xf32> to vector<2x64xf32>
    %277 = arith.mulf %275, %276 : vector<2x64xf32>
    %278 = arith.addf %273, %277 : vector<2x64xf32>
    %279 = vector.extract_strided_slice %278 {offsets = [0, 0], sizes = [1, 64], strides = [1, 1]} : vector<2x64xf32> to vector<1x64xf32>
    %280 = vector.extract_strided_slice %278 {offsets = [1, 0], sizes = [1, 64], strides = [1, 1]} : vector<2x64xf32> to vector<1x64xf32>
    %281 = tpu.concatenate %227, %228, %279, %280 in 1 : vector<1x64xf32>, vector<1x64xf32>, vector<1x64xf32>, vector<1x64xf32> -> vector<1x256xf32>
    %282 = tpu.concatenate %176, %281 in 0 : vector<1x256xf32>, vector<1x256xf32> -> vector<2x256xf32>
    %283 = arith.truncf %282 : vector<2x256xf32> to vector<2x256xbf16>
    %c0_74 = arith.constant 0 : index
    %c0_75 = arith.constant 0 : index
    %c0_76 = arith.constant 0 : index
    %284 = vector.load %arg6[%c0_74, %c0_75, %c0_76] : memref<1x256x256xbf16, #tpu.memory_space<vmem>>, vector<1x256x256xbf16>
    %285 = vector.shape_cast %284 : vector<1x256x256xbf16> to vector<256x256xbf16>
    %cst_77 = arith.constant dense<0.000000e+00> : vector<2x256xf32>
    %286 = tpu.matmul %283, %285, %cst_77 {dimension_numbers = #tpu.dot_dimension_numbers<[1], [0], [0], [1], [0, 0, 1, 1], [], []>} : vector<2x256xbf16>, vector<256x256xbf16>, vector<2x256xf32> -> vector<2x256xf32>
    %287 = arith.addf %4, %286 : vector<2x256xf32>
    %288 = arith.mulf %287, %287 : vector<2x256xf32>
    %cst_78 = arith.constant dense<0.000000e+00> : vector<2xf32>
    %289 = vector.multi_reduction <add>, %288, %cst_78 [1] : vector<2x256xf32> to vector<2xf32>
    %290 = vector.shape_cast %289 : vector<2xf32> to vector<2x1xf32>
    %cst_79 = arith.constant 2.560000e+02 : f32
    %291 = vector.broadcast %cst_79 : f32 to vector<2x1xf32>
    %292 = arith.divf %290, %291 : vector<2x1xf32>
    %cst_80 = arith.constant 9.99999974E-6 : f32
    %293 = vector.broadcast %cst_80 : f32 to vector<2x1xf32>
    %294 = arith.addf %292, %293 : vector<2x1xf32>
    %295 = math.rsqrt %294 : vector<2x1xf32>
    %296 = vector.broadcast %295 : vector<2x1xf32> to vector<2x256xf32>
    %297 = arith.mulf %287, %296 : vector<2x256xf32>
    %c0_81 = arith.constant 0 : index
    %c0_82 = arith.constant 0 : index
    %c0_83 = arith.constant 0 : index
    %298 = vector.load %arg4[%c0_81, %c0_82, %c0_83] : memref<1x1x256xf32, #tpu.memory_space<vmem>>, vector<1x1x256xf32>
    %299 = vector.shape_cast %298 : vector<1x1x256xf32> to vector<1x256xf32>
    %300 = vector.broadcast %299 : vector<1x256xf32> to vector<2x256xf32>
    %301 = arith.mulf %297, %300 : vector<2x256xf32>
    %302 = arith.truncf %301 : vector<2x256xf32> to vector<2x256xbf16>
    %c0_84 = arith.constant 0 : index
    %c0_85 = arith.constant 0 : index
    %c0_86 = arith.constant 0 : index
    %303 = vector.load %arg7[%c0_84, %c0_85, %c0_86] : memref<1x256x1536xbf16, #tpu.memory_space<vmem>>, vector<1x256x1536xbf16>
    %304 = vector.shape_cast %303 : vector<1x256x1536xbf16> to vector<256x1536xbf16>
    %cst_87 = arith.constant dense<0.000000e+00> : vector<2x1536xf32>
    %305 = tpu.matmul %302, %304, %cst_87 {dimension_numbers = #tpu.dot_dimension_numbers<[1], [0], [0], [1], [0, 0, 1, 1], [], []>} : vector<2x256xbf16>, vector<256x1536xbf16>, vector<2x1536xf32> -> vector<2x1536xf32>
    %306 = vector.extract_strided_slice %305 {offsets = [0, 0], sizes = [2, 768], strides = [1, 1]} : vector<2x1536xf32> to vector<2x768xf32>
    %307 = vector.extract_strided_slice %305 {offsets = [0, 768], sizes = [2, 768], strides = [1, 1]} : vector<2x1536xf32> to vector<2x768xf32>
    %308 = arith.negf %306 : vector<2x768xf32>
    %309 = math.exp %308 : vector<2x768xf32>
    %cst_88 = arith.constant 1.000000e+00 : f32
    %310 = vector.broadcast %cst_88 : f32 to vector<2x768xf32>
    %311 = arith.addf %310, %309 : vector<2x768xf32>
    %312 = arith.divf %310, %311 : vector<2x768xf32>
    %313 = arith.mulf %306, %312 : vector<2x768xf32>
    %314 = arith.mulf %313, %307 : vector<2x768xf32>
    %315 = arith.truncf %314 : vector<2x768xf32> to vector<2x768xbf16>
    %c0_89 = arith.constant 0 : index
    %c0_90 = arith.constant 0 : index
    %c0_91 = arith.constant 0 : index
    %316 = vector.load %arg8[%c0_89, %c0_90, %c0_91] : memref<1x768x256xbf16, #tpu.memory_space<vmem>>, vector<1x768x256xbf16>
    %317 = vector.shape_cast %316 : vector<1x768x256xbf16> to vector<768x256xbf16>
    %cst_92 = arith.constant dense<0.000000e+00> : vector<2x256xf32>
    %318 = tpu.matmul %315, %317, %cst_92 {dimension_numbers = #tpu.dot_dimension_numbers<[1], [0], [0], [1], [0, 0, 1, 1], [], []>} : vector<2x768xbf16>, vector<768x256xbf16>, vector<2x256xf32> -> vector<2x256xf32>
    %319 = arith.addf %287, %318 : vector<2x256xf32>
    %c0_93 = arith.constant 0 : index
    %c0_94 = arith.constant 0 : index
    %320 = vector.load %arg18[%c0_93, %c0_94] : memref<2x256xf32, #tpu.memory_space<vmem>>, vector<2x256xf32>
    tpu.vector_store %arg18[%c0_93, %c0_94], %319 {strides = array<i32>} : memref<2x256xf32, #tpu.memory_space<vmem>>, vector<2x256xf32>,
    %c1_i32 = arith.constant 1 : i32
    %321 = arith.cmpi eq, %arg0, %c1_i32 : i32
    %322 = arith.extui %321 : i1 to i32
    %c0_i32_95 = arith.constant 0 : i32
    %323 = arith.cmpi ne, %322, %c0_i32_95 : i32
    scf.if %323 {
      %324 = arith.mulf %319, %319 : vector<2x256xf32>
      %cst_96 = arith.constant dense<0.000000e+00> : vector<2xf32>
      %325 = vector.multi_reduction <add>, %324, %cst_96 [1] : vector<2x256xf32> to vector<2xf32>
      %326 = vector.shape_cast %325 : vector<2xf32> to vector<2x1xf32>
      %cst_97 = arith.constant 2.560000e+02 : f32
      %327 = vector.broadcast %cst_97 : f32 to vector<2x1xf32>
      %328 = arith.divf %326, %327 : vector<2x1xf32>
      %cst_98 = arith.constant 9.99999974E-6 : f32
      %329 = vector.broadcast %cst_98 : f32 to vector<2x1xf32>
      %330 = arith.addf %328, %329 : vector<2x1xf32>
      %331 = math.rsqrt %330 : vector<2x1xf32>
      %332 = vector.broadcast %331 : vector<2x1xf32> to vector<2x256xf32>
      %333 = arith.mulf %319, %332 : vector<2x256xf32>
      %c0_99 = arith.constant 0 : index
      %c0_100 = arith.constant 0 : index
      %334 = vector.load %arg13[%c0_99, %c0_100] : memref<1x256xf32, #tpu.memory_space<vmem>>, vector<1x256xf32>
      %335 = vector.broadcast %334 : vector<1x256xf32> to vector<2x256xf32>
      %336 = arith.mulf %333, %335 : vector<2x256xf32>
      %337 = arith.truncf %336 : vector<2x256xf32> to vector<2x256xbf16>
      %c0_101 = arith.constant 0 : index
      %c0_102 = arith.constant 0 : index
      %338 = vector.load %arg14[%c0_101, %c0_102] : memref<256x512xbf16, #tpu.memory_space<vmem>>, vector<256x512xbf16>
      %cst_103 = arith.constant dense<0.000000e+00> : vector<2x512xf32>
      %339 = tpu.matmul %337, %338, %cst_103 {dimension_numbers = #tpu.dot_dimension_numbers<[1], [0], [0], [1], [0, 0, 1, 1], [], []>} : vector<2x256xbf16>, vector<256x512xbf16>, vector<2x512xf32> -> vector<2x512xf32>
      %c0_104 = arith.constant 0 : index
      %c0_105 = arith.constant 0 : index
      %340 = vector.load %arg15[%c0_104, %c0_105] : memref<2x512xf32, #tpu.memory_space<vmem>>, vector<2x512xf32>
      tpu.vector_store %arg15[%c0_104, %c0_105], %339 {strides = array<i32>} : memref<2x512xf32, #tpu.memory_space<vmem>>, vector<2x512xf32>,
    } else {
    }
    return
  }
  func.func @transform_0(%arg0: i32, %arg1: memref<1xi32, #tpu.memory_space<smem>>) -> (i32, i32) {
    %c0_i32 = arith.constant 0 : i32
    %c0_i32_0 = arith.constant 0 : i32
    %c0_i32_1 = arith.constant 0 : i32
    return %c0_i32, %c0_i32_0 : i32, i32
  }
  func.func @transform_1(%arg0: i32, %arg1: memref<1xi32, #tpu.memory_space<smem>>) -> (i32, i32, i32) {
    %c0_i32 = arith.constant 0 : i32
    %c0_i32_0 = arith.constant 0 : i32
    %c0_i32_1 = arith.constant 0 : i32
    return %arg0, %c0_i32, %c0_i32_0 : i32, i32, i32
  }
  func.func @transform_2(%arg0: i32, %arg1: memref<1xi32, #tpu.memory_space<smem>>) -> (i32, i32, i32) {
    %c0_i32 = arith.constant 0 : i32
    %c0_i32_0 = arith.constant 0 : i32
    %c0_i32_1 = arith.constant 0 : i32
    return %arg0, %c0_i32, %c0_i32_0 : i32, i32, i32
  }
  func.func @transform_3(%arg0: i32, %arg1: memref<1xi32, #tpu.memory_space<smem>>) -> (i32, i32, i32) {
    %c0_i32 = arith.constant 0 : i32
    %c0_i32_0 = arith.constant 0 : i32
    %c0_i32_1 = arith.constant 0 : i32
    return %arg0, %c0_i32, %c0_i32_0 : i32, i32, i32
  }
  func.func @transform_4(%arg0: i32, %arg1: memref<1xi32, #tpu.memory_space<smem>>) -> (i32, i32, i32) {
    %c0_i32 = arith.constant 0 : i32
    %c0_i32_0 = arith.constant 0 : i32
    %c0_i32_1 = arith.constant 0 : i32
    return %arg0, %c0_i32, %c0_i32_0 : i32, i32, i32
  }
  func.func @transform_5(%arg0: i32, %arg1: memref<1xi32, #tpu.memory_space<smem>>) -> (i32, i32, i32) {
    %c0_i32 = arith.constant 0 : i32
    %c0_i32_0 = arith.constant 0 : i32
    %c0_i32_1 = arith.constant 0 : i32
    return %arg0, %c0_i32, %c0_i32_0 : i32, i32, i32
  }
  func.func @transform_6(%arg0: i32, %arg1: memref<1xi32, #tpu.memory_space<smem>>) -> (i32, i32, i32) {
    %c0_i32 = arith.constant 0 : i32
    %c0_i32_0 = arith.constant 0 : i32
    %c0_i32_1 = arith.constant 0 : i32
    return %arg0, %c0_i32, %c0_i32_0 : i32, i32, i32
  }
  func.func @transform_7(%arg0: i32, %arg1: memref<1xi32, #tpu.memory_space<smem>>) -> (i32, i32, i32) {
    %c0 = arith.constant 0 : index
    %0 = memref.load %arg1[%c0] : memref<1xi32, #tpu.memory_space<smem>>
    %c0_i32 = arith.constant 0 : i32
    %c0_i32_0 = arith.constant 0 : i32
    %c0_i32_1 = arith.constant 0 : i32
    return %0, %c0_i32, %c0_i32_0 : i32, i32, i32
  }
  func.func @transform_8(%arg0: i32, %arg1: memref<1xi32, #tpu.memory_space<smem>>) -> (i32, i32, i32) {
    %c0 = arith.constant 0 : index
    %0 = memref.load %arg1[%c0] : memref<1xi32, #tpu.memory_space<smem>>
    %c0_i32 = arith.constant 0 : i32
    %c0_i32_0 = arith.constant 0 : i32
    %c0_i32_1 = arith.constant 0 : i32
    return %0, %c0_i32, %c0_i32_0 : i32, i32, i32
  }
  func.func @transform_9(%arg0: i32, %arg1: memref<1xi32, #tpu.memory_space<smem>>) -> (i32, i32, i32, i32) {
    %c0_i32 = arith.constant 0 : i32
    %c0_i32_0 = arith.constant 0 : i32
    %c0_i32_1 = arith.constant 0 : i32
    %c0_i32_2 = arith.constant 0 : i32
    return %arg0, %c0_i32, %c0_i32_0, %c0_i32_1 : i32, i32, i32, i32
  }
  func.func @transform_10(%arg0: i32, %arg1: memref<1xi32, #tpu.memory_space<smem>>) -> (i32, i32, i32, i32) {
    %c0_i32 = arith.constant 0 : i32
    %c0_i32_0 = arith.constant 0 : i32
    %c0_i32_1 = arith.constant 0 : i32
    %c0_i32_2 = arith.constant 0 : i32
    return %arg0, %c0_i32, %c0_i32_0, %c0_i32_1 : i32, i32, i32, i32
  }
  func.func @transform_11(%arg0: i32, %arg1: memref<1xi32, #tpu.memory_space<smem>>) -> (i32, i32) {
    %c0_i32 = arith.constant 0 : i32
    %c0_i32_0 = arith.constant 0 : i32
    %c0_i32_1 = arith.constant 0 : i32
    return %c0_i32, %c0_i32_0 : i32, i32
  }
  func.func @transform_12(%arg0: i32, %arg1: memref<1xi32, #tpu.memory_space<smem>>) -> (i32, i32) {
    %c0_i32 = arith.constant 0 : i32
    %c0_i32_0 = arith.constant 0 : i32
    %c0_i32_1 = arith.constant 0 : i32
    return %c0_i32, %c0_i32_0 : i32, i32
  }
  func.func @transform_13(%arg0: i32, %arg1: memref<1xi32, #tpu.memory_space<smem>>) -> (i32, i32) {
    %c0_i32 = arith.constant 0 : i32
    %c0_i32_0 = arith.constant 0 : i32
    %c0_i32_1 = arith.constant 0 : i32
    return %c0_i32, %c0_i32_0 : i32, i32
  }
  func.func @transform_14(%arg0: i32, %arg1: memref<1xi32, #tpu.memory_space<smem>>) -> (i32, i32, i32, i32) {
    %c0 = arith.constant 0 : index
    %0 = memref.load %arg1[%c0] : memref<1xi32, #tpu.memory_space<smem>>
    %c0_i32 = arith.constant 0 : i32
    %c0_i32_0 = arith.constant 0 : i32
    %c0_i32_1 = arith.constant 0 : i32
    return %arg0, %0, %c0_i32, %c0_i32_0 : i32, i32, i32, i32
  }
  func.func @transform_15(%arg0: i32, %arg1: memref<1xi32, #tpu.memory_space<smem>>) -> (i32, i32, i32, i32) {
    %c0 = arith.constant 0 : index
    %0 = memref.load %arg1[%c0] : memref<1xi32, #tpu.memory_space<smem>>
    %c0_i32 = arith.constant 0 : i32
    %c0_i32_0 = arith.constant 0 : i32
    %c0_i32_1 = arith.constant 0 : i32
    return %arg0, %0, %c0_i32, %c0_i32_0 : i32, i32, i32, i32
  }
}

</mosaic_0001>

<llo_original>
// kernel: transformer_forward.1
$region0: #{transformer_forward.1}
  #allocation0 [shape = 'u32[]', space=smem, size = 0x4, offset = 0x4, fixed_abs, tag = 'smem constant byte address 0x4 - core index']
  #allocation1 [shape = 'u32[144,128]{1,0:T(1,128)}', space=vmem, size = 0x12000, scoped, tag = 'internal scratch']
  #allocation2 [shape = 'f32[2,256]{1,0:T(2,128)}', space=vmem, size = 0x800, scoped, tag = 'scratch operand']
  #allocation3 [shape = 's32[1]{0}', space=sflag, size = 0x4, scoped, tag = 'scoped memory for transformer_forward.1']
  #allocation4 [shape = 's32[1]{0:T(128)S(6)}', space=smem, size = 0x200, scoped, tag = 'prefetched SMEM operand 0']
  %s0 = inlined_call_operand.<no memory space> [shape: s32[1], index: 0, kind: input, shape index: {}]
  %s1 = inlined_call_operand.vmem [shape: f32[2,256], index: 1, kind: input, shape index: {}]
  %s2 = inlined_call_operand.hbm [shape: f32[2,1,256], index: 2, kind: input, shape index: {}]
  %s3 = inlined_call_operand.hbm [shape: f32[2,1,256], index: 3, kind: input, shape index: {}]
  %s4 = inlined_call_operand.hbm [shape: bf16[2,256,512], index: 4, kind: input, shape index: {}]
  %s5 = inlined_call_operand.hbm [shape: bf16[2,256,256], index: 5, kind: input, shape index: {}]
  %s6 = inlined_call_operand.hbm [shape: bf16[2,256,1536], index: 6, kind: input, shape index: {}]
  %s7 = inlined_call_operand.hbm [shape: bf16[2,768,256], index: 7, kind: input, shape index: {}]
  %s8 = inlined_call_operand.hbm [shape: f32[32,1,128], index: 8, kind: input, shape index: {}]
  %s9 = inlined_call_operand.hbm [shape: f32[32,1,128], index: 9, kind: input, shape index: {}]
  %s10 = inlined_call_operand.vmem [shape: bf16[2,16,2,128], index: 10, kind: input, shape index: {}, may-alias: {10,15}]
  %s11 = inlined_call_operand.vmem [shape: bf16[2,16,2,128], index: 11, kind: input, shape index: {}, may-alias: {11,16}]
  %s12 = inlined_call_operand.hbm [shape: f32[1,256], index: 12, kind: input, shape index: {}]
  %s13 = inlined_call_operand.hbm [shape: bf16[256,512], index: 13, kind: input, shape index: {}]
  %s14 = inlined_call_operand.vmem [shape: f32[2,512], index: 14, kind: output, shape index: {0}]
  %s15 = inlined_call_operand.vmem [shape: bf16[2,16,2,128], index: 15, kind: output, shape index: {1}, may-alias: {10,15}]
  %s16 = inlined_call_operand.vmem [shape: bf16[2,16,2,128], index: 16, kind: output, shape index: {2}, may-alias: {11,16}]
  %17 = xla_tuple %s14, %s15, %s16
  %s18 = sld [smem:[#allocation0]]
  $region149: #{transformer_forward.1} parent=0
    _
  %s20 = ssub.s32 1, %s18
  %s21 = scalar_select 0, %s20, %s18
  %22 = sst [smem:[#allocation4]] %s0
  $region1: #{transformer_forward.1} parent=0
    #allocation5 [shape = 'u8[2048]{0}', space=vmem, size = 0x800, scoped, tag = 'input window, operand 2']
    #allocation6 [shape = 's32[2]{0}', space=sflag, size = 0x8, scoped, tag = 'scoped memory for transformer_forward.1']
    #allocation7 [shape = 'u8[2048]{0}', space=vmem, size = 0x800, scoped, tag = 'input window, operand 3']
    #allocation8 [shape = 's32[2]{0}', space=sflag, size = 0x8, scoped, tag = 'scoped memory for transformer_forward.1']
    #allocation9 [shape = 'u8[524288]{0}', space=vmem, size = 0x80000, scoped, tag = 'input window, operand 4']
    #allocation10 [shape = 'u8[262144]{0}', space=vmem, size = 0x40000, scoped, tag = 'input window, operand 5']
    #allocation11 [shape = 's32[2]{0}', space=sflag, size = 0x8, scoped, tag = 'scoped memory for transformer_forward.1']
    #allocation12 [shape = 'u8[1572864]{0}', space=vmem, size = 0x180000, scoped, tag = 'input window, operand 6']
    #allocation13 [shape = 'u8[786432]{0}', space=vmem, size = 0xc0000, scoped, tag = 'input window, operand 7']
    #allocation14 [shape = 's32[2]{0}', space=sflag, size = 0x8, scoped, tag = 'scoped memory for transformer_forward.1']
    #allocation15 [shape = 'u8[512]{0}', space=vmem, size = 0x400, scoped, tag = 'input window, operand 8, single buffered']
    #allocation16 [shape = 'u8[512]{0}', space=vmem, size = 0x400, scoped, tag = 'input window, operand 9, single buffered']
    #allocation17 [shape = 's32[1]{0}', space=sflag, size = 0x4, scoped, tag = 'scoped memory for transformer_forward.1']
    #allocation18 [shape = 'u8[1024]{0}', space=vmem, size = 0x400, scoped, tag = 'input window, operand 12, single buffered']
    #allocation19 [shape = 'u8[262144]{0}', space=vmem, size = 0x40000, scoped, tag = 'input window, operand 13, single buffered']
    #allocation20 [shape = 's32[1]{0}', space=sflag, size = 0x4, scoped, tag = 'scoped memory for transformer_forward.1']
    %23 = vsyncpa [#allocation6], 0
    %s24 = scalar_lea.sflag [#allocation6], 1
    %25 = vsyncpa %s24, 0
    %26 = vsyncpa [#allocation8], 0
    %s27 = scalar_lea.sflag [#allocation8], 1
    %28 = vsyncpa %s27, 0
    %29 = vsyncpa [#allocation11], 0
    %s30 = scalar_lea.sflag [#allocation11], 1
    %31 = vsyncpa %s30, 0
    %32 = vsyncpa [#allocation14], 0
    %s33 = scalar_lea.sflag [#allocation14], 1
    %34 = vsyncpa %s33, 0
    %35 = vsyncpa [#allocation17], 0
    %36 = vsyncpa [#allocation20], 0
    loop: start=0, step=1, limit=4
    $region2: #{transformer_forward.1} parent=1 // loop_pre_header
      _
    $region3: #{transformer_forward.1} parent=1 // loop_header
      %s38 = sphi 0, %s42
      %p39 = scmp.ge.s32.totalorder %s38, 4
      %s46 = sphi 0, %s46
      %s48 = sphi 0, %s46
      %s49 = sphi 0, %s48
      %s63 = sphi 0, %s49
      %s69 = sphi 0, %s71
      %s72 = sphi 0, %s69
      %s73 = sphi 0, %s72
      %s89 = sphi 0, %s73
      %s95 = sphi 0, %s97
      %s98 = sphi 0, %s95
      %s99 = sphi 0, %s98
      %s115 = sphi 0, %s99
      %s121 = sphi 0, %s123
      %s124 = sphi 0, %s121
      %s125 = sphi 0, %s124
      %s141 = sphi 0, %s125
      %s147 = sphi 0, %s149
      %s150 = sphi 0, %s147
      %s151 = sphi 0, %s150
      %s167 = sphi 0, %s151
      %s173 = sphi 0, %s175
      %s176 = sphi 0, %s173
      %s177 = sphi 0, %s176
      %s193 = sphi 0, %s177
      %s199 = sphi 0, %s201
      %s202 = sphi 0, %s199
      %s203 = sphi 0, %s202
      %s219 = sphi 0, %s203
      %s227 = sphi 0, %s229
      %s230 = sphi 0, %s227
      %s231 = sphi 0, %s230
      %s247 = sphi 0, %s231
      %s255 = sphi 0, %s257
      %s258 = sphi 0, %s255
      %s259 = sphi 0, %s258
      %s275 = sphi 0, %s259
      %s281 = sphi 0, %s283
      %s284 = sphi 0, %s281
      %s285 = sphi 0, %s284
      %s301 = sphi 0, %s285
      %s307 = sphi 0, %s309
      %s310 = sphi 0, %s307
      %s311 = sphi 0, %s310
      %s327 = sphi 0, %s311
      %s331 = sphi 0, %s331
      %s333 = sphi 0, %s331
      %s334 = sphi 0, %s333
      %s348 = sphi 0, %s334
      %s352 = sphi 0, %s352
      %s354 = sphi 0, %s352
      %s355 = sphi 0, %s354
      %s369 = sphi 0, %s355
      %s373 = sphi 0, %s373
      %s375 = sphi 0, %s373
      %s376 = sphi 0, %s375
      %s390 = sphi 0, %s376
      %s400 = sphi 0, %s402
      %s403 = sphi 0, %s400
      %s404 = sphi 0, %s403
      %s420 = sphi 0, %s404
      %s430 = sphi 0, %s432
      %s433 = sphi 0, %s430
      %s434 = sphi 0, %s433
      %s450 = sphi 0, %s434
    $region4: #{transformer_forward.1} parent=1 // loop_header_branch
      %41 = sbr.rel (%p39) target = $region8
    $region5: #{transformer_forward.1} parent=1 // loop_body
      %s43 = ssub.s32 %s38, 1
      %s44 = ssub.s32 %s38, 2
      %s45 = sadd.s32 %s38, 1
      %s47 = sadd.s32 %s46, 1
      %p50 = scmp.eq.s32.totalorder %s38, 1
      %p51 = scmp.ne.s32.totalorder %s46, %s48
      %p52 = scmp.eq.s32.totalorder %s38, 0
      %p53 = por %p51, %p52
      %p54 = scmp.ne.s32.totalorder %s46, %s48
      %p55 = scmp.eq.s32.totalorder %s43, 1
      %p56 = por %p54, %p55
      %p57 = scmp.ne.s32.totalorder %s48, %s49
      %p58 = scmp.eq.s32.totalorder %s43, 0
      %p59 = por %p57, %p58
      %p60 = scmp.ne.s32.totalorder %s48, %s49
      %p61 = scmp.eq.s32.totalorder %s44, 1
      %p62 = por %p60, %p61
      %p64 = scmp.ne.s32.totalorder %s49, %s63
      %p65 = scmp.eq.s32.totalorder %s44, 0
      %p66 = por %p64, %p65
      %s67 = ssub.s32 %s38, %s45
      %p68 = scmp.eq.s32.totalorder %s67, 0
      %s70 = sadd.s32 %s69, 1
      %s71 = scalar_select %p68, %s69, %s70
      %p74 = pneg %p68
      %p75 = scmp.eq.s32.totalorder %s38, 1
      %p76 = por %p74, %p75
      %p77 = scmp.ne.s32.totalorder %s69, %s72
      %p78 = scmp.eq.s32.totalorder %s38, 0
      %p79 = por %p77, %p78
      %p80 = scmp.ne.s32.totalorder %s69, %s72
      %p81 = scmp.eq.s32.totalorder %s43, 1
      %p82 = por %p80, %p81
      %p83 = scmp.ne.s32.totalorder %s72, %s73
      %p84 = scmp.eq.s32.totalorder %s43, 0
      %p85 = por %p83, %p84
      %p86 = scmp.ne.s32.totalorder %s72, %s73
      %p87 = scmp.eq.s32.totalorder %s44, 1
      %p88 = por %p86, %p87
      %p90 = scmp.ne.s32.totalorder %s73, %s89
      %p91 = scmp.eq.s32.totalorder %s44, 0
      %p92 = por %p90, %p91
      %s93 = ssub.s32 %s38, %s45
      %p94 = scmp.eq.s32.totalorder %s93, 0
      %s96 = sadd.s32 %s95, 1
      %s97 = scalar_select %p94, %s95, %s96
      %p100 = pneg %p94
      %p101 = scmp.eq.s32.totalorder %s38, 1
      %p102 = por %p100, %p101
      %p103 = scmp.ne.s32.totalorder %s95, %s98
      %p104 = scmp.eq.s32.totalorder %s38, 0
      %p105 = por %p103, %p104
      %p106 = scmp.ne.s32.totalorder %s95, %s98
      %p107 = scmp.eq.s32.totalorder %s43, 1
      %p108 = por %p106, %p107
      %p109 = scmp.ne.s32.totalorder %s98, %s99
      %p110 = scmp.eq.s32.totalorder %s43, 0
      %p111 = por %p109, %p110
      %p112 = scmp.ne.s32.totalorder %s98, %s99
      %p113 = scmp.eq.s32.totalorder %s44, 1
      %p114 = por %p112, %p113
      %p116 = scmp.ne.s32.totalorder %s99, %s115
      %p117 = scmp.eq.s32.totalorder %s44, 0
      %p118 = por %p116, %p117
      %s119 = ssub.s32 %s38, %s45
      %p120 = scmp.eq.s32.totalorder %s119, 0
      %s122 = sadd.s32 %s121, 1
      %s123 = scalar_select %p120, %s121, %s122
      %p126 = pneg %p120
      %p127 = scmp.eq.s32.totalorder %s38, 1
      %p128 = por %p126, %p127
      %p129 = scmp.ne.s32.totalorder %s121, %s124
      %p130 = scmp.eq.s32.totalorder %s38, 0
      %p131 = por %p129, %p130
      %p132 = scmp.ne.s32.totalorder %s121, %s124
      %p133 = scmp.eq.s32.totalorder %s43, 1
      %p134 = por %p132, %p133
      %p135 = scmp.ne.s32.totalorder %s124, %s125
      %p136 = scmp.eq.s32.totalorder %s43, 0
      %p137 = por %p135, %p136
      %p138 = scmp.ne.s32.totalorder %s124, %s125
      %p139 = scmp.eq.s32.totalorder %s44, 1
      %p140 = por %p138, %p139
      %p142 = scmp.ne.s32.totalorder %s125, %s141
      %p143 = scmp.eq.s32.totalorder %s44, 0
      %p144 = por %p142, %p143
      %s145 = ssub.s32 %s38, %s45
      %p146 = scmp.eq.s32.totalorder %s145, 0
      %s148 = sadd.s32 %s147, 1
      %s149 = scalar_select %p146, %s147, %s148
      %p152 = pneg %p146
      %p153 = scmp.eq.s32.totalorder %s38, 1
      %p154 = por %p152, %p153
      %p155 = scmp.ne.s32.totalorder %s147, %s150
      %p156 = scmp.eq.s32.totalorder %s38, 0
      %p157 = por %p155, %p156
      %p158 = scmp.ne.s32.totalorder %s147, %s150
      %p159 = scmp.eq.s32.totalorder %s43, 1
      %p160 = por %p158, %p159
      %p161 = scmp.ne.s32.totalorder %s150, %s151
      %p162 = scmp.eq.s32.totalorder %s43, 0
      %p163 = por %p161, %p162
      %p164 = scmp.ne.s32.totalorder %s150, %s151
      %p165 = scmp.eq.s32.totalorder %s44, 1
      %p166 = por %p164, %p165
      %p168 = scmp.ne.s32.totalorder %s151, %s167
      %p169 = scmp.eq.s32.totalorder %s44, 0
      %p170 = por %p168, %p169
      %s171 = ssub.s32 %s38, %s45
      %p172 = scmp.eq.s32.totalorder %s171, 0
      %s174 = sadd.s32 %s173, 1
      %s175 = scalar_select %p172, %s173, %s174
      %p178 = pneg %p172
      %p179 = scmp.eq.s32.totalorder %s38, 1
      %p180 = por %p178, %p179
      %p181 = scmp.ne.s32.totalorder %s173, %s176
      %p182 = scmp.eq.s32.totalorder %s38, 0
      %p183 = por %p181, %p182
      %p184 = scmp.ne.s32.totalorder %s173, %s176
      %p185 = scmp.eq.s32.totalorder %s43, 1
      %p186 = por %p184, %p185
      %p187 = scmp.ne.s32.totalorder %s176, %s177
      %p188 = scmp.eq.s32.totalorder %s43, 0
      %p189 = por %p187, %p188
      %p190 = scmp.ne.s32.totalorder %s176, %s177
      %p191 = scmp.eq.s32.totalorder %s44, 1
      %p192 = por %p190, %p191
      %p194 = scmp.ne.s32.totalorder %s177, %s193
      %p195 = scmp.eq.s32.totalorder %s44, 0
      %p196 = por %p194, %p195
      %s197 = ssub.s32 %s38, %s45
      %p198 = scmp.eq.s32.totalorder %s197, 0
      %s200 = sadd.s32 %s199, 1
      %s201 = scalar_select %p198, %s199, %s200
      %p204 = pneg %p198
      %p205 = scmp.eq.s32.totalorder %s38, 1
      %p206 = por %p204, %p205
      %p207 = scmp.ne.s32.totalorder %s199, %s202
      %p208 = scmp.eq.s32.totalorder %s38, 0
      %p209 = por %p207, %p208
      %p210 = scmp.ne.s32.totalorder %s199, %s202
      %p211 = scmp.eq.s32.totalorder %s43, 1
      %p212 = por %p210, %p211
      %p213 = scmp.ne.s32.totalorder %s202, %s203
      %p214 = scmp.eq.s32.totalorder %s43, 0
      %p215 = por %p213, %p214
      %p216 = scmp.ne.s32.totalorder %s202, %s203
      %p217 = scmp.eq.s32.totalorder %s44, 1
      %p218 = por %p216, %p217
      %p220 = scmp.ne.s32.totalorder %s203, %s219
      %p221 = scmp.eq.s32.totalorder %s44, 0
      %p222 = por %p220, %p221
      %s223 = sld [smem:[#allocation4]]
      %s224 = sld [smem:[#allocation4]]
      %s225 = ssub.s32 %s223, %s224
      %p226 = scmp.eq.s32.totalorder %s225, 0
      %s228 = sadd.s32 %s227, 1
      %s229 = scalar_select %p226, %s227, %s228
      %p232 = pneg %p226
      %p233 = scmp.eq.s32.totalorder %s38, 1
      %p234 = por %p232, %p233
      %p235 = scmp.ne.s32.totalorder %s227, %s230
      %p236 = scmp.eq.s32.totalorder %s38, 0
      %p237 = por %p235, %p236
      %p238 = scmp.ne.s32.totalorder %s227, %s230
      %p239 = scmp.eq.s32.totalorder %s43, 1
      %p240 = por %p238, %p239
      %p241 = scmp.ne.s32.totalorder %s230, %s231
      %p242 = scmp.eq.s32.totalorder %s43, 0
      %p243 = por %p241, %p242
      %p244 = scmp.ne.s32.totalorder %s230, %s231
      %p245 = scmp.eq.s32.totalorder %s44, 1
      %p246 = por %p244, %p245
      %p248 = scmp.ne.s32.totalorder %s231, %s247
      %p249 = scmp.eq.s32.totalorder %s44, 0
      %p250 = por %p248, %p249
      %s251 = sld [smem:[#allocation4]]
      %s252 = sld [smem:[#allocation4]]
      %s253 = ssub.s32 %s251, %s252
      %p254 = scmp.eq.s32.totalorder %s253, 0
      %s256 = sadd.s32 %s255, 1
      %s257 = scalar_select %p254, %s255, %s256
      %p260 = pneg %p254
      %p261 = scmp.eq.s32.totalorder %s38, 1
      %p262 = por %p260, %p261
      %p263 = scmp.ne.s32.totalorder %s255, %s258
      %p264 = scmp.eq.s32.totalorder %s38, 0
      %p265 = por %p263, %p264
      %p266 = scmp.ne.s32.totalorder %s255, %s258
      %p267 = scmp.eq.s32.totalorder %s43, 1
      %p268 = por %p266, %p267
      %p269 = scmp.ne.s32.totalorder %s258, %s259
      %p270 = scmp.eq.s32.totalorder %s43, 0
      %p271 = por %p269, %p270
      %p272 = scmp.ne.s32.totalorder %s258, %s259
      %p273 = scmp.eq.s32.totalorder %s44, 1
      %p274 = por %p272, %p273
      %p276 = scmp.ne.s32.totalorder %s259, %s275
      %p277 = scmp.eq.s32.totalorder %s44, 0
      %p278 = por %p276, %p277
      %s279 = ssub.s32 %s38, %s45
      %p280 = scmp.eq.s32.totalorder %s279, 0
      %s282 = sadd.s32 %s281, 1
      %s283 = scalar_select %p280, %s281, %s282
      %p286 = pneg %p280
      %p287 = scmp.eq.s32.totalorder %s38, 1
      %p288 = por %p286, %p287
      %p289 = scmp.ne.s32.totalorder %s281, %s284
      %p290 = scmp.eq.s32.totalorder %s38, 0
      %p291 = por %p289, %p290
      %p292 = scmp.ne.s32.totalorder %s281, %s284
      %p293 = scmp.eq.s32.totalorder %s43, 1
      %p294 = por %p292, %p293
      %p295 = scmp.ne.s32.totalorder %s284, %s285
      %p296 = scmp.eq.s32.totalorder %s43, 0
      %p297 = por %p295, %p296
      %p298 = scmp.ne.s32.totalorder %s284, %s285
      %p299 = scmp.eq.s32.totalorder %s44, 1
      %p300 = por %p298, %p299
      %p302 = scmp.ne.s32.totalorder %s285, %s301
      %p303 = scmp.eq.s32.totalorder %s44, 0
      %p304 = por %p302, %p303
      %s305 = ssub.s32 %s38, %s45
      %p306 = scmp.eq.s32.totalorder %s305, 0
      %s308 = sadd.s32 %s307, 1
      %s309 = scalar_select %p306, %s307, %s308
      %p312 = pneg %p306
      %p313 = scmp.eq.s32.totalorder %s38, 1
      %p314 = por %p312, %p313
      %p315 = scmp.ne.s32.totalorder %s307, %s310
      %p316 = scmp.eq.s32.totalorder %s38, 0
      %p317 = por %p315, %p316
      %p318 = scmp.ne.s32.totalorder %s307, %s310
      %p319 = scmp.eq.s32.totalorder %s43, 1
      %p320 = por %p318, %p319
      %p321 = scmp.ne.s32.totalorder %s310, %s311
      %p322 = scmp.eq.s32.totalorder %s43, 0
      %p323 = por %p321, %p322
      %p324 = scmp.ne.s32.totalorder %s310, %s311
      %p325 = scmp.eq.s32.totalorder %s44, 1
      %p326 = por %p324, %p325
      %p328 = scmp.ne.s32.totalorder %s311, %s327
      %p329 = scmp.eq.s32.totalorder %s44, 0
      %p330 = por %p328, %p329
      %s332 = sadd.s32 %s331, 1
      %p335 = scmp.eq.s32.totalorder %s38, 1
      %p336 = scmp.ne.s32.totalorder %s331, %s333
      %p337 = scmp.eq.s32.totalorder %s38, 0
      %p338 = por %p336, %p337
      %p339 = scmp.ne.s32.totalorder %s331, %s333
      %p340 = scmp.eq.s32.totalorder %s43, 1
      %p341 = por %p339, %p340
      %p342 = scmp.ne.s32.totalorder %s333, %s334
      %p343 = scmp.eq.s32.totalorder %s43, 0
      %p344 = por %p342, %p343
      %p345 = scmp.ne.s32.totalorder %s333, %s334
      %p346 = scmp.eq.s32.totalorder %s44, 1
      %p347 = por %p345, %p346
      %p349 = scmp.ne.s32.totalorder %s334, %s348
      %p350 = scmp.eq.s32.totalorder %s44, 0
      %p351 = por %p349, %p350
      %s353 = sadd.s32 %s352, 1
      %p356 = scmp.eq.s32.totalorder %s38, 1
      %p357 = scmp.ne.s32.totalorder %s352, %s354
      %p358 = scmp.eq.s32.totalorder %s38, 0
      %p359 = por %p357, %p358
      %p360 = scmp.ne.s32.totalorder %s352, %s354
      %p361 = scmp.eq.s32.totalorder %s43, 1
      %p362 = por %p360, %p361
      %p363 = scmp.ne.s32.totalorder %s354, %s355
      %p364 = scmp.eq.s32.totalorder %s43, 0
      %p365 = por %p363, %p364
      %p366 = scmp.ne.s32.totalorder %s354, %s355
      %p367 = scmp.eq.s32.totalorder %s44, 1
      %p368 = por %p366, %p367
      %p370 = scmp.ne.s32.totalorder %s355, %s369
      %p371 = scmp.eq.s32.totalorder %s44, 0
      %p372 = por %p370, %p371
      %s374 = sadd.s32 %s373, 1
      %p377 = scmp.eq.s32.totalorder %s38, 1
      %p378 = scmp.ne.s32.totalorder %s373, %s375
      %p379 = scmp.eq.s32.totalorder %s38, 0
      %p380 = por %p378, %p379
      %p381 = scmp.ne.s32.totalorder %s373, %s375
      %p382 = scmp.eq.s32.totalorder %s43, 1
      %p383 = por %p381, %p382
      %p384 = scmp.ne.s32.totalorder %s375, %s376
      %p385 = scmp.eq.s32.totalorder %s43, 0
      %p386 = por %p384, %p385
      %p387 = scmp.ne.s32.totalorder %s375, %s376
      %p388 = scmp.eq.s32.totalorder %s44, 1
      %p389 = por %p387, %p388
      %p391 = scmp.ne.s32.totalorder %s376, %s390
      %p392 = scmp.eq.s32.totalorder %s44, 0
      %p393 = por %p391, %p392
      %s394 = sld [smem:[#allocation4]]
      %s395 = sld [smem:[#allocation4]]
      %s396 = ssub.s32 %s38, %s45
      %s397 = ssub.s32 %s394, %s395
      %s398 = sor.u32 %s396, %s397
      %p399 = scmp.eq.s32.totalorder %s398, 0
      %s401 = sadd.s32 %s400, 1
      %s402 = scalar_select %p399, %s400, %s401
      %p405 = pneg %p399
      %p406 = scmp.eq.s32.totalorder %s38, 1
      %p407 = por %p405, %p406
      %p408 = scmp.ne.s32.totalorder %s400, %s403
      %p409 = scmp.eq.s32.totalorder %s38, 0
      %p410 = por %p408, %p409
      %p411 = scmp.ne.s32.totalorder %s400, %s403
      %p412 = scmp.eq.s32.totalorder %s43, 1
      %p413 = por %p411, %p412
      %p414 = scmp.ne.s32.totalorder %s403, %s404
      %p415 = scmp.eq.s32.totalorder %s43, 0
      %p416 = por %p414, %p415
      %p417 = scmp.ne.s32.totalorder %s403, %s404
      %p418 = scmp.eq.s32.totalorder %s44, 1
      %p419 = por %p417, %p418
      %p421 = scmp.ne.s32.totalorder %s404, %s420
      %p422 = scmp.eq.s32.totalorder %s44, 0
      %p423 = por %p421, %p422
      %s424 = sld [smem:[#allocation4]]
      %s425 = sld [smem:[#allocation4]]
      %s426 = ssub.s32 %s38, %s45
      %s427 = ssub.s32 %s424, %s425
      %s428 = sor.u32 %s426, %s427
      %p429 = scmp.eq.s32.totalorder %s428, 0
      %s431 = sadd.s32 %s430, 1
      %s432 = scalar_select %p429, %s430, %s431
      %p435 = pneg %p429
      %p436 = scmp.eq.s32.totalorder %s38, 1
      %p437 = por %p435, %p436
      %p438 = scmp.ne.s32.totalorder %s430, %s433
      %p439 = scmp.eq.s32.totalorder %s38, 0
      %p440 = por %p438, %p439
      %p441 = scmp.ne.s32.totalorder %s430, %s433
      %p442 = scmp.eq.s32.totalorder %s43, 1
      %p443 = por %p441, %p442
      %p444 = scmp.ne.s32.totalorder %s433, %s434
      %p445 = scmp.eq.s32.totalorder %s43, 0
      %p446 = por %p444, %p445
      %p447 = scmp.ne.s32.totalorder %s433, %s434
      %p448 = scmp.eq.s32.totalorder %s44, 1
      %p449 = por %p447, %p448
      %p451 = scmp.ne.s32.totalorder %s434, %s450
      %p452 = scmp.eq.s32.totalorder %s44, 0
      %p453 = por %p451, %p452
      %p454 = scmp.le.s32.totalorder 1, %s38
      %p455 = scmp.lt.s32.totalorder %s38, 3
      %p456 = pnand %p454, %p455
      %p457 = pneg %p456
      // Predicated region
      $region9: #{transformer_forward.1} parent=5 // pred_check
        _
      $region10: #{transformer_forward.1} parent=5 // pred_check_branch
        %459 = sbr.rel (%p456) target = $region12
      $region11: #{transformer_forward.1} parent=5 // pred_region
        %s460 = ssub.s32 %s38, 1
        // Predicated region
        $region13: #{transformer_forward.1} parent=11 // pred_check
          %p461 = pneg %p59
        $region14: #{transformer_forward.1} parent=11 // pred_check_branch
          %463 = sbr.rel (%p461) target = $region16
        $region15: #{transformer_forward.1} parent=11 // pred_region
          _
        $region16: #{transformer_forward.1} parent=11 // pred_fallthru
          _
        // Predicated region
        $region17: #{transformer_forward.1} parent=11 // pred_check
          %p464 = pneg %p243
        $region18: #{transformer_forward.1} parent=11 // pred_check_branch
          %466 = sbr.rel (%p464) target = $region20
        $region19: #{transformer_forward.1} parent=11 // pred_region
          %s467 = sld [smem:[#allocation4]]
          %s469 = ssub.s32 16, 16
          %470 = vsyncadd [#allocation14], %s469
          %s471 = smul.addr %s467, 16
          %s472 = scalar_lea.hbm %s8, %s471
          %s474 = sshll.u32 [#allocation15], 4
          %s475 = int_to_ptr.vmem [resolvable:$true] %s474
          %477 = dma.hbm_to_vmem [thread:$0]  %s472, 16, %s475, [#allocation14]
        $region20: #{transformer_forward.1} parent=11 // pred_fallthru
          _
        // Predicated region
        $region21: #{transformer_forward.1} parent=11 // pred_check
          %p478 = pneg %p271
        $region22: #{transformer_forward.1} parent=11 // pred_check_branch
          %480 = sbr.rel (%p478) target = $region24
        $region23: #{transformer_forward.1} parent=11 // pred_region
          %s481 = sld [smem:[#allocation4]]
          %s483 = ssub.s32 16, 16
          %484 = vsyncadd [#allocation17], %s483
          %s485 = smul.addr %s481, 16
          %s486 = scalar_lea.hbm %s9, %s485
          %s488 = sshll.u32 [#allocation16], 4
          %s489 = int_to_ptr.vmem [resolvable:$true] %s488
          %491 = dma.hbm_to_vmem [thread:$0]  %s486, 16, %s489, [#allocation17]
        $region24: #{transformer_forward.1} parent=11 // pred_fallthru
          _
        // Predicated region
        $region25: #{transformer_forward.1} parent=11 // pred_check
          %p492 = pneg %p344
        $region26: #{transformer_forward.1} parent=11 // pred_check_branch
          %494 = sbr.rel (%p492) target = $region28
        $region27: #{transformer_forward.1} parent=11 // pred_region
          %s496 = ssub.s32 32, 32
          %497 = vsyncadd [#allocation17], %s496
          %s499 = sshll.u32 [#allocation18], 4
          %s500 = int_to_ptr.vmem [resolvable:$true] %s499
          %502 = dma.hbm_to_vmem [thread:$0]  %s12, 32, %s500, [#allocation17]
        $region28: #{transformer_forward.1} parent=11 // pred_fallthru
          _
        // Predicated region
        $region29: #{transformer_forward.1} parent=11 // pred_check
          %p503 = pneg %p365
        $region30: #{transformer_forward.1} parent=11 // pred_check_branch
          %505 = sbr.rel (%p503) target = $region32
        $region31: #{transformer_forward.1} parent=11 // pred_region
          %s507 = ssub.s32 8192, 8192
          %508 = vsyncadd [#allocation20], %s507
          %s509 = sshll.u32 [#allocation19], 4
          %s510 = int_to_ptr.vmem [resolvable:$true] %s509
          %515 = dma.hbm_to_vmem [thread:$0]  %s13, 8192, %s510, [#allocation20], 256, 256, 16
        $region32: #{transformer_forward.1} parent=11 // pred_fallthru
          _
      $region12: #{transformer_forward.1} parent=5 // pred_fallthru
        _
      %p516 = scmp.lt.s32.totalorder %s38, 2
      // Predicated region
      $region33: #{transformer_forward.1} parent=5 // pred_check
        %p517 = pneg %p516
      $region34: #{transformer_forward.1} parent=5 // pred_check_branch
        %519 = sbr.rel (%p517) target = $region36
      $region35: #{transformer_forward.1} parent=5 // pred_region
        // Predicated region
        $region37: #{transformer_forward.1} parent=35 // pred_check
          %p520 = pneg %p79
        $region38: #{transformer_forward.1} parent=35 // pred_check_branch
          %522 = sbr.rel (%p520) target = $region40
        $region39: #{transformer_forward.1} parent=35 // pred_region
          %s523 = sand.u32 %s69, 1
          %s524 = scalar_lea.sflag [#allocation6], %s523
          %s525 = sand.u32 %s69, 1
          %s526 = smul.addr %s525, 2
          %s527 = scalar_lea.vmem [#allocation5], %s526
          %s529 = ssub.s32 32, 32
          %530 = vsyncadd %s524, %s529
          %s531 = smul.addr %s38, 2
          %s532 = smul.addr %s531, 16
          %s533 = scalar_lea.hbm %s2, %s532
          %s535 = sshll.u32 %s527, 4
          %s536 = int_to_ptr.vmem [resolvable:$true] %s535
          %538 = dma.hbm_to_vmem [thread:$0]  %s533, 32, %s536, %s524
        $region40: #{transformer_forward.1} parent=35 // pred_fallthru
          _
        // Predicated region
        $region41: #{transformer_forward.1} parent=35 // pred_check
          %p539 = pneg %p105
        $region42: #{transformer_forward.1} parent=35 // pred_check_branch
          %541 = sbr.rel (%p539) target = $region44
        $region43: #{transformer_forward.1} parent=35 // pred_region
          %s542 = sand.u32 %s38, 1
          %s543 = scalar_lea.sflag [#allocation8], %s542
          %s544 = sand.u32 %s95, 1
          %s545 = smul.addr %s544, 2
          %s546 = scalar_lea.vmem [#allocation7], %s545
          %s548 = ssub.s32 32, 32
          %549 = vsyncadd %s543, %s548
          %s550 = smul.addr %s38, 2
          %s551 = smul.addr %s550, 16
          %s552 = scalar_lea.hbm %s3, %s551
          %s554 = sshll.u32 %s546, 4
          %s555 = int_to_ptr.vmem [resolvable:$true] %s554
          %557 = dma.hbm_to_vmem [thread:$0]  %s552, 32, %s555, %s543
        $region44: #{transformer_forward.1} parent=35 // pred_fallthru
          _
        // Predicated region
        $region45: #{transformer_forward.1} parent=35 // pred_check
          %p558 = pneg %p131
        $region46: #{transformer_forward.1} parent=35 // pred_check_branch
          %560 = sbr.rel (%p558) target = $region48
        $region47: #{transformer_forward.1} parent=35 // pred_region
          %s561 = sand.u32 %s38, 1
          %s562 = scalar_lea.sflag [#allocation8], %s561
          %s563 = sand.u32 %s121, 1
          %s564 = smul.addr %s563, 512
          %s565 = scalar_lea.vmem [#allocation9], %s564
          %s567 = ssub.s32 8192, 8192
          %568 = vsyncadd %s562, %s567
          %s569 = smul.addr %s38, 128
          %s570 = smul.addr %s569, 64
          %s571 = scalar_lea.hbm %s4, %s570
          %s572 = sshll.u32 %s565, 4
          %s573 = int_to_ptr.vmem [resolvable:$true] %s572
          %578 = dma.hbm_to_vmem [thread:$0]  %s571, 8192, %s573, %s562, 256, 256, 16
        $region48: #{transformer_forward.1} parent=35 // pred_fallthru
          _
        // Predicated region
        $region49: #{transformer_forward.1} parent=35 // pred_check
          %p579 = pneg %p157
        $region50: #{transformer_forward.1} parent=35 // pred_check_branch
          %581 = sbr.rel (%p579) target = $region52
        $region51: #{transformer_forward.1} parent=35 // pred_region
          %s582 = sand.u32 %s38, 1
          %s583 = scalar_lea.sflag [#allocation11], %s582
          %s584 = sand.u32 %s147, 1
          %s585 = smul.addr %s584, 256
          %s586 = scalar_lea.vmem [#allocation10], %s585
          %s588 = ssub.s32 4096, 4096
          %589 = vsyncadd %s583, %s588
          %s590 = smul.addr %s38, 64
          %s591 = smul.addr %s590, 64
          %s592 = scalar_lea.hbm %s5, %s591
          %s593 = sshll.u32 %s586, 4
          %s594 = int_to_ptr.vmem [resolvable:$true] %s593
          %599 = dma.hbm_to_vmem [thread:$0]  %s592, 4096, %s594, %s583, 128, 128, 8
        $region52: #{transformer_forward.1} parent=35 // pred_fallthru
          _
        // Predicated region
        $region53: #{transformer_forward.1} parent=35 // pred_check
          %p600 = pneg %p183
        $region54: #{transformer_forward.1} parent=35 // pred_check_branch
          %602 = sbr.rel (%p600) target = $region56
        $region55: #{transformer_forward.1} parent=35 // pred_region
          %s603 = sand.u32 %s38, 1
          %s604 = scalar_lea.sflag [#allocation11], %s603
          %s605 = sand.u32 %s173, 1
          %s606 = smul.addr %s605, 1536
          %s607 = scalar_lea.vmem [#allocation12], %s606
          %s609 = ssub.s32 24576, 24576
          %610 = vsyncadd %s604, %s609
          %s611 = smul.addr %s38, 384
          %s612 = smul.addr %s611, 64
          %s613 = scalar_lea.hbm %s6, %s612
          %s614 = sshll.u32 %s607, 4
          %s615 = int_to_ptr.vmem [resolvable:$true] %s614
          %620 = dma.hbm_to_vmem [thread:$0]  %s613, 24576, %s615, %s604, 768, 768, 48
        $region56: #{transformer_forward.1} parent=35 // pred_fallthru
          _
        // Predicated region
        $region57: #{transformer_forward.1} parent=35 // pred_check
          %p621 = pneg %p209
        $region58: #{transformer_forward.1} parent=35 // pred_check_branch
          %623 = sbr.rel (%p621) target = $region60
        $region59: #{transformer_forward.1} parent=35 // pred_region
          %s624 = sand.u32 %s38, 1
          %s625 = scalar_lea.sflag [#allocation14], %s624
          %s626 = sand.u32 %s199, 1
          %s627 = smul.addr %s626, 768
          %s628 = scalar_lea.vmem [#allocation13], %s627
          %s630 = ssub.s32 12288, 12288
          %631 = vsyncadd %s625, %s630
          %s632 = smul.addr %s38, 192
          %s633 = smul.addr %s632, 64
          %s634 = scalar_lea.hbm %s7, %s633
          %s635 = sshll.u32 %s628, 4
          %s636 = int_to_ptr.vmem [resolvable:$true] %s635
          %641 = dma.hbm_to_vmem [thread:$0]  %s634, 12288, %s636, %s625, 128, 128, 8
        $region60: #{transformer_forward.1} parent=35 // pred_fallthru
          _
        // Predicated region
        $region61: #{transformer_forward.1} parent=35 // pred_check
          %p642 = pneg %p291
        $region62: #{transformer_forward.1} parent=35 // pred_check_branch
          %644 = sbr.rel (%p642) target = $region64
        $region63: #{transformer_forward.1} parent=35 // pred_region
          %p645 = scmp.lt.s32.totalorder %s38, 1
          %s646 = scalar_select %p645, %s38, 1
          %s647 = smul.addr %s646, 16
          %s648 = scalar_lea.vmem %s10, %s647
        $region64: #{transformer_forward.1} parent=35 // pred_fallthru
          _
        // Predicated region
        $region65: #{transformer_forward.1} parent=35 // pred_check
          %p649 = pneg %p317
        $region66: #{transformer_forward.1} parent=35 // pred_check_branch
          %651 = sbr.rel (%p649) target = $region68
        $region67: #{transformer_forward.1} parent=35 // pred_region
          %p652 = scmp.lt.s32.totalorder %s38, 1
          %s653 = scalar_select %p652, %s38, 1
          %s654 = smul.addr %s653, 16
          %s655 = scalar_lea.vmem %s11, %s654
        $region68: #{transformer_forward.1} parent=35 // pred_fallthru
          _
      $region36: #{transformer_forward.1} parent=5 // pred_fallthru
        _
      %p656 = scmp.le.s32.totalorder 1, %s38
      %p657 = scmp.lt.s32.totalorder %s38, 3
      %p658 = pnand %p656, %p657
      %p659 = pneg %p658
      // Predicated region
      $region69: #{transformer_forward.1} parent=5 // pred_check
        _
      $region70: #{transformer_forward.1} parent=5 // pred_check_branch
        %661 = sbr.rel (%p658) target = $region72
      $region71: #{transformer_forward.1} parent=5 // pred_region
        %s662 = ssub.s32 %s38, 1
        %s663 = sand.u32 %s72, 1
        %s664 = scalar_lea.sflag [#allocation6], %s663
        %s665 = sand.u32 %s72, 1
        %s666 = smul.addr %s665, 2
        %s667 = scalar_lea.vmem [#allocation5], %s666
        // Predicated region
        $region73: #{transformer_forward.1} parent=71 // pred_check
          %p668 = pneg %p85
        $region74: #{transformer_forward.1} parent=71 // pred_check_branch
          %670 = sbr.rel (%p668) target = $region76
        $region75: #{transformer_forward.1} parent=71 // pred_region
          %671 = dma.done %s664, 32
        $region76: #{transformer_forward.1} parent=71 // pred_fallthru
          _
        %s672 = sand.u32 %s43, 1
        %s673 = scalar_lea.sflag [#allocation8], %s672
        %s674 = sand.u32 %s98, 1
        %s675 = smul.addr %s674, 2
        %s676 = scalar_lea.vmem [#allocation7], %s675
        // Predicated region
        $region77: #{transformer_forward.1} parent=71 // pred_check
          %p677 = pneg %p111
        $region78: #{transformer_forward.1} parent=71 // pred_check_branch
          %679 = sbr.rel (%p677) target = $region80
        $region79: #{transformer_forward.1} parent=71 // pred_region
          %680 = dma.done %s673, 32
        $region80: #{transformer_forward.1} parent=71 // pred_fallthru
          _
        %s681 = sand.u32 %s43, 1
        %s682 = scalar_lea.sflag [#allocation8], %s681
        %s683 = sand.u32 %s124, 1
        %s684 = smul.addr %s683, 512
        %s685 = scalar_lea.vmem [#allocation9], %s684
        // Predicated region
        $region81: #{transformer_forward.1} parent=71 // pred_check
          %p686 = pneg %p137
        $region82: #{transformer_forward.1} parent=71 // pred_check_branch
          %688 = sbr.rel (%p686) target = $region84
        $region83: #{transformer_forward.1} parent=71 // pred_region
          %689 = dma.done %s682, 8192
        $region84: #{transformer_forward.1} parent=71 // pred_fallthru
          _
        %s690 = sand.u32 %s43, 1
        %s691 = scalar_lea.sflag [#allocation11], %s690
        %s692 = sand.u32 %s150, 1
        %s693 = smul.addr %s692, 256
        %s694 = scalar_lea.vmem [#allocation10], %s693
        // Predicated region
        $region85: #{transformer_forward.1} parent=71 // pred_check
          %p695 = pneg %p163
        $region86: #{transformer_forward.1} parent=71 // pred_check_branch
          %697 = sbr.rel (%p695) target = $region88
        $region87: #{transformer_forward.1} parent=71 // pred_region
          %698 = dma.done %s691, 4096
        $region88: #{transformer_forward.1} parent=71 // pred_fallthru
          _
        %s699 = sand.u32 %s43, 1
        %s700 = scalar_lea.sflag [#allocation11], %s699
        %s701 = sand.u32 %s176, 1
        %s702 = smul.addr %s701, 1536
        %s703 = scalar_lea.vmem [#allocation12], %s702
        // Predicated region
        $region89: #{transformer_forward.1} parent=71 // pred_check
          %p704 = pneg %p189
        $region90: #{transformer_forward.1} parent=71 // pred_check_branch
          %706 = sbr.rel (%p704) target = $region92
        $region91: #{transformer_forward.1} parent=71 // pred_region
          %707 = dma.done %s700, 24576
        $region92: #{transformer_forward.1} parent=71 // pred_fallthru
          _
        %s708 = sand.u32 %s43, 1
        %s709 = scalar_lea.sflag [#allocation14], %s708
        %s710 = sand.u32 %s202, 1
        %s711 = smul.addr %s710, 768
        %s712 = scalar_lea.vmem [#allocation13], %s711
        // Predicated region
        $region93: #{transformer_forward.1} parent=71 // pred_check
          %p713 = pneg %p215
        $region94: #{transformer_forward.1} parent=71 // pred_check_branch
          %715 = sbr.rel (%p713) target = $region96
        $region95: #{transformer_forward.1} parent=71 // pred_region
          %716 = dma.done %s709, 12288
        $region96: #{transformer_forward.1} parent=71 // pred_fallthru
          _
        // Predicated region
        $region97: #{transformer_forward.1} parent=71 // pred_check
          %p717 = pneg %p243
        $region98: #{transformer_forward.1} parent=71 // pred_check_branch
          %719 = sbr.rel (%p717) target = $region100
        $region99: #{transformer_forward.1} parent=71 // pred_region
          %720 = dma.done [#allocation14], 16
        $region100: #{transformer_forward.1} parent=71 // pred_fallthru
          _
        // Predicated region
        $region101: #{transformer_forward.1} parent=71 // pred_check
          %p721 = pneg %p271
        $region102: #{transformer_forward.1} parent=71 // pred_check_branch
          %723 = sbr.rel (%p721) target = $region104
        $region103: #{transformer_forward.1} parent=71 // pred_region
          %724 = dma.done [#allocation17], 16
        $region104: #{transformer_forward.1} parent=71 // pred_fallthru
          _
        // Predicated region
        $region105: #{transformer_forward.1} parent=71 // pred_check
          %p725 = pneg %p344
        $region106: #{transformer_forward.1} parent=71 // pred_check_branch
          %727 = sbr.rel (%p725) target = $region108
        $region107: #{transformer_forward.1} parent=71 // pred_region
          %728 = dma.done [#allocation17], 32
        $region108: #{transformer_forward.1} parent=71 // pred_fallthru
          _
        // Predicated region
        $region109: #{transformer_forward.1} parent=71 // pred_check
          %p729 = pneg %p365
        $region110: #{transformer_forward.1} parent=71 // pred_check_branch
          %731 = sbr.rel (%p729) target = $region112
        $region111: #{transformer_forward.1} parent=71 // pred_region
          %732 = dma.done [#allocation20], 8192
        $region112: #{transformer_forward.1} parent=71 // pred_fallthru
          _
        %p733 = pneg %p59
        %p734 = pneg %p56
        %s735 = sand.u32 %s72, 1
        %s736 = scalar_lea.sflag [#allocation6], %s735
        %s737 = sand.u32 %s72, 1
        %s738 = smul.addr %s737, 2
        %s739 = scalar_lea.vmem [#allocation5], %s738
        %p740 = pneg %p85
        %p741 = pneg %p82
        %s742 = sand.u32 %s43, 1
        %s743 = scalar_lea.sflag [#allocation8], %s742
        %s744 = sand.u32 %s98, 1
        %s745 = smul.addr %s744, 2
        %s746 = scalar_lea.vmem [#allocation7], %s745
        %p747 = pneg %p111
        %p748 = pneg %p108
        %s749 = sand.u32 %s43, 1
        %s750 = scalar_lea.sflag [#allocation8], %s749
        %s751 = sand.u32 %s124, 1
        %s752 = smul.addr %s751, 512
        %s753 = scalar_lea.vmem [#allocation9], %s752
        %p754 = pneg %p137
        %p755 = pneg %p134
        %s756 = sand.u32 %s43, 1
        %s757 = scalar_lea.sflag [#allocation11], %s756
        %s758 = sand.u32 %s150, 1
        %s759 = smul.addr %s758, 256
        %s760 = scalar_lea.vmem [#allocation10], %s759
        %p761 = pneg %p163
        %p762 = pneg %p160
        %s763 = sand.u32 %s43, 1
        %s764 = scalar_lea.sflag [#allocation11], %s763
        %s765 = sand.u32 %s176, 1
        %s766 = smul.addr %s765, 1536
        %s767 = scalar_lea.vmem [#allocation12], %s766
        %p768 = pneg %p189
        %p769 = pneg %p186
        %s770 = sand.u32 %s43, 1
        %s771 = scalar_lea.sflag [#allocation14], %s770
        %s772 = sand.u32 %s202, 1
        %s773 = smul.addr %s772, 768
        %s774 = scalar_lea.vmem [#allocation13], %s773
        %p775 = pneg %p215
        %p776 = pneg %p212
        %p777 = pneg %p243
        %p778 = pneg %p240
        %p779 = pneg %p271
        %p780 = pneg %p268
        %p781 = scmp.lt.s32.totalorder %s43, 1
        %s782 = scalar_select %p781, %s43, 1
        %s783 = smul.addr %s782, 16
        %s784 = scalar_lea.vmem %s10, %s783
        %p785 = pneg %p297
        %p786 = pneg %p294
        %p787 = scmp.lt.s32.totalorder %s43, 1
        %s788 = scalar_select %p787, %s43, 1
        %s789 = smul.addr %s788, 16
        %s790 = scalar_lea.vmem %s11, %s789
        %p791 = pneg %p323
        %p792 = pneg %p320
        %p793 = pneg %p344
        %p794 = pneg %p341
        %p795 = pneg %p365
        %p796 = pneg %p362
        %p797 = pneg %p386
        %p798 = pneg %p383
        %p799 = pneg %p416
        %p800 = pneg %p413
        %s801 = sld [smem:[#allocation4]]
        %p802 = scmp.lt.s32.totalorder %s43, 1
        %s803 = scalar_select %p802, %s43, 1
        %p804 = scmp.lt.s32.totalorder %s801, 15
        %s805 = scalar_select %p804, %s801, 15
        %s806 = smul.addr %s803, 16
        %s807 = sadd.s32 %s805, %s806
        %s808 = scalar_lea.vmem %s15, %s807
        %p809 = pneg %p446
        %p810 = pneg %p443
        %s811 = sld [smem:[#allocation4]]
        %p812 = scmp.lt.s32.totalorder %s43, 1
        %s813 = scalar_select %p812, %s43, 1
        %p814 = scmp.lt.s32.totalorder %s811, 15
        %s815 = scalar_select %p814, %s811, 15
        %s816 = smul.addr %s813, 16
        %s817 = sadd.s32 %s815, %s816
        %s818 = scalar_lea.vmem %s16, %s817
        %s819 = sld [smem:[#allocation4]]
        %s820 = sld [smem:[#allocation4]]
        %p821 = scmp.lt.s32.totalorder %s43, 1
        %s822 = scalar_select %p821, %s43, 1
        %s823 = smul.addr %s822, 16
        %s824 = scalar_lea.vmem %s10, %s823
        %p825 = scmp.lt.s32.totalorder %s43, 1
        %s826 = scalar_select %p825, %s43, 1
        %s827 = smul.addr %s826, 16
        %s828 = scalar_lea.vmem %s11, %s827
        %s829 = sld [smem:[#allocation4]]
        %p830 = scmp.lt.s32.totalorder %s43, 1
        %s831 = scalar_select %p830, %s43, 1
        %p832 = scmp.lt.s32.totalorder %s829, 15
        %s833 = scalar_select %p832, %s829, 15
        %s834 = smul.addr %s831, 16
        %s835 = sadd.s32 %s833, %s834
        %s836 = scalar_lea.vmem %s15, %s835
        %s837 = sld [smem:[#allocation4]]
        %s838 = sld [smem:[#allocation4]]
        %p839 = scmp.lt.s32.totalorder %s43, 1
        %s840 = scalar_select %p839, %s43, 1
        %p841 = scmp.lt.s32.totalorder %s838, 15
        %s842 = scalar_select %p841, %s838, 15
        %s843 = smul.addr %s840, 16
        %s844 = sadd.s32 %s842, %s843
        %s845 = scalar_lea.vmem %s16, %s844
        %s846 = sld [smem:[#allocation4]]
        %s848 = sld [smem:[#allocation4]]
        %p849 = scmp.eq.s32.totalorder %s43, 0
        // Predicated region
        $region113: #{transformer_forward.1} parent=71 // pred_check
          %p850 = pneg %p849
        $region114: #{transformer_forward.1} parent=71 // pred_check_branch
          %852 = sbr.rel (%p850) target = $region116
        $region115: #{transformer_forward.1} parent=71 // pred_region
          %v853 = vld [vmem:[%s1] sm:$0xf]
          %854 = vst [vmem:[#allocation2] sm:$0xf] %v853
        $region116: #{transformer_forward.1} parent=71 // pred_fallthru
          _
        %v855 = vld [vmem:[#allocation2] sm:$0xf]
        %v856 = vmul.f32 %v855, %v855
        %v859 = vunpack.c.l.s4 1983009808
        %v860 = vunpack.c.0.s8 %v859
        %v861 = vlaneseq
        %v862 = vshrl.u32 %v861, 7
        %v863 = vsub.s32 %v860, %v862
        %v864 = vrot.slane %v856, %v863
        %v865 = vcombine.high %v864, %v864
        %vm868 = vcmask 1041408
        %v869 = vsel %vm868, %v864, 0.0
        %v870 = vsel %vm868, %v865, 0.0
        %v871 = vadd.f32 %v869, %v870
        %872 = vadd.xlane.f32.xlu0 %v871
        %v873 = vpop.xlane.xlu0 %872
        %v874 = vrcp.pop 256.0
        %v875 = vmul.f32 %v873, %v874
        %v876 = vadd.f32 %v875, 1e-05
        %v877 = vrsqrt.pop %v876
        %v880 = vunpack.c.l.s4 269488144
        %v881 = vunpack.c.0.s8 %v880
        %v882 = vlaneseq
        %v883 = vshrl.u32 %v882, 7
        %v884 = vsub.s32 %v881, %v883
        %v885 = vrot.slane %v877, %v884
        %v887 = vmul.f32 %v855, %v885
        %v888 = vld [vmem:[%s667] sm:$0x3]
        %v890 = vlaneseq
        %v891 = vshrl.u32 %v890, 7
        %v892 = vsub.s32 0, %v891
        %v893 = vrot.slane %v888, %v892
        %v894 = vlaneseq
        %v895 = vshrl.u32 %v894, 7
        %v896 = vsub.s32 1, %v895
        %v897 = vrot.slane %v888, %v896
        %v898 = vcombine.low %v893, %v897
        %v900 = vunpack.c.l.s4 1983009808
        %v901 = vunpack.c.0.s8 %v900
        %v902 = vlaneseq
        %v903 = vshrl.u32 %v902, 7
        %v904 = vsub.s32 %v901, %v903
        %v905 = vrot.slane %v898, %v904
        %v907 = vmul.f32 %v887, %v905
        %v910 = vunpack.c.l.s4 1983009808
        %v911 = vunpack.c.0.s8 %v910
        %v912 = vlaneseq
        %v913 = vshrl.u32 %v912, 7
        %v914 = vsub.s32 %v911, %v913
        %v915 = vrot.slane %v907, %v914
        %v916 = vcombine.high %v915, %v915
        %v919 = vpack.c.bf16 %v915, %v915
        %v920 = vpack.c.bf16 %v916, %v916
        %v921 = vld [vmem:[%s685] sm:$0xff]
        %v922 = vld [vmem:[%s685 + $0x8] sm:$0xff]
        %v923 = vld [vmem:[%s685 + $0x10] sm:$0xff]
        %v924 = vld [vmem:[%s685 + $0x18] sm:$0xff]
        %v925 = vld [vmem:[%s685 + $0x20] sm:$0xff]
        %v926 = vld [vmem:[%s685 + $0x28] sm:$0xff]
        %v927 = vld [vmem:[%s685 + $0x30] sm:$0xff]
        %v928 = vld [vmem:[%s685 + $0x38] sm:$0xff]
        %v929 = vld [vmem:[%s685 + $0x40] sm:$0xff]
        %v930 = vld [vmem:[%s685 + $0x48] sm:$0xff]
        %v931 = vld [vmem:[%s685 + $0x50] sm:$0xff]
        %v932 = vld [vmem:[%s685 + $0x58] sm:$0xff]
        %v933 = vld [vmem:[%s685 + $0x60] sm:$0xff]
        %v934 = vld [vmem:[%s685 + $0x68] sm:$0xff]
        %v935 = vld [vmem:[%s685 + $0x70] sm:$0xff]
        %v936 = vld [vmem:[%s685 + $0x78] sm:$0xff]
        %v937 = vld [vmem:[%s685 + $0x80] sm:$0xff]
        %v938 = vld [vmem:[%s685 + $0x88] sm:$0xff]
        %v939 = vld [vmem:[%s685 + $0x90] sm:$0xff]
        %v940 = vld [vmem:[%s685 + $0x98] sm:$0xff]
        %v941 = vld [vmem:[%s685 + $0xa0] sm:$0xff]
        %v942 = vld [vmem:[%s685 + $0xa8] sm:$0xff]
        %v943 = vld [vmem:[%s685 + $0xb0] sm:$0xff]
        %v944 = vld [vmem:[%s685 + $0xb8] sm:$0xff]
        %v945 = vld [vmem:[%s685 + $0xc0] sm:$0xff]
        %v946 = vld [vmem:[%s685 + $0xc8] sm:$0xff]
        %v947 = vld [vmem:[%s685 + $0xd0] sm:$0xff]
        %v948 = vld [vmem:[%s685 + $0xd8] sm:$0xff]
        %v949 = vld [vmem:[%s685 + $0xe0] sm:$0xff]
        %v950 = vld [vmem:[%s685 + $0xe8] sm:$0xff]
        %v951 = vld [vmem:[%s685 + $0xf0] sm:$0xff]
        %v952 = vld [vmem:[%s685 + $0xf8] sm:$0xff]
        %v953 = vld [vmem:[%s685 + $0x100] sm:$0xff]
        %v954 = vld [vmem:[%s685 + $0x108] sm:$0xff]
        %v955 = vld [vmem:[%s685 + $0x110] sm:$0xff]
        %v956 = vld [vmem:[%s685 + $0x118] sm:$0xff]
        %v957 = vld [vmem:[%s685 + $0x120] sm:$0xff]
        %v958 = vld [vmem:[%s685 + $0x128] sm:$0xff]
        %v959 = vld [vmem:[%s685 + $0x130] sm:$0xff]
        %v960 = vld [vmem:[%s685 + $0x138] sm:$0xff]
        %v961 = vld [vmem:[%s685 + $0x140] sm:$0xff]
        %v962 = vld [vmem:[%s685 + $0x148] sm:$0xff]
        %v963 = vld [vmem:[%s685 + $0x150] sm:$0xff]
        %v964 = vld [vmem:[%s685 + $0x158] sm:$0xff]
        %v965 = vld [vmem:[%s685 + $0x160] sm:$0xff]
        %v966 = vld [vmem:[%s685 + $0x168] sm:$0xff]
        %v967 = vld [vmem:[%s685 + $0x170] sm:$0xff]
        %v968 = vld [vmem:[%s685 + $0x178] sm:$0xff]
        %v969 = vld [vmem:[%s685 + $0x180] sm:$0xff]
        %v970 = vld [vmem:[%s685 + $0x188] sm:$0xff]
        %v971 = vld [vmem:[%s685 + $0x190] sm:$0xff]
        %v972 = vld [vmem:[%s685 + $0x198] sm:$0xff]
        %v973 = vld [vmem:[%s685 + $0x1a0] sm:$0xff]
        %v974 = vld [vmem:[%s685 + $0x1a8] sm:$0xff]
        %v975 = vld [vmem:[%s685 + $0x1b0] sm:$0xff]
        %v976 = vld [vmem:[%s685 + $0x1b8] sm:$0xff]
        %v977 = vld [vmem:[%s685 + $0x1c0] sm:$0xff]
        %v978 = vld [vmem:[%s685 + $0x1c8] sm:$0xff]
        %v979 = vld [vmem:[%s685 + $0x1d0] sm:$0xff]
        %v980 = vld [vmem:[%s685 + $0x1d8] sm:$0xff]
        %v981 = vld [vmem:[%s685 + $0x1e0] sm:$0xff]
        %v982 = vld [vmem:[%s685 + $0x1e8] sm:$0xff]
        %v983 = vld [vmem:[%s685 + $0x1f0] sm:$0xff]
        %v984 = vld [vmem:[%s685 + $0x1f8] sm:$0xff]
        %v1049 = vunpack.c.l.b16 %v921
        %v1050 = vunpack.c.h.b16 %v921
        %v1051 = vunpack.c.l.b16 %v922
        %v1052 = vunpack.c.h.b16 %v922
        %v1053 = vunpack.c.l.b16 %v923
        %v1054 = vunpack.c.h.b16 %v923
        %v1055 = vunpack.c.l.b16 %v924
        %v1056 = vunpack.c.h.b16 %v924
        %v1057 = vunpack.c.l.b16 %v925
        %v1058 = vunpack.c.h.b16 %v925
        %v1059 = vunpack.c.l.b16 %v926
        %v1060 = vunpack.c.h.b16 %v926
        %v1061 = vunpack.c.l.b16 %v927
        %v1062 = vunpack.c.h.b16 %v927
        %v1063 = vunpack.c.l.b16 %v928
        %v1064 = vunpack.c.h.b16 %v928
        %v1065 = vunpack.c.l.b16 %v929
        %v1066 = vunpack.c.h.b16 %v929
        %v1067 = vunpack.c.l.b16 %v930
        %v1068 = vunpack.c.h.b16 %v930
        %v1069 = vunpack.c.l.b16 %v931
        %v1070 = vunpack.c.h.b16 %v931
        %v1071 = vunpack.c.l.b16 %v932
        %v1072 = vunpack.c.h.b16 %v932
        %v1073 = vunpack.c.l.b16 %v933
        %v1074 = vunpack.c.h.b16 %v933
        %v1075 = vunpack.c.l.b16 %v934
        %v1076 = vunpack.c.h.b16 %v934
        %v1077 = vunpack.c.l.b16 %v935
        %v1078 = vunpack.c.h.b16 %v935
        %v1079 = vunpack.c.l.b16 %v936
        %v1080 = vunpack.c.h.b16 %v936
        %v1081 = vunpack.c.l.b16 %v937
        %v1082 = vunpack.c.h.b16 %v937
        %v1083 = vunpack.c.l.b16 %v938
        %v1084 = vunpack.c.h.b16 %v938
        %v1085 = vunpack.c.l.b16 %v939
        %v1086 = vunpack.c.h.b16 %v939
        %v1087 = vunpack.c.l.b16 %v940
        %v1088 = vunpack.c.h.b16 %v940
        %v1089 = vunpack.c.l.b16 %v941
        %v1090 = vunpack.c.h.b16 %v941
        %v1091 = vunpack.c.l.b16 %v942
        %v1092 = vunpack.c.h.b16 %v942
        %v1093 = vunpack.c.l.b16 %v943
        %v1094 = vunpack.c.h.b16 %v943
        %v1095 = vunpack.c.l.b16 %v944
        %v1096 = vunpack.c.h.b16 %v944
        %v1097 = vunpack.c.l.b16 %v945
        %v1098 = vunpack.c.h.b16 %v945
        %v1099 = vunpack.c.l.b16 %v946
        %v1100 = vunpack.c.h.b16 %v946
        %v1101 = vunpack.c.l.b16 %v947
        %v1102 = vunpack.c.h.b16 %v947
        %v1103 = vunpack.c.l.b16 %v948
        %v1104 = vunpack.c.h.b16 %v948
        %v1105 = vunpack.c.l.b16 %v949
        %v1106 = vunpack.c.h.b16 %v949
        %v1107 = vunpack.c.l.b16 %v950
        %v1108 = vunpack.c.h.b16 %v950
        %v1109 = vunpack.c.l.b16 %v951
        %v1110 = vunpack.c.h.b16 %v951
        %v1111 = vunpack.c.l.b16 %v952
        %v1112 = vunpack.c.h.b16 %v952
        %v1113 = vunpack.c.l.b16 %v953
        %v1114 = vunpack.c.h.b16 %v953
        %v1115 = vunpack.c.l.b16 %v954
        %v1116 = vunpack.c.h.b16 %v954
        %v1117 = vunpack.c.l.b16 %v955
        %v1118 = vunpack.c.h.b16 %v955
        %v1119 = vunpack.c.l.b16 %v956
        %v1120 = vunpack.c.h.b16 %v956
        %v1121 = vunpack.c.l.b16 %v957
        %v1122 = vunpack.c.h.b16 %v957
        %v1123 = vunpack.c.l.b16 %v958
        %v1124 = vunpack.c.h.b16 %v958
        %v1125 = vunpack.c.l.b16 %v959
        %v1126 = vunpack.c.h.b16 %v959
        %v1127 = vunpack.c.l.b16 %v960
        %v1128 = vunpack.c.h.b16 %v960
        %v1129 = vunpack.c.l.b16 %v961
        %v1130 = vunpack.c.h.b16 %v961
        %v1131 = vunpack.c.l.b16 %v962
        %v1132 = vunpack.c.h.b16 %v962
        %v1133 = vunpack.c.l.b16 %v963
        %v1134 = vunpack.c.h.b16 %v963
        %v1135 = vunpack.c.l.b16 %v964
        %v1136 = vunpack.c.h.b16 %v964
        %v1137 = vunpack.c.l.b16 %v965
        %v1138 = vunpack.c.h.b16 %v965
        %v1139 = vunpack.c.l.b16 %v966
        %v1140 = vunpack.c.h.b16 %v966
        %v1141 = vunpack.c.l.b16 %v967
        %v1142 = vunpack.c.h.b16 %v967
        %v1143 = vunpack.c.l.b16 %v968
        %v1144 = vunpack.c.h.b16 %v968
        %v1145 = vunpack.c.l.b16 %v969
        %v1146 = vunpack.c.h.b16 %v969
        %v1147 = vunpack.c.l.b16 %v970
        %v1148 = vunpack.c.h.b16 %v970
        %v1149 = vunpack.c.l.b16 %v971
        %v1150 = vunpack.c.h.b16 %v971
        %v1151 = vunpack.c.l.b16 %v972
        %v1152 = vunpack.c.h.b16 %v972
        %v1153 = vunpack.c.l.b16 %v973
        %v1154 = vunpack.c.h.b16 %v973
        %v1155 = vunpack.c.l.b16 %v974
        %v1156 = vunpack.c.h.b16 %v974
        %v1157 = vunpack.c.l.b16 %v975
        %v1158 = vunpack.c.h.b16 %v975
        %v1159 = vunpack.c.l.b16 %v976
        %v1160 = vunpack.c.h.b16 %v976
        %v1161 = vunpack.c.l.b16 %v977
        %v1162 = vunpack.c.h.b16 %v977
        %v1163 = vunpack.c.l.b16 %v978
        %v1164 = vunpack.c.h.b16 %v978
        %v1165 = vunpack.c.l.b16 %v979
        %v1166 = vunpack.c.h.b16 %v979
        %v1167 = vunpack.c.l.b16 %v980
        %v1168 = vunpack.c.h.b16 %v980
        %v1169 = vunpack.c.l.b16 %v981
        %v1170 = vunpack.c.h.b16 %v981
        %v1171 = vunpack.c.l.b16 %v982
        %v1172 = vunpack.c.h.b16 %v982
        %v1173 = vunpack.c.l.b16 %v983
        %v1174 = vunpack.c.h.b16 %v983
        %v1175 = vunpack.c.l.b16 %v984
        %v1176 = vunpack.c.h.b16 %v984
        %v1177 = vpack.c.b16 %v1053, %v1049
        %v1178 = vpack.c.b16 %v1054, %v1050
        %v1179 = vpack.c.b16 %v1055, %v1051
        %v1180 = vpack.c.b16 %v1056, %v1052
        %v1181 = vpack.c.b16 %v1061, %v1057
        %v1182 = vpack.c.b16 %v1062, %v1058
        %v1183 = vpack.c.b16 %v1063, %v1059
        %v1184 = vpack.c.b16 %v1064, %v1060
        %v1185 = vpack.c.b16 %v1069, %v1065
        %v1186 = vpack.c.b16 %v1070, %v1066
        %v1187 = vpack.c.b16 %v1071, %v1067
        %v1188 = vpack.c.b16 %v1072, %v1068
        %v1189 = vpack.c.b16 %v1077, %v1073
        %v1190 = vpack.c.b16 %v1078, %v1074
        %v1191 = vpack.c.b16 %v1079, %v1075
        %v1192 = vpack.c.b16 %v1080, %v1076
        %v1193 = vpack.c.b16 %v1085, %v1081
        %v1194 = vpack.c.b16 %v1086, %v1082
        %v1195 = vpack.c.b16 %v1087, %v1083
        %v1196 = vpack.c.b16 %v1088, %v1084
        %v1197 = vpack.c.b16 %v1093, %v1089
        %v1198 = vpack.c.b16 %v1094, %v1090
        %v1199 = vpack.c.b16 %v1095, %v1091
        %v1200 = vpack.c.b16 %v1096, %v1092
        %v1201 = vpack.c.b16 %v1101, %v1097
        %v1202 = vpack.c.b16 %v1102, %v1098
        %v1203 = vpack.c.b16 %v1103, %v1099
        %v1204 = vpack.c.b16 %v1104, %v1100
        %v1205 = vpack.c.b16 %v1109, %v1105
        %v1206 = vpack.c.b16 %v1110, %v1106
        %v1207 = vpack.c.b16 %v1111, %v1107
        %v1208 = vpack.c.b16 %v1112, %v1108
        %v1209 = vpack.c.b16 %v1117, %v1113
        %v1210 = vpack.c.b16 %v1118, %v1114
        %v1211 = vpack.c.b16 %v1119, %v1115
        %v1212 = vpack.c.b16 %v1120, %v1116
        %v1213 = vpack.c.b16 %v1125, %v1121
        %v1214 = vpack.c.b16 %v1126, %v1122
        %v1215 = vpack.c.b16 %v1127, %v1123
        %v1216 = vpack.c.b16 %v1128, %v1124
        %v1217 = vpack.c.b16 %v1133, %v1129
        %v1218 = vpack.c.b16 %v1134, %v1130
        %v1219 = vpack.c.b16 %v1135, %v1131
        %v1220 = vpack.c.b16 %v1136, %v1132
        %v1221 = vpack.c.b16 %v1141, %v1137
        %v1222 = vpack.c.b16 %v1142, %v1138
        %v1223 = vpack.c.b16 %v1143, %v1139
        %v1224 = vpack.c.b16 %v1144, %v1140
        %v1225 = vpack.c.b16 %v1149, %v1145
        %v1226 = vpack.c.b16 %v1150, %v1146
        %v1227 = vpack.c.b16 %v1151, %v1147
        %v1228 = vpack.c.b16 %v1152, %v1148
        %v1229 = vpack.c.b16 %v1157, %v1153
        %v1230 = vpack.c.b16 %v1158, %v1154
        %v1231 = vpack.c.b16 %v1159, %v1155
        %v1232 = vpack.c.b16 %v1160, %v1156
        %v1233 = vpack.c.b16 %v1165, %v1161
        %v1234 = vpack.c.b16 %v1166, %v1162
        %v1235 = vpack.c.b16 %v1167, %v1163
        %v1236 = vpack.c.b16 %v1168, %v1164
        %v1237 = vpack.c.b16 %v1173, %v1169
        %v1238 = vpack.c.b16 %v1174, %v1170
        %v1239 = vpack.c.b16 %v1175, %v1171
        %v1240 = vpack.c.b16 %v1176, %v1172
        %1305 = vmatprep.subr.bf16.mxu0 %v1178
        %1306 = vmatpush1.bf16.msra.mxu0 %v1177
        %1307 = vmatprep.subr.bf16.mxu0 %v1182
        %1308 = vmatpush1.bf16.msra.mxu0 %v1181
        %1309 = vmatprep.subr.bf16.mxu0 %v1186
        %1310 = vmatpush1.bf16.msra.mxu0 %v1185
        %1311 = vmatprep.subr.bf16.mxu0 %v1190
        %1312 = vmatpush1.bf16.msra.mxu0 %v1189
        %1313 = vmatprep.subr.bf16.mxu0 %v1194
        %1314 = vmatpush1.bf16.msra.mxu0 %v1193
        %1315 = vmatprep.subr.bf16.mxu0 %v1198
        %1316 = vmatpush1.bf16.msra.mxu0 %v1197
        %1317 = vmatprep.subr.bf16.mxu0 %v1202
        %1318 = vmatpush1.bf16.msra.mxu0 %v1201
        %1319 = vmatprep.subr.bf16.mxu0 %v1206
        %1320 = vmatpush1.bf16.msra.mxu0 %v1205
        %1321 = vmatprep.subr.bf16.mxu0 %v1210
        %1322 = vmatpush1.bf16.msra.mxu0 %v1209
        %1323 = vmatprep.subr.bf16.mxu0 %v1214
        %1324 = vmatpush1.bf16.msra.mxu0 %v1213
        %1325 = vmatprep.subr.bf16.mxu0 %v1218
        %1326 = vmatpush1.bf16.msra.mxu0 %v1217
        %1327 = vmatprep.subr.bf16.mxu0 %v1222
        %1328 = vmatpush1.bf16.msra.mxu0 %v1221
        %1329 = vmatprep.subr.bf16.mxu0 %v1226
        %1330 = vmatpush1.bf16.msra.mxu0 %v1225
        %1331 = vmatprep.subr.bf16.mxu0 %v1230
        %1332 = vmatpush1.bf16.msra.mxu0 %v1229
        %1333 = vmatprep.subr.bf16.mxu0 %v1234
        %1334 = vmatpush1.bf16.msra.mxu0 %v1233
        %1335 = vmatprep.subr.bf16.mxu0 %v1238
        %1336 = vmatpush1.bf16.msra.mxu0 %v1237
        %1337 = vmatprep.mubr.bf16.mxu0 %v920
        %1338 = vmatmul.mubr.bf16.gmra.mrb[0].mxu0 %v919
        %v1339 = vpop.f32.mrb[0].mxu0
        %v1340 = vadd.f32 0.0, %v1339
        %v1341 = vpop.f32.mrb[0].mxu0
        %v1342 = vadd.f32 0.0, %v1341
        %v1343 = vpop.f32.mrb[0].mxu0
        %v1344 = vpop.f32.mrb[0].mxu0
        %1345 = vdwg.mxu0
        %1346 = vmatprep.subr.bf16.mxu0 %v1180
        %1347 = vmatpush1.bf16.msra.mxu0 %v1179
        %1348 = vmatprep.subr.bf16.mxu0 %v1184
        %1349 = vmatpush1.bf16.msra.mxu0 %v1183
        %1350 = vmatprep.subr.bf16.mxu0 %v1188
        %1351 = vmatpush1.bf16.msra.mxu0 %v1187
        %1352 = vmatprep.subr.bf16.mxu0 %v1192
        %1353 = vmatpush1.bf16.msra.mxu0 %v1191
        %1354 = vmatprep.subr.bf16.mxu0 %v1196
        %1355 = vmatpush1.bf16.msra.mxu0 %v1195
        %1356 = vmatprep.subr.bf16.mxu0 %v1200
        %1357 = vmatpush1.bf16.msra.mxu0 %v1199
        %1358 = vmatprep.subr.bf16.mxu0 %v1204
        %1359 = vmatpush1.bf16.msra.mxu0 %v1203
        %1360 = vmatprep.subr.bf16.mxu0 %v1208
        %1361 = vmatpush1.bf16.msra.mxu0 %v1207
        %1362 = vmatprep.subr.bf16.mxu0 %v1212
        %1363 = vmatpush1.bf16.msra.mxu0 %v1211
        %1364 = vmatprep.subr.bf16.mxu0 %v1216
        %1365 = vmatpush1.bf16.msra.mxu0 %v1215
        %1366 = vmatprep.subr.bf16.mxu0 %v1220
        %1367 = vmatpush1.bf16.msra.mxu0 %v1219
        %1368 = vmatprep.subr.bf16.mxu0 %v1224
        %1369 = vmatpush1.bf16.msra.mxu0 %v1223
        %1370 = vmatprep.subr.bf16.mxu0 %v1228
        %1371 = vmatpush1.bf16.msra.mxu0 %v1227
        %1372 = vmatprep.subr.bf16.mxu0 %v1232
        %1373 = vmatpush1.bf16.msra.mxu0 %v1231
        %1374 = vmatprep.subr.bf16.mxu0 %v1236
        %1375 = vmatpush1.bf16.msra.mxu0 %v1235
        %1376 = vmatprep.subr.bf16.mxu0 %v1240
        %1377 = vmatpush1.bf16.msra.mxu0 %v1239
        %1378 = vmatprep.mubr.bf16.mxu0 %v920
        %1379 = vmatmul.mubr.bf16.gmra.mrb[0].mxu0 %v919
        %v1380 = vpop.f32.mrb[0].mxu0
        %v1381 = vadd.f32 0.0, %v1380
        %v1382 = vpop.f32.mrb[0].mxu0
        %v1383 = vadd.f32 0.0, %v1382
        %v1384 = vpop.f32.mrb[0].mxu0
        %v1385 = vpop.f32.mrb[0].mxu0
        %1386 = vdwg.mxu0
        %v1387 = vld [vmem:[#allocation15] sm:$0x1]
        %v1388 = vld [vmem:[#allocation16] sm:$0x1]
        %v1390 = vlaneseq
        %v1391 = vshrl.u32 %v1390, 7
        %v1392 = vsub.s32 0, %v1391
        %v1393 = vrot.slane %v1387, %v1392
        %v1395 = vmul.f32 %v1340, %v1393
        %v1397 = vlaneseq
        %v1398 = vshrl.u32 %v1397, 7
        %v1399 = vsub.s32 0, %v1398
        %v1400 = vrot.slane %v1388, %v1399
        %v1402 = vmul.f32 %v1342, %v1400
        %v1403 = vsub.f32 %v1395, %v1402
        %v1404 = vmul.f32 %v1340, %v1400
        %v1405 = vmul.f32 %v1342, %v1393
        %v1406 = vadd.f32 %v1404, %v1405
        %v1407 = vmul.f32 %v1381, %v1393
        %1408 = vrot.lane.b32.xlu0 %v1400, 64
        %v1409 = vpop.permute.xlu0 %1408
        %v1411 = vmul.f32 %v1381, %v1409
        %1413 = vrot.lane.b32.xlu0 %v1411, 64
        %v1414 = vpop.permute.xlu0 %1413
        %v1416 = vsub.f32 %v1407, %v1414
        %v1417 = vmul.f32 %v1381, %v1400
        %1418 = vrot.lane.b32.xlu0 %v1393, 64
        %v1419 = vpop.permute.xlu0 %1418
        %v1421 = vmul.f32 %v1381, %v1419
        %1423 = vrot.lane.b32.xlu0 %v1421, 64
        %v1424 = vpop.permute.xlu0 %1423
        %v1426 = vadd.f32 %v1417, %v1424
        %1428 = vrot.lane.b32.xlu0 %v1426, 64
        %v1429 = vpop.permute.xlu0 %1428
        %vm1431 = vcmask 523264
        %v1432 = vsel %vm1431, %v1416, %v1429
        %v1433 = vpack.c.bf16 %v1432, %v1432
        %1434 = vst [vmem:[%s836] sm:$0x1] %v1433
        %v1435 = vpack.c.bf16 %v1383, %v1383
        %1436 = vst [vmem:[%s845] sm:$0x1] %v1435
        %v1437 = vld [vmem:[%s824] sm:$0x1]
        %v1438 = vld [vmem:[%s824 + $0x1] sm:$0x1]
        %v1439 = vld [vmem:[%s824 + $0x2] sm:$0x1]
        %v1440 = vld [vmem:[%s824 + $0x3] sm:$0x1]
        %v1441 = vld [vmem:[%s824 + $0x4] sm:$0x1]
        %v1442 = vld [vmem:[%s824 + $0x5] sm:$0x1]
        %v1443 = vld [vmem:[%s824 + $0x6] sm:$0x1]
        %v1444 = vld [vmem:[%s824 + $0x7] sm:$0x1]
        %v1445 = vld [vmem:[%s824 + $0x8] sm:$0x1]
        %v1446 = vld [vmem:[%s824 + $0x9] sm:$0x1]
        %v1447 = vld [vmem:[%s824 + $0xa] sm:$0x1]
        %v1448 = vld [vmem:[%s824 + $0xb] sm:$0x1]
        %v1449 = vld [vmem:[%s824 + $0xc] sm:$0x1]
        %v1450 = vld [vmem:[%s824 + $0xd] sm:$0x1]
        %v1451 = vld [vmem:[%s824 + $0xe] sm:$0x1]
        %v1452 = vld [vmem:[%s824 + $0xf] sm:$0x1]
        %v1453 = vld [vmem:[%s828] sm:$0x1]
        %v1454 = vld [vmem:[%s828 + $0x1] sm:$0x1]
        %v1455 = vld [vmem:[%s828 + $0x2] sm:$0x1]
        %v1456 = vld [vmem:[%s828 + $0x3] sm:$0x1]
        %v1457 = vld [vmem:[%s828 + $0x4] sm:$0x1]
        %v1458 = vld [vmem:[%s828 + $0x5] sm:$0x1]
        %v1459 = vld [vmem:[%s828 + $0x6] sm:$0x1]
        %v1460 = vld [vmem:[%s828 + $0x7] sm:$0x1]
        %v1461 = vld [vmem:[%s828 + $0x8] sm:$0x1]
        %v1462 = vld [vmem:[%s828 + $0x9] sm:$0x1]
        %v1463 = vld [vmem:[%s828 + $0xa] sm:$0x1]
        %v1464 = vld [vmem:[%s828 + $0xb] sm:$0x1]
        %v1465 = vld [vmem:[%s828 + $0xc] sm:$0x1]
        %v1466 = vld [vmem:[%s828 + $0xd] sm:$0x1]
        %v1467 = vld [vmem:[%s828 + $0xe] sm:$0x1]
        %v1468 = vld [vmem:[%s828 + $0xf] sm:$0x1]
        %v1469 = vlaneseq
        %v1470 = vand.u32 %v1469, 127
        %v1471 = vstv %s848
        %vm1472 = vcmp.lt.s32.totalorder %v1470, %v1471
        %v1473 = vunpack.c.l.bf16 %v1437
        %v1474 = vunpack.c.l.bf16 %v1438
        %v1475 = vunpack.c.l.bf16 %v1439
        %v1476 = vunpack.c.l.bf16 %v1440
        %v1477 = vunpack.c.l.bf16 %v1441
        %v1478 = vunpack.c.l.bf16 %v1442
        %v1479 = vunpack.c.l.bf16 %v1443
        %v1480 = vunpack.c.l.bf16 %v1444
        %v1481 = vunpack.c.l.bf16 %v1445
        %v1482 = vunpack.c.l.bf16 %v1446
        %v1483 = vunpack.c.l.bf16 %v1447
        %v1484 = vunpack.c.l.bf16 %v1448
        %v1485 = vunpack.c.l.bf16 %v1449
        %v1486 = vunpack.c.l.bf16 %v1450
        %v1487 = vunpack.c.l.bf16 %v1451
        %v1488 = vunpack.c.l.bf16 %v1452
        %v1490 = vrot.slane %v1403, 7
        %1491 = vrot.lane.b32.xlu0 %v1490, 96
        %v1492 = vpop.permute.xlu0 %1491
        %vm1494 = vcmask 1040384
        %v1495 = vsel %vm1494, %v1403, %v1492
        %v1497 = vrot.slane %v1406, 7
        %1498 = vrot.lane.b32.xlu0 %v1497, 96
        %v1499 = vpop.permute.xlu0 %1498
        %v1501 = vsel %vm1494, %v1406, %v1499
        %v1518 = vlaneseq
        %v1519 = vshrl.u32 %v1518, 7
        %v1520 = vsub.s32 0, %v1519
        %v1521 = vrot.slane %v1473, %v1520
        %v1522 = vlaneseq
        %v1523 = vshrl.u32 %v1522, 7
        %v1524 = vsub.s32 0, %v1523
        %v1525 = vrot.slane %v1474, %v1524
        %v1526 = vlaneseq
        %v1527 = vshrl.u32 %v1526, 7
        %v1528 = vsub.s32 0, %v1527
        %v1529 = vrot.slane %v1475, %v1528
        %v1530 = vlaneseq
        %v1531 = vshrl.u32 %v1530, 7
        %v1532 = vsub.s32 0, %v1531
        %v1533 = vrot.slane %v1476, %v1532
        %v1534 = vlaneseq
        %v1535 = vshrl.u32 %v1534, 7
        %v1536 = vsub.s32 0, %v1535
        %v1537 = vrot.slane %v1477, %v1536
        %v1538 = vlaneseq
        %v1539 = vshrl.u32 %v1538, 7
        %v1540 = vsub.s32 0, %v1539
        %v1541 = vrot.slane %v1478, %v1540
        %v1542 = vlaneseq
        %v1543 = vshrl.u32 %v1542, 7
        %v1544 = vsub.s32 0, %v1543
        %v1545 = vrot.slane %v1479, %v1544
        %v1546 = vlaneseq
        %v1547 = vshrl.u32 %v1546, 7
        %v1548 = vsub.s32 0, %v1547
        %v1549 = vrot.slane %v1480, %v1548
        %v1550 = vlaneseq
        %v1551 = vshrl.u32 %v1550, 7
        %v1552 = vsub.s32 0, %v1551
        %v1553 = vrot.slane %v1481, %v1552
        %v1554 = vlaneseq
        %v1555 = vshrl.u32 %v1554, 7
        %v1556 = vsub.s32 0, %v1555
        %v1557 = vrot.slane %v1482, %v1556
        %v1558 = vlaneseq
        %v1559 = vshrl.u32 %v1558, 7
        %v1560 = vsub.s32 0, %v1559
        %v1561 = vrot.slane %v1483, %v1560
        %v1562 = vlaneseq
        %v1563 = vshrl.u32 %v1562, 7
        %v1564 = vsub.s32 0, %v1563
        %v1565 = vrot.slane %v1484, %v1564
        %v1566 = vlaneseq
        %v1567 = vshrl.u32 %v1566, 7
        %v1568 = vsub.s32 0, %v1567
        %v1569 = vrot.slane %v1485, %v1568
        %v1570 = vlaneseq
        %v1571 = vshrl.u32 %v1570, 7
        %v1572 = vsub.s32 0, %v1571
        %v1573 = vrot.slane %v1486, %v1572
        %v1574 = vlaneseq
        %v1575 = vshrl.u32 %v1574, 7
        %v1576 = vsub.s32 0, %v1575
        %v1577 = vrot.slane %v1487, %v1576
        %v1578 = vlaneseq
        %v1579 = vshrl.u32 %v1578, 7
        %v1580 = vsub.s32 0, %v1579
        %v1581 = vrot.slane %v1488, %v1580
        %vm1582 = vcmask 1041409
        %v1583 = vsel %vm1582, %v1525, %v1521
        %vm1584 = vcmask 1042434
        %v1585 = vsel %vm1584, %v1529, %v1583
        %vm1586 = vcmask 1043459
        %v1587 = vsel %vm1586, %v1533, %v1585
        %vm1588 = vcmask 1044484
        %v1589 = vsel %vm1588, %v1537, %v1587
        %vm1590 = vcmask 1045509
        %v1591 = vsel %vm1590, %v1541, %v1589
        %vm1592 = vcmask 1046534
        %v1593 = vsel %vm1592, %v1545, %v1591
        %vm1594 = vcmask 1047559
        %v1595 = vsel %vm1594, %v1549, %v1593
        %v1596 = vsel %vm1582, %v1557, %v1553
        %v1597 = vsel %vm1584, %v1561, %v1596
        %v1598 = vsel %vm1586, %v1565, %v1597
        %v1599 = vsel %vm1588, %v1569, %v1598
        %v1600 = vsel %vm1590, %v1573, %v1599
        %v1601 = vsel %vm1592, %v1577, %v1600
        %v1602 = vsel %vm1594, %v1581, %v1601
        %1603 = vrot.lane.b32.xlu0 %v1595, 64
        %v1604 = vpop.permute.xlu0 %1603
        %1605 = vrot.lane.b32.xlu0 %v1602, 64
        %v1606 = vpop.permute.xlu0 %1605
        %vm1607 = vcmask 261120
        %v1609 = vsel %vm1607, %v1501, 0
        %v1611 = vsel %vm1607, %v1604, 0
        %v1613 = vsel %vm1607, %v1606, 0
        %1615 = vmatprep.subr.mxu0 0.0
        %1616 = vmatpush1.xpose.msra.mxu0 %v1611
        %1617 = vmatprep.subr.mxu0 0.0
        %1618 = vmatpush1.xpose.msra.mxu0 %v1613
        %1619 = vmatprep.subr.mxu0 0.0
        %1620 = vmatpush1.xpose.msra.mxu0 0.0
        %1621 = vmatprep.subr.mxu0 0.0
        %1622 = vmatpush1.xpose.msra.mxu0 0.0
        %1623 = vmatprep.subr.mxu0 0.0
        %1624 = vmatpush1.xpose.msra.mxu0 0.0
        %1625 = vmatprep.subr.mxu0 0.0
        %1626 = vmatpush1.xpose.msra.mxu0 0.0
        %1627 = vmatprep.subr.mxu0 0.0
        %1628 = vmatpush1.xpose.msra.mxu0 0.0
        %1629 = vmatprep.subr.mxu0 0.0
        %1630 = vmatpush1.xpose.msra.mxu0 0.0
        %1631 = vmatprep.subr.mxu0 0.0
        %1632 = vmatpush1.xpose.msra.mxu0 0.0
        %1633 = vmatprep.subr.mxu0 0.0
        %1634 = vmatpush1.xpose.msra.mxu0 0.0
        %1635 = vmatprep.subr.mxu0 0.0
        %1636 = vmatpush1.xpose.msra.mxu0 0.0
        %1637 = vmatprep.subr.mxu0 0.0
        %1638 = vmatpush1.xpose.msra.mxu0 0.0
        %1639 = vmatprep.subr.mxu0 0.0
        %1640 = vmatpush1.xpose.msra.mxu0 0.0
        %1641 = vmatprep.subr.mxu0 0.0
        %1642 = vmatpush1.xpose.msra.mxu0 0.0
        %1643 = vmatprep.subr.mxu0 0.0
        %1644 = vmatpush1.xpose.msra.mxu0 0.0
        %1645 = vmatprep.subr.mxu0 0.0
        %1646 = vmatpush1.xpose.msra.mxu0 0.0
        %1647 = vmatprep.subr.mxu0 0.0
        %1648 = vmatpush1.xpose.msra.mxu0 0.0
        %1649 = vmatprep.subr.mxu0 0.0
        %1650 = vmatpush1.xpose.msra.mxu0 0.0
        %1651 = vmatprep.subr.mxu0 0.0
        %1652 = vmatpush1.xpose.msra.mxu0 0.0
        %1653 = vmatprep.subr.mxu0 0.0
        %1654 = vmatpush1.xpose.msra.mxu0 0.0
        %1655 = vmatprep.subr.mxu0 0.0
        %1656 = vmatpush1.xpose.msra.mxu0 0.0
        %1657 = vmatprep.subr.mxu0 0.0
        %1658 = vmatpush1.xpose.msra.mxu0 0.0
        %1659 = vmatprep.subr.mxu0 0.0
        %1660 = vmatpush1.xpose.msra.mxu0 0.0
        %1661 = vmatprep.subr.mxu0 0.0
        %1662 = vmatpush1.xpose.msra.mxu0 0.0
        %1663 = vmatprep.subr.mxu0 0.0
        %1664 = vmatpush1.xpose.msra.mxu0 0.0
        %1665 = vmatprep.subr.mxu0 0.0
        %1666 = vmatpush1.xpose.msra.mxu0 0.0
        %1667 = vmatprep.subr.mxu0 0.0
        %1668 = vmatpush1.xpose.msra.mxu0 0.0
        %1669 = vmatprep.subr.mxu0 0.0
        %1670 = vmatpush1.xpose.msra.mxu0 0.0
        %1671 = vmatprep.subr.mxu0 0.0
        %1672 = vmatpush1.xpose.msra.mxu0 0.0
        %1673 = vmatprep.subr.mxu0 0.0
        %1674 = vmatpush1.xpose.msra.mxu0 0.0
        %1675 = vmatprep.subr.mxu0 0.0
        %1676 = vmatpush1.xpose.msra.mxu0 0.0
        %1677 = vmatprep.subr.mxu0 0.0
        %1678 = vmatpush1.xpose.msra.mxu0 0.0
        %1679 = vmatprep.mubr.f32.mxu0 0.0
        %1680 = vmatmul.mubr.f32.gmra.mrb[0].mxu0 %v1609
        %v1681 = vpop.f32.mrb[0].mxu0
        %v1682 = vadd.f32 0.0, %v1681
        %v1683 = vpop.f32.mrb[0].mxu0
        %1684 = vdwg.mxu0
        %v1686 = vsel %vm1607, %v1495, 0
        %v1688 = vsel %vm1607, %v1595, 0
        %v1690 = vsel %vm1607, %v1602, 0
        %1692 = vmatprep.subr.mxu0 0.0
        %1693 = vmatpush1.xpose.msra.mxu0 %v1688
        %1694 = vmatprep.subr.mxu0 0.0
        %1695 = vmatpush1.xpose.msra.mxu0 %v1690
        %1696 = vmatprep.subr.mxu0 0.0
        %1697 = vmatpush1.xpose.msra.mxu0 0.0
        %1698 = vmatprep.subr.mxu0 0.0
        %1699 = vmatpush1.xpose.msra.mxu0 0.0
        %1700 = vmatprep.subr.mxu0 0.0
        %1701 = vmatpush1.xpose.msra.mxu0 0.0
        %1702 = vmatprep.subr.mxu0 0.0
        %1703 = vmatpush1.xpose.msra.mxu0 0.0
        %1704 = vmatprep.subr.mxu0 0.0
        %1705 = vmatpush1.xpose.msra.mxu0 0.0
        %1706 = vmatprep.subr.mxu0 0.0
        %1707 = vmatpush1.xpose.msra.mxu0 0.0
        %1708 = vmatprep.subr.mxu0 0.0
        %1709 = vmatpush1.xpose.msra.mxu0 0.0
        %1710 = vmatprep.subr.mxu0 0.0
        %1711 = vmatpush1.xpose.msra.mxu0 0.0
        %1712 = vmatprep.subr.mxu0 0.0
        %1713 = vmatpush1.xpose.msra.mxu0 0.0
        %1714 = vmatprep.subr.mxu0 0.0
        %1715 = vmatpush1.xpose.msra.mxu0 0.0
        %1716 = vmatprep.subr.mxu0 0.0
        %1717 = vmatpush1.xpose.msra.mxu0 0.0
        %1718 = vmatprep.subr.mxu0 0.0
        %1719 = vmatpush1.xpose.msra.mxu0 0.0
        %1720 = vmatprep.subr.mxu0 0.0
        %1721 = vmatpush1.xpose.msra.mxu0 0.0
        %1722 = vmatprep.subr.mxu0 0.0
        %1723 = vmatpush1.xpose.msra.mxu0 0.0
        %1724 = vmatprep.subr.mxu0 0.0
        %1725 = vmatpush1.xpose.msra.mxu0 0.0
        %1726 = vmatprep.subr.mxu0 0.0
        %1727 = vmatpush1.xpose.msra.mxu0 0.0
        %1728 = vmatprep.subr.mxu0 0.0
        %1729 = vmatpush1.xpose.msra.mxu0 0.0
        %1730 = vmatprep.subr.mxu0 0.0
        %1731 = vmatpush1.xpose.msra.mxu0 0.0
        %1732 = vmatprep.subr.mxu0 0.0
        %1733 = vmatpush1.xpose.msra.mxu0 0.0
        %1734 = vmatprep.subr.mxu0 0.0
        %1735 = vmatpush1.xpose.msra.mxu0 0.0
        %1736 = vmatprep.subr.mxu0 0.0
        %1737 = vmatpush1.xpose.msra.mxu0 0.0
        %1738 = vmatprep.subr.mxu0 0.0
        %1739 = vmatpush1.xpose.msra.mxu0 0.0
        %1740 = vmatprep.subr.mxu0 0.0
        %1741 = vmatpush1.xpose.msra.mxu0 0.0
        %1742 = vmatprep.subr.mxu0 0.0
        %1743 = vmatpush1.xpose.msra.mxu0 0.0
        %1744 = vmatprep.subr.mxu0 0.0
        %1745 = vmatpush1.xpose.msra.mxu0 0.0
        %1746 = vmatprep.subr.mxu0 0.0
        %1747 = vmatpush1.xpose.msra.mxu0 0.0
        %1748 = vmatprep.subr.mxu0 0.0
        %1749 = vmatpush1.xpose.msra.mxu0 0.0
        %1750 = vmatprep.subr.mxu0 0.0
        %1751 = vmatpush1.xpose.msra.mxu0 0.0
        %1752 = vmatprep.subr.mxu0 0.0
        %1753 = vmatpush1.xpose.msra.mxu0 0.0
        %1754 = vmatprep.subr.mxu0 0.0
        %1755 = vmatpush1.xpose.msra.mxu0 0.0
        %1756 = vmatprep.mubr.f32.mxu0 0.0
        %1757 = vmatmul.mubr.f32.gmra.mrb[0].mxu0 %v1686
        %v1758 = vpop.f32.mrb[0].mxu0
        %v1759 = vadd.f32 %v1682, %v1758
        %v1760 = vpop.f32.mrb[0].mxu0
        %1761 = vdwg.mxu0
        %v1762 = vmul.f32 %v1759, 0.125
        %v1763 = vsel %vm1472, 1, 0
        %vm1764 = vcmp.eq.s32.totalorder %v1763, 1
        %v1765 = vsel %vm1764, %v1762, -1e+30
        %v1766 = vlaneseq
        %v1767 = vshrl.u32 %v1766, 7
        %v1768 = vsub.s32 0, %v1767
        %v1769 = vrot.slane %v1426, %v1768
        %v1770 = vmul.f32 %v1501, %v1769
        %vm1771 = vcmask 254976
        %v1772 = vsel %vm1771, %v1770, 0.0
        %1773 = vadd.xlane.f32.xlu0 %v1772
        %v1774 = vpop.xlane.xlu0 %1773
        %v1775 = vlaneseq
        %v1776 = vshrl.u32 %v1775, 7
        %v1777 = vsub.s32 0, %v1776
        %v1778 = vrot.slane %v1416, %v1777
        %v1779 = vmul.f32 %v1495, %v1778
        %v1780 = vsel %vm1771, %v1779, 0.0
        %1781 = vadd.xlane.f32.xlu0 %v1780
        %v1782 = vpop.xlane.xlu0 %1781
        %v1783 = vadd.f32 %v1782, %v1774
        %v1784 = vmul.f32 %v1783, 0.125
        %vm1785 = vcmask 130048
        %v1786 = vsel %vm1785, %v1765, %v1784
        %vm1787 = vcmask 132096
        %v1788 = vsel %vm1787, %v1786, -inf
        %1789 = vmax.xlane.f32.xlu0 %v1788
        %v1790 = vpop.xlane.xlu0 %1789
        %v1791 = vsub.f32 %v1786, %v1790
        %v1792 = vmul.f32 %v1791, 1.442695
        %v1793 = vpow.pop %v1792
        %v1794 = vsel %vm1787, %v1793, 0.0
        %1795 = vadd.xlane.f32.xlu0 %v1794
        %v1796 = vpop.xlane.xlu0 %1795
        %v1797 = vrcp.pop %v1796
        %v1798 = vmul.f32 %v1793, %v1797
        %v1799 = vpack.c.bf16 %v1798, %v1798
        %1801 = vset.pattern.permute.xlu0 16
        %1802 = vperm.xlu0 %1801, %v1798
        %v1803 = vpop.permute.xlu0 %1802
        %v1805 = vlaneseq
        %v1806 = vshrl.u32 %v1805, 7
        %v1807 = vsub.s32 0, %v1806
        %v1808 = vrot.slane %v1383, %v1807
        %v1809 = vmul.f32 %v1803, %v1808
        %v1827 = vunpack.c.l.s4 1966171168
        %v1828 = vunpack.c.0.s8 %v1827
        %v1829 = vlaneseq
        %v1830 = vshrl.u32 %v1829, 7
        %v1831 = vsub.s32 %v1828, %v1830
        %v1832 = vrot.slane %v1453, %v1831
        %v1834 = vunpack.c.l.s4 1966171168
        %v1835 = vunpack.c.0.s8 %v1834
        %v1836 = vlaneseq
        %v1837 = vshrl.u32 %v1836, 7
        %v1838 = vsub.s32 %v1835, %v1837
        %v1839 = vrot.slane %v1832, %v1838
        %v1841 = vunpack.c.l.s4 1966171168
        %v1842 = vunpack.c.0.s8 %v1841
        %v1843 = vlaneseq
        %v1844 = vshrl.u32 %v1843, 7
        %v1845 = vsub.s32 %v1842, %v1844
        %v1846 = vrot.slane %v1454, %v1845
        %v1848 = vunpack.c.l.s4 1966171168
        %v1849 = vunpack.c.0.s8 %v1848
        %v1850 = vlaneseq
        %v1851 = vshrl.u32 %v1850, 7
        %v1852 = vsub.s32 %v1849, %v1851
        %v1853 = vrot.slane %v1846, %v1852
        %v1855 = vunpack.c.l.s4 1966171168
        %v1856 = vunpack.c.0.s8 %v1855
        %v1857 = vlaneseq
        %v1858 = vshrl.u32 %v1857, 7
        %v1859 = vsub.s32 %v1856, %v1858
        %v1860 = vrot.slane %v1455, %v1859
        %v1862 = vunpack.c.l.s4 1966171168
        %v1863 = vunpack.c.0.s8 %v1862
        %v1864 = vlaneseq
        %v1865 = vshrl.u32 %v1864, 7
        %v1866 = vsub.s32 %v1863, %v1865
        %v1867 = vrot.slane %v1860, %v1866
        %v1869 = vunpack.c.l.s4 1966171168
        %v1870 = vunpack.c.0.s8 %v1869
        %v1871 = vlaneseq
        %v1872 = vshrl.u32 %v1871, 7
        %v1873 = vsub.s32 %v1870, %v1872
        %v1874 = vrot.slane %v1456, %v1873
        %v1876 = vunpack.c.l.s4 1966171168
        %v1877 = vunpack.c.0.s8 %v1876
        %v1878 = vlaneseq
        %v1879 = vshrl.u32 %v1878, 7
        %v1880 = vsub.s32 %v1877, %v1879
        %v1881 = vrot.slane %v1874, %v1880
        %v1883 = vunpack.c.l.s4 1966171168
        %v1884 = vunpack.c.0.s8 %v1883
        %v1885 = vlaneseq
        %v1886 = vshrl.u32 %v1885, 7
        %v1887 = vsub.s32 %v1884, %v1886
        %v1888 = vrot.slane %v1457, %v1887
        %v1890 = vunpack.c.l.s4 1966171168
        %v1891 = vunpack.c.0.s8 %v1890
        %v1892 = vlaneseq
        %v1893 = vshrl.u32 %v1892, 7
        %v1894 = vsub.s32 %v1891, %v1893
        %v1895 = vrot.slane %v1888, %v1894
        %v1897 = vunpack.c.l.s4 1966171168
        %v1898 = vunpack.c.0.s8 %v1897
        %v1899 = vlaneseq
        %v1900 = vshrl.u32 %v1899, 7
        %v1901 = vsub.s32 %v1898, %v1900
        %v1902 = vrot.slane %v1458, %v1901
        %v1904 = vunpack.c.l.s4 1966171168
        %v1905 = vunpack.c.0.s8 %v1904
        %v1906 = vlaneseq
        %v1907 = vshrl.u32 %v1906, 7
        %v1908 = vsub.s32 %v1905, %v1907
        %v1909 = vrot.slane %v1902, %v1908
        %v1911 = vunpack.c.l.s4 1966171168
        %v1912 = vunpack.c.0.s8 %v1911
        %v1913 = vlaneseq
        %v1914 = vshrl.u32 %v1913, 7
        %v1915 = vsub.s32 %v1912, %v1914
        %v1916 = vrot.slane %v1459, %v1915
        %v1918 = vunpack.c.l.s4 1966171168
        %v1919 = vunpack.c.0.s8 %v1918
        %v1920 = vlaneseq
        %v1921 = vshrl.u32 %v1920, 7
        %v1922 = vsub.s32 %v1919, %v1921
        %v1923 = vrot.slane %v1916, %v1922
        %v1925 = vunpack.c.l.s4 1966171168
        %v1926 = vunpack.c.0.s8 %v1925
        %v1927 = vlaneseq
        %v1928 = vshrl.u32 %v1927, 7
        %v1929 = vsub.s32 %v1926, %v1928
        %v1930 = vrot.slane %v1460, %v1929
        %v1932 = vunpack.c.l.s4 1966171168
        %v1933 = vunpack.c.0.s8 %v1932
        %v1934 = vlaneseq
        %v1935 = vshrl.u32 %v1934, 7
        %v1936 = vsub.s32 %v1933, %v1935
        %v1937 = vrot.slane %v1930, %v1936
        %v1939 = vunpack.c.l.s4 1966171168
        %v1940 = vunpack.c.0.s8 %v1939
        %v1941 = vlaneseq
        %v1942 = vshrl.u32 %v1941, 7
        %v1943 = vsub.s32 %v1940, %v1942
        %v1944 = vrot.slane %v1461, %v1943
        %v1946 = vunpack.c.l.s4 1966171168
        %v1947 = vunpack.c.0.s8 %v1946
        %v1948 = vlaneseq
        %v1949 = vshrl.u32 %v1948, 7
        %v1950 = vsub.s32 %v1947, %v1949
        %v1951 = vrot.slane %v1944, %v1950
        %v1953 = vunpack.c.l.s4 1966171168
        %v1954 = vunpack.c.0.s8 %v1953
        %v1955 = vlaneseq
        %v1956 = vshrl.u32 %v1955, 7
        %v1957 = vsub.s32 %v1954, %v1956
        %v1958 = vrot.slane %v1462, %v1957
        %v1960 = vunpack.c.l.s4 1966171168
        %v1961 = vunpack.c.0.s8 %v1960
        %v1962 = vlaneseq
        %v1963 = vshrl.u32 %v1962, 7
        %v1964 = vsub.s32 %v1961, %v1963
        %v1965 = vrot.slane %v1958, %v1964
        %v1967 = vunpack.c.l.s4 1966171168
        %v1968 = vunpack.c.0.s8 %v1967
        %v1969 = vlaneseq
        %v1970 = vshrl.u32 %v1969, 7
        %v1971 = vsub.s32 %v1968, %v1970
        %v1972 = vrot.slane %v1463, %v1971
        %v1974 = vunpack.c.l.s4 1966171168
        %v1975 = vunpack.c.0.s8 %v1974
        %v1976 = vlaneseq
        %v1977 = vshrl.u32 %v1976, 7
        %v1978 = vsub.s32 %v1975, %v1977
        %v1979 = vrot.slane %v1972, %v1978
        %v1981 = vunpack.c.l.s4 1966171168
        %v1982 = vunpack.c.0.s8 %v1981
        %v1983 = vlaneseq
        %v1984 = vshrl.u32 %v1983, 7
        %v1985 = vsub.s32 %v1982, %v1984
        %v1986 = vrot.slane %v1464, %v1985
        %v1988 = vunpack.c.l.s4 1966171168
        %v1989 = vunpack.c.0.s8 %v1988
        %v1990 = vlaneseq
        %v1991 = vshrl.u32 %v1990, 7
        %v1992 = vsub.s32 %v1989, %v1991
        %v1993 = vrot.slane %v1986, %v1992
        %v1995 = vunpack.c.l.s4 1966171168
        %v1996 = vunpack.c.0.s8 %v1995
        %v1997 = vlaneseq
        %v1998 = vshrl.u32 %v1997, 7
        %v1999 = vsub.s32 %v1996, %v1998
        %v2000 = vrot.slane %v1465, %v1999
        %v2002 = vunpack.c.l.s4 1966171168
        %v2003 = vunpack.c.0.s8 %v2002
        %v2004 = vlaneseq
        %v2005 = vshrl.u32 %v2004, 7
        %v2006 = vsub.s32 %v2003, %v2005
        %v2007 = vrot.slane %v2000, %v2006
        %v2009 = vunpack.c.l.s4 1966171168
        %v2010 = vunpack.c.0.s8 %v2009
        %v2011 = vlaneseq
        %v2012 = vshrl.u32 %v2011, 7
        %v2013 = vsub.s32 %v2010, %v2012
        %v2014 = vrot.slane %v1466, %v2013
        %v2016 = vunpack.c.l.s4 1966171168
        %v2017 = vunpack.c.0.s8 %v2016
        %v2018 = vlaneseq
        %v2019 = vshrl.u32 %v2018, 7
        %v2020 = vsub.s32 %v2017, %v2019
        %v2021 = vrot.slane %v2014, %v2020
        %v2023 = vunpack.c.l.s4 1966171168
        %v2024 = vunpack.c.0.s8 %v2023
        %v2025 = vlaneseq
        %v2026 = vshrl.u32 %v2025, 7
        %v2027 = vsub.s32 %v2024, %v2026
        %v2028 = vrot.slane %v1467, %v2027
        %v2030 = vunpack.c.l.s4 1966171168
        %v2031 = vunpack.c.0.s8 %v2030
        %v2032 = vlaneseq
        %v2033 = vshrl.u32 %v2032, 7
        %v2034 = vsub.s32 %v2031, %v2033
        %v2035 = vrot.slane %v2028, %v2034
        %v2037 = vunpack.c.l.s4 1966171168
        %v2038 = vunpack.c.0.s8 %v2037
        %v2039 = vlaneseq
        %v2040 = vshrl.u32 %v2039, 7
        %v2041 = vsub.s32 %v2038, %v2040
        %v2042 = vrot.slane %v1468, %v2041
        %v2044 = vunpack.c.l.s4 1966171168
        %v2045 = vunpack.c.0.s8 %v2044
        %v2046 = vlaneseq
        %v2047 = vshrl.u32 %v2046, 7
        %v2048 = vsub.s32 %v2045, %v2047
        %v2049 = vrot.slane %v2042, %v2048
        %v2050 = vunpack.c.l.b16 %v1839
        %v2051 = vunpack.c.l.b16 %v1853
        %v2052 = vunpack.c.l.b16 %v1867
        %v2053 = vunpack.c.l.b16 %v1881
        %v2054 = vunpack.c.l.b16 %v1895
        %v2055 = vunpack.c.l.b16 %v1909
        %v2056 = vunpack.c.l.b16 %v1923
        %v2057 = vunpack.c.l.b16 %v1937
        %v2058 = vunpack.c.l.b16 %v1951
        %v2059 = vunpack.c.l.b16 %v1965
        %v2060 = vunpack.c.l.b16 %v1979
        %v2061 = vunpack.c.l.b16 %v1993
        %v2062 = vunpack.c.l.b16 %v2007
        %v2063 = vunpack.c.l.b16 %v2021
        %v2064 = vunpack.c.l.b16 %v2035
        %v2065 = vunpack.c.l.b16 %v2049
        %v2066 = vrot.slane %v2051, 7
        %v2067 = vsel %vm1582, %v2066, %v2050
        %v2068 = vrot.slane %v2052, 6
        %v2069 = vsel %vm1584, %v2068, %v2067
        %v2070 = vrot.slane %v2053, 5
        %v2071 = vsel %vm1586, %v2070, %v2069
        %v2072 = vrot.slane %v2054, 4
        %v2073 = vsel %vm1588, %v2072, %v2071
        %v2074 = vrot.slane %v2055, 3
        %v2075 = vsel %vm1590, %v2074, %v2073
        %v2076 = vrot.slane %v2056, 2
        %v2077 = vsel %vm1592, %v2076, %v2075
        %v2078 = vrot.slane %v2057, 1
        %v2079 = vsel %vm1594, %v2078, %v2077
        %v2080 = vrot.slane %v2059, 7
        %v2081 = vsel %vm1582, %v2080, %v2058
        %v2082 = vrot.slane %v2060, 6
        %v2083 = vsel %vm1584, %v2082, %v2081
        %v2084 = vrot.slane %v2061, 5
        %v2085 = vsel %vm1586, %v2084, %v2083
        %v2086 = vrot.slane %v2062, 4
        %v2087 = vsel %vm1588, %v2086, %v2085
        %v2088 = vrot.slane %v2063, 3
        %v2089 = vsel %vm1590, %v2088, %v2087
        %v2090 = vrot.slane %v2064, 2
        %v2091 = vsel %vm1592, %v2090, %v2089
        %v2092 = vrot.slane %v2065, 1
        %v2093 = vsel %vm1594, %v2092, %v2091
        %v2094 = vpack.c.b16 %v2093, %v2079
        %v2097 = vsel %vm1785, %v1799, 0
        %2099 = vmatprep.subr.bf16.mxu0 0
        %2100 = vmatpush1.bf16.msra.mxu0 %v2094
        %2101 = vmatprep.subr.bf16.mxu0 0
        %2102 = vmatpush1.bf16.msra.mxu0 0
        %2103 = vmatprep.subr.bf16.mxu0 0
        %2104 = vmatpush1.bf16.msra.mxu0 0
        %2105 = vmatprep.subr.bf16.mxu0 0
        %2106 = vmatpush1.bf16.msra.mxu0 0
        %2107 = vmatprep.subr.bf16.mxu0 0
        %2108 = vmatpush1.bf16.msra.mxu0 0
        %2109 = vmatprep.subr.bf16.mxu0 0
        %2110 = vmatpush1.bf16.msra.mxu0 0
        %2111 = vmatprep.subr.bf16.mxu0 0
        %2112 = vmatpush1.bf16.msra.mxu0 0
        %2113 = vmatprep.subr.bf16.mxu0 0
        %2114 = vmatpush1.bf16.msra.mxu0 0
        %2115 = vmatprep.subr.bf16.mxu0 0
        %2116 = vmatpush1.bf16.msra.mxu0 0
        %2117 = vmatprep.subr.bf16.mxu0 0
        %2118 = vmatpush1.bf16.msra.mxu0 0
        %2119 = vmatprep.subr.bf16.mxu0 0
        %2120 = vmatpush1.bf16.msra.mxu0 0
        %2121 = vmatprep.subr.bf16.mxu0 0
        %2122 = vmatpush1.bf16.msra.mxu0 0
        %2123 = vmatprep.subr.bf16.mxu0 0
        %2124 = vmatpush1.bf16.msra.mxu0 0
        %2125 = vmatprep.subr.bf16.mxu0 0
        %2126 = vmatpush1.bf16.msra.mxu0 0
        %2127 = vmatprep.subr.bf16.mxu0 0
        %2128 = vmatpush1.bf16.msra.mxu0 0
        %2129 = vmatprep.subr.bf16.mxu0 0
        %2130 = vmatpush1.bf16.msra.mxu0 0
        %2131 = vmatprep.mubr.bf16.mxu0 0
        %2132 = vmatmul.mubr.bf16.gmra.mrb[0].mxu0 %v2097
        %v2133 = vpop.f32.mrb[0].mxu0
        %v2134 = vadd.f32 %v1809, %v2133
        %v2135 = vpop.f32.mrb[0].mxu0
        %v2136 = vpop.f32.mrb[0].mxu0
        %v2137 = vpop.f32.mrb[0].mxu0
        %2138 = vdwg.mxu0
        %2139 = vrot.lane.b32.xlu0 %v1501, 64
        %v2140 = vpop.permute.xlu0 %2139
        %2141 = vrot.lane.b32.xlu0 %v1595, 32
        %v2142 = vpop.permute.xlu0 %2141
        %2143 = vrot.lane.b32.xlu0 %v1602, 32
        %v2144 = vpop.permute.xlu0 %2143
        %v2145 = vsel %vm1607, %v2140, 0
        %v2147 = vsel %vm1607, %v2142, 0
        %v2149 = vsel %vm1607, %v2144, 0
        %2151 = vmatprep.subr.mxu0 0.0
        %2152 = vmatpush1.xpose.msra.mxu0 %v2147
        %2153 = vmatprep.subr.mxu0 0.0
        %2154 = vmatpush1.xpose.msra.mxu0 %v2149
        %2155 = vmatprep.subr.mxu0 0.0
        %2156 = vmatpush1.xpose.msra.mxu0 0.0
        %2157 = vmatprep.subr.mxu0 0.0
        %2158 = vmatpush1.xpose.msra.mxu0 0.0
        %2159 = vmatprep.subr.mxu0 0.0
        %2160 = vmatpush1.xpose.msra.mxu0 0.0
        %2161 = vmatprep.subr.mxu0 0.0
        %2162 = vmatpush1.xpose.msra.mxu0 0.0
        %2163 = vmatprep.subr.mxu0 0.0
        %2164 = vmatpush1.xpose.msra.mxu0 0.0
        %2165 = vmatprep.subr.mxu0 0.0
        %2166 = vmatpush1.xpose.msra.mxu0 0.0
        %2167 = vmatprep.subr.mxu0 0.0
        %2168 = vmatpush1.xpose.msra.mxu0 0.0
        %2169 = vmatprep.subr.mxu0 0.0
        %2170 = vmatpush1.xpose.msra.mxu0 0.0
        %2171 = vmatprep.subr.mxu0 0.0
        %2172 = vmatpush1.xpose.msra.mxu0 0.0
        %2173 = vmatprep.subr.mxu0 0.0
        %2174 = vmatpush1.xpose.msra.mxu0 0.0
        %2175 = vmatprep.subr.mxu0 0.0
        %2176 = vmatpush1.xpose.msra.mxu0 0.0
        %2177 = vmatprep.subr.mxu0 0.0
        %2178 = vmatpush1.xpose.msra.mxu0 0.0
        %2179 = vmatprep.subr.mxu0 0.0
        %2180 = vmatpush1.xpose.msra.mxu0 0.0
        %2181 = vmatprep.subr.mxu0 0.0
        %2182 = vmatpush1.xpose.msra.mxu0 0.0
        %2183 = vmatprep.subr.mxu0 0.0
        %2184 = vmatpush1.xpose.msra.mxu0 0.0
        %2185 = vmatprep.subr.mxu0 0.0
        %2186 = vmatpush1.xpose.msra.mxu0 0.0
        %2187 = vmatprep.subr.mxu0 0.0
        %2188 = vmatpush1.xpose.msra.mxu0 0.0
        %2189 = vmatprep.subr.mxu0 0.0
        %2190 = vmatpush1.xpose.msra.mxu0 0.0
        %2191 = vmatprep.subr.mxu0 0.0
        %2192 = vmatpush1.xpose.msra.mxu0 0.0
        %2193 = vmatprep.subr.mxu0 0.0
        %2194 = vmatpush1.xpose.msra.mxu0 0.0
        %2195 = vmatprep.subr.mxu0 0.0
        %2196 = vmatpush1.xpose.msra.mxu0 0.0
        %2197 = vmatprep.subr.mxu0 0.0
        %2198 = vmatpush1.xpose.msra.mxu0 0.0
        %2199 = vmatprep.subr.mxu0 0.0
        %2200 = vmatpush1.xpose.msra.mxu0 0.0
        %2201 = vmatprep.subr.mxu0 0.0
        %2202 = vmatpush1.xpose.msra.mxu0 0.0
        %2203 = vmatprep.subr.mxu0 0.0
        %2204 = vmatpush1.xpose.msra.mxu0 0.0
        %2205 = vmatprep.subr.mxu0 0.0
        %2206 = vmatpush1.xpose.msra.mxu0 0.0
        %2207 = vmatprep.subr.mxu0 0.0
        %2208 = vmatpush1.xpose.msra.mxu0 0.0
        %2209 = vmatprep.subr.mxu0 0.0
        %2210 = vmatpush1.xpose.msra.mxu0 0.0
        %2211 = vmatprep.subr.mxu0 0.0
        %2212 = vmatpush1.xpose.msra.mxu0 0.0
        %2213 = vmatprep.subr.mxu0 0.0
        %2214 = vmatpush1.xpose.msra.mxu0 0.0
        %2215 = vmatprep.mubr.f32.mxu0 0.0
        %2216 = vmatmul.mubr.f32.gmra.mrb[0].mxu0 %v2145
        %v2217 = vpop.f32.mrb[0].mxu0
        %v2218 = vadd.f32 0.0, %v2217
        %v2219 = vpop.f32.mrb[0].mxu0
        %2220 = vdwg.mxu0
        %2221 = vrot.lane.b32.xlu0 %v1495, 64
        %v2222 = vpop.permute.xlu0 %2221
        %2223 = vrot.lane.b32.xlu0 %v1595, 96
        %v2224 = vpop.permute.xlu0 %2223
        %2225 = vrot.lane.b32.xlu0 %v1602, 96
        %v2226 = vpop.permute.xlu0 %2225
        %v2227 = vsel %vm1607, %v2222, 0
        %v2229 = vsel %vm1607, %v2224, 0
        %v2231 = vsel %vm1607, %v2226, 0
        %2233 = vmatprep.subr.mxu0 0.0
        %2234 = vmatpush1.xpose.msra.mxu0 %v2229
        %2235 = vmatprep.subr.mxu0 0.0
        %2236 = vmatpush1.xpose.msra.mxu0 %v2231
        %2237 = vmatprep.subr.mxu0 0.0
        %2238 = vmatpush1.xpose.msra.mxu0 0.0
        %2239 = vmatprep.subr.mxu0 0.0
        %2240 = vmatpush1.xpose.msra.mxu0 0.0
        %2241 = vmatprep.subr.mxu0 0.0
        %2242 = vmatpush1.xpose.msra.mxu0 0.0
        %2243 = vmatprep.subr.mxu0 0.0
        %2244 = vmatpush1.xpose.msra.mxu0 0.0
        %2245 = vmatprep.subr.mxu0 0.0
        %2246 = vmatpush1.xpose.msra.mxu0 0.0
        %2247 = vmatprep.subr.mxu0 0.0
        %2248 = vmatpush1.xpose.msra.mxu0 0.0
        %2249 = vmatprep.subr.mxu0 0.0
        %2250 = vmatpush1.xpose.msra.mxu0 0.0
        %2251 = vmatprep.subr.mxu0 0.0
        %2252 = vmatpush1.xpose.msra.mxu0 0.0
        %2253 = vmatprep.subr.mxu0 0.0
        %2254 = vmatpush1.xpose.msra.mxu0 0.0
        %2255 = vmatprep.subr.mxu0 0.0
        %2256 = vmatpush1.xpose.msra.mxu0 0.0
        %2257 = vmatprep.subr.mxu0 0.0
        %2258 = vmatpush1.xpose.msra.mxu0 0.0
        %2259 = vmatprep.subr.mxu0 0.0
        %2260 = vmatpush1.xpose.msra.mxu0 0.0
        %2261 = vmatprep.subr.mxu0 0.0
        %2262 = vmatpush1.xpose.msra.mxu0 0.0
        %2263 = vmatprep.subr.mxu0 0.0
        %2264 = vmatpush1.xpose.msra.mxu0 0.0
        %2265 = vmatprep.subr.mxu0 0.0
        %2266 = vmatpush1.xpose.msra.mxu0 0.0
        %2267 = vmatprep.subr.mxu0 0.0
        %2268 = vmatpush1.xpose.msra.mxu0 0.0
        %2269 = vmatprep.subr.mxu0 0.0
        %2270 = vmatpush1.xpose.msra.mxu0 0.0
        %2271 = vmatprep.subr.mxu0 0.0
        %2272 = vmatpush1.xpose.msra.mxu0 0.0
        %2273 = vmatprep.subr.mxu0 0.0
        %2274 = vmatpush1.xpose.msra.mxu0 0.0
        %2275 = vmatprep.subr.mxu0 0.0
        %2276 = vmatpush1.xpose.msra.mxu0 0.0
        %2277 = vmatprep.subr.mxu0 0.0
        %2278 = vmatpush1.xpose.msra.mxu0 0.0
        %2279 = vmatprep.subr.mxu0 0.0
        %2280 = vmatpush1.xpose.msra.mxu0 0.0
        %2281 = vmatprep.subr.mxu0 0.0
        %2282 = vmatpush1.xpose.msra.mxu0 0.0
        %2283 = vmatprep.subr.mxu0 0.0
        %2284 = vmatpush1.xpose.msra.mxu0 0.0
        %2285 = vmatprep.subr.mxu0 0.0
        %2286 = vmatpush1.xpose.msra.mxu0 0.0
        %2287 = vmatprep.subr.mxu0 0.0
        %2288 = vmatpush1.xpose.msra.mxu0 0.0
        %2289 = vmatprep.subr.mxu0 0.0
        %2290 = vmatpush1.xpose.msra.mxu0 0.0
        %2291 = vmatprep.subr.mxu0 0.0
        %2292 = vmatpush1.xpose.msra.mxu0 0.0
        %2293 = vmatprep.subr.mxu0 0.0
        %2294 = vmatpush1.xpose.msra.mxu0 0.0
        %2295 = vmatprep.subr.mxu0 0.0
        %2296 = vmatpush1.xpose.msra.mxu0 0.0
        %2297 = vmatprep.mubr.f32.mxu0 0.0
        %2298 = vmatmul.mubr.f32.gmra.mrb[0].mxu0 %v2227
        %v2299 = vpop.f32.mrb[0].mxu0
        %v2300 = vadd.f32 %v2218, %v2299
        %v2301 = vpop.f32.mrb[0].mxu0
        %2302 = vdwg.mxu0
        %v2303 = vmul.f32 %v2300, 0.125
        %v2304 = vsel %vm1764, %v2303, -1e+30
        %2306 = vrot.lane.b32.xlu0 %v1769, 32
        %v2307 = vpop.permute.xlu0 %2306
        %v2309 = vmul.f32 %v1501, %v2307
        %2311 = vrot.lane.b32.xlu0 %v2309, 64
        %v2312 = vpop.permute.xlu0 %2311
        %v2314 = vsel %vm1771, %v2312, 0.0
        %2315 = vadd.xlane.f32.xlu0 %v2314
        %v2316 = vpop.xlane.xlu0 %2315
        %2318 = vrot.lane.b32.xlu0 %v1778, 32
        %v2319 = vpop.permute.xlu0 %2318
        %v2321 = vmul.f32 %v1495, %v2319
        %2323 = vrot.lane.b32.xlu0 %v2321, 64
        %v2324 = vpop.permute.xlu0 %2323
        %v2326 = vsel %vm1771, %v2324, 0.0
        %2327 = vadd.xlane.f32.xlu0 %v2326
        %v2328 = vpop.xlane.xlu0 %2327
        %v2329 = vadd.f32 %v2328, %v2316
        %v2330 = vmul.f32 %v2329, 0.125
        %v2331 = vsel %vm1785, %v2304, %v2330
        %v2332 = vsel %vm1787, %v2331, -inf
        %2333 = vmax.xlane.f32.xlu0 %v2332
        %v2334 = vpop.xlane.xlu0 %2333
        %v2335 = vsub.f32 %v2331, %v2334
        %v2336 = vmul.f32 %v2335, 1.442695
        %v2337 = vpow.pop %v2336
        %v2338 = vsel %vm1787, %v2337, 0.0
        %2339 = vadd.xlane.f32.xlu0 %v2338
        %v2340 = vpop.xlane.xlu0 %2339
        %v2341 = vrcp.pop %v2340
        %v2342 = vmul.f32 %v2337, %v2341
        %v2343 = vpack.c.bf16 %v2342, %v2342
        %2345 = vset.pattern.permute.xlu0 16
        %2346 = vperm.xlu0 %2345, %v2342
        %v2347 = vpop.permute.xlu0 %2346
        %v2349 = vmul.f32 %v2347, %v1808
        %2350 = vrot.lane.b32.xlu0 %v2094, 64
        %v2351 = vpop.permute.xlu0 %2350
        %2354 = vrot.lane.b32.xlu0 %v2349, 64
        %v2355 = vpop.permute.xlu0 %2354
        %v2358 = vsel %vm1785, %v2343, 0
        %2360 = vmatprep.subr.bf16.mxu0 0
        %2361 = vmatpush1.bf16.msra.mxu0 %v2351
        %2362 = vmatprep.subr.bf16.mxu0 0
        %2363 = vmatpush1.bf16.msra.mxu0 0
        %2364 = vmatprep.subr.bf16.mxu0 0
        %2365 = vmatpush1.bf16.msra.mxu0 0
        %2366 = vmatprep.subr.bf16.mxu0 0
        %2367 = vmatpush1.bf16.msra.mxu0 0
        %2368 = vmatprep.subr.bf16.mxu0 0
        %2369 = vmatpush1.bf16.msra.mxu0 0
        %2370 = vmatprep.subr.bf16.mxu0 0
        %2371 = vmatpush1.bf16.msra.mxu0 0
        %2372 = vmatprep.subr.bf16.mxu0 0
        %2373 = vmatpush1.bf16.msra.mxu0 0
        %2374 = vmatprep.subr.bf16.mxu0 0
        %2375 = vmatpush1.bf16.msra.mxu0 0
        %2376 = vmatprep.subr.bf16.mxu0 0
        %2377 = vmatpush1.bf16.msra.mxu0 0
        %2378 = vmatprep.subr.bf16.mxu0 0
        %2379 = vmatpush1.bf16.msra.mxu0 0
        %2380 = vmatprep.subr.bf16.mxu0 0
        %2381 = vmatpush1.bf16.msra.mxu0 0
        %2382 = vmatprep.subr.bf16.mxu0 0
        %2383 = vmatpush1.bf16.msra.mxu0 0
        %2384 = vmatprep.subr.bf16.mxu0 0
        %2385 = vmatpush1.bf16.msra.mxu0 0
        %2386 = vmatprep.subr.bf16.mxu0 0
        %2387 = vmatpush1.bf16.msra.mxu0 0
        %2388 = vmatprep.subr.bf16.mxu0 0
        %2389 = vmatpush1.bf16.msra.mxu0 0
        %2390 = vmatprep.subr.bf16.mxu0 0
        %2391 = vmatpush1.bf16.msra.mxu0 0
        %2392 = vmatprep.mubr.bf16.mxu0 0
        %2393 = vmatmul.mubr.bf16.gmra.mrb[0].mxu0 %v2358
        %v2394 = vpop.f32.mrb[0].mxu0
        %v2395 = vadd.f32 %v2355, %v2394
        %v2396 = vpop.f32.mrb[0].mxu0
        %v2397 = vpop.f32.mrb[0].mxu0
        %v2398 = vpop.f32.mrb[0].mxu0
        %2399 = vdwg.mxu0
        %v2401 = vrot.slane %v2134, 1
        %2402 = vrot.lane.b32.xlu0 %v2401, 64
        %v2403 = vpop.permute.xlu0 %2402
        %v2406 = vrot.slane %v2395, 1
        %2407 = vrot.lane.b32.xlu0 %v2406, 64
        %v2408 = vpop.permute.xlu0 %2407
        %v2410 = vsel %vm1431, %v2134, %v2403
        %v2411 = vsel %vm1431, %v2395, %v2408
        %v2412 = vrot.slane %v1403, 1
        %2414 = vrot.lane.b32.xlu0 %v1403, 96
        %v2415 = vpop.permute.xlu0 %2414
        %v2417 = vsel %vm1494, %v2412, %v2415
        %v2418 = vrot.slane %v1406, 1
        %2420 = vrot.lane.b32.xlu0 %v1406, 96
        %v2421 = vpop.permute.xlu0 %2420
        %v2423 = vsel %vm1494, %v2418, %v2421
        %v2424 = vlaneseq
        %v2425 = vshrl.u32 %v2424, 7
        %v2426 = vsub.s32 1, %v2425
        %v2427 = vrot.slane %v1473, %v2426
        %v2428 = vlaneseq
        %v2429 = vshrl.u32 %v2428, 7
        %v2430 = vsub.s32 1, %v2429
        %v2431 = vrot.slane %v1474, %v2430
        %v2432 = vlaneseq
        %v2433 = vshrl.u32 %v2432, 7
        %v2434 = vsub.s32 1, %v2433
        %v2435 = vrot.slane %v1475, %v2434
        %v2436 = vlaneseq
        %v2437 = vshrl.u32 %v2436, 7
        %v2438 = vsub.s32 1, %v2437
        %v2439 = vrot.slane %v1476, %v2438
        %v2440 = vlaneseq
        %v2441 = vshrl.u32 %v2440, 7
        %v2442 = vsub.s32 1, %v2441
        %v2443 = vrot.slane %v1477, %v2442
        %v2444 = vlaneseq
        %v2445 = vshrl.u32 %v2444, 7
        %v2446 = vsub.s32 1, %v2445
        %v2447 = vrot.slane %v1478, %v2446
        %v2448 = vlaneseq
        %v2449 = vshrl.u32 %v2448, 7
        %v2450 = vsub.s32 1, %v2449
        %v2451 = vrot.slane %v1479, %v2450
        %v2452 = vlaneseq
        %v2453 = vshrl.u32 %v2452, 7
        %v2454 = vsub.s32 1, %v2453
        %v2455 = vrot.slane %v1480, %v2454
        %v2456 = vlaneseq
        %v2457 = vshrl.u32 %v2456, 7
        %v2458 = vsub.s32 1, %v2457
        %v2459 = vrot.slane %v1481, %v2458
        %v2460 = vlaneseq
        %v2461 = vshrl.u32 %v2460, 7
        %v2462 = vsub.s32 1, %v2461
        %v2463 = vrot.slane %v1482, %v2462
        %v2464 = vlaneseq
        %v2465 = vshrl.u32 %v2464, 7
        %v2466 = vsub.s32 1, %v2465
        %v2467 = vrot.slane %v1483, %v2466
        %v2468 = vlaneseq
        %v2469 = vshrl.u32 %v2468, 7
        %v2470 = vsub.s32 1, %v2469
        %v2471 = vrot.slane %v1484, %v2470
        %v2472 = vlaneseq
        %v2473 = vshrl.u32 %v2472, 7
        %v2474 = vsub.s32 1, %v2473
        %v2475 = vrot.slane %v1485, %v2474
        %v2476 = vlaneseq
        %v2477 = vshrl.u32 %v2476, 7
        %v2478 = vsub.s32 1, %v2477
        %v2479 = vrot.slane %v1486, %v2478
        %v2480 = vlaneseq
        %v2481 = vshrl.u32 %v2480, 7
        %v2482 = vsub.s32 1, %v2481
        %v2483 = vrot.slane %v1487, %v2482
        %v2484 = vlaneseq
        %v2485 = vshrl.u32 %v2484, 7
        %v2486 = vsub.s32 1, %v2485
        %v2487 = vrot.slane %v1488, %v2486
        %v2488 = vsel %vm1582, %v2431, %v2427
        %v2489 = vsel %vm1584, %v2435, %v2488
        %v2490 = vsel %vm1586, %v2439, %v2489
        %v2491 = vsel %vm1588, %v2443, %v2490
        %v2492 = vsel %vm1590, %v2447, %v2491
        %v2493 = vsel %vm1592, %v2451, %v2492
        %v2494 = vsel %vm1594, %v2455, %v2493
        %v2495 = vsel %vm1582, %v2463, %v2459
        %v2496 = vsel %vm1584, %v2467, %v2495
        %v2497 = vsel %vm1586, %v2471, %v2496
        %v2498 = vsel %vm1588, %v2475, %v2497
        %v2499 = vsel %vm1590, %v2479, %v2498
        %v2500 = vsel %vm1592, %v2483, %v2499
        %v2501 = vsel %vm1594, %v2487, %v2500
        %2502 = vrot.lane.b32.xlu0 %v2494, 64
        %v2503 = vpop.permute.xlu0 %2502
        %2504 = vrot.lane.b32.xlu0 %v2501, 64
        %v2505 = vpop.permute.xlu0 %2504
        %v2507 = vsel %vm1607, %v2423, 0
        %v2509 = vsel %vm1607, %v2503, 0
        %v2511 = vsel %vm1607, %v2505, 0
        %2513 = vmatprep.subr.mxu0 0.0
        %2514 = vmatpush1.xpose.msra.mxu0 %v2509
        %2515 = vmatprep.subr.mxu0 0.0
        %2516 = vmatpush1.xpose.msra.mxu0 %v2511
        %2517 = vmatprep.subr.mxu0 0.0
        %2518 = vmatpush1.xpose.msra.mxu0 0.0
        %2519 = vmatprep.subr.mxu0 0.0
        %2520 = vmatpush1.xpose.msra.mxu0 0.0
        %2521 = vmatprep.subr.mxu0 0.0
        %2522 = vmatpush1.xpose.msra.mxu0 0.0
        %2523 = vmatprep.subr.mxu0 0.0
        %2524 = vmatpush1.xpose.msra.mxu0 0.0
        %2525 = vmatprep.subr.mxu0 0.0
        %2526 = vmatpush1.xpose.msra.mxu0 0.0
        %2527 = vmatprep.subr.mxu0 0.0
        %2528 = vmatpush1.xpose.msra.mxu0 0.0
        %2529 = vmatprep.subr.mxu0 0.0
        %2530 = vmatpush1.xpose.msra.mxu0 0.0
        %2531 = vmatprep.subr.mxu0 0.0
        %2532 = vmatpush1.xpose.msra.mxu0 0.0
        %2533 = vmatprep.subr.mxu0 0.0
        %2534 = vmatpush1.xpose.msra.mxu0 0.0
        %2535 = vmatprep.subr.mxu0 0.0
        %2536 = vmatpush1.xpose.msra.mxu0 0.0
        %2537 = vmatprep.subr.mxu0 0.0
        %2538 = vmatpush1.xpose.msra.mxu0 0.0
        %2539 = vmatprep.subr.mxu0 0.0
        %2540 = vmatpush1.xpose.msra.mxu0 0.0
        %2541 = vmatprep.subr.mxu0 0.0
        %2542 = vmatpush1.xpose.msra.mxu0 0.0
        %2543 = vmatprep.subr.mxu0 0.0
        %2544 = vmatpush1.xpose.msra.mxu0 0.0
        %2545 = vmatprep.subr.mxu0 0.0
        %2546 = vmatpush1.xpose.msra.mxu0 0.0
        %2547 = vmatprep.subr.mxu0 0.0
        %2548 = vmatpush1.xpose.msra.mxu0 0.0
        %2549 = vmatprep.subr.mxu0 0.0
        %2550 = vmatpush1.xpose.msra.mxu0 0.0
        %2551 = vmatprep.subr.mxu0 0.0
        %2552 = vmatpush1.xpose.msra.mxu0 0.0
        %2553 = vmatprep.subr.mxu0 0.0
        %2554 = vmatpush1.xpose.msra.mxu0 0.0
        %2555 = vmatprep.subr.mxu0 0.0
        %2556 = vmatpush1.xpose.msra.mxu0 0.0
        %2557 = vmatprep.subr.mxu0 0.0
        %2558 = vmatpush1.xpose.msra.mxu0 0.0
        %2559 = vmatprep.subr.mxu0 0.0
        %2560 = vmatpush1.xpose.msra.mxu0 0.0
        %2561 = vmatprep.subr.mxu0 0.0
        %2562 = vmatpush1.xpose.msra.mxu0 0.0
        %2563 = vmatprep.subr.mxu0 0.0
        %2564 = vmatpush1.xpose.msra.mxu0 0.0
        %2565 = vmatprep.subr.mxu0 0.0
        %2566 = vmatpush1.xpose.msra.mxu0 0.0
        %2567 = vmatprep.subr.mxu0 0.0
        %2568 = vmatpush1.xpose.msra.mxu0 0.0
        %2569 = vmatprep.subr.mxu0 0.0
        %2570 = vmatpush1.xpose.msra.mxu0 0.0
        %2571 = vmatprep.subr.mxu0 0.0
        %2572 = vmatpush1.xpose.msra.mxu0 0.0
        %2573 = vmatprep.subr.mxu0 0.0
        %2574 = vmatpush1.xpose.msra.mxu0 0.0
        %2575 = vmatprep.subr.mxu0 0.0
        %2576 = vmatpush1.xpose.msra.mxu0 0.0
        %2577 = vmatprep.mubr.f32.mxu0 0.0
        %2578 = vmatmul.mubr.f32.gmra.mrb[0].mxu0 %v2507
        %v2579 = vpop.f32.mrb[0].mxu0
        %v2580 = vadd.f32 0.0, %v2579
        %v2581 = vpop.f32.mrb[0].mxu0
        %2582 = vdwg.mxu0
        %v2584 = vsel %vm1607, %v2417, 0
        %v2586 = vsel %vm1607, %v2494, 0
        %v2588 = vsel %vm1607, %v2501, 0
        %2590 = vmatprep.subr.mxu0 0.0
        %2591 = vmatpush1.xpose.msra.mxu0 %v2586
        %2592 = vmatprep.subr.mxu0 0.0
        %2593 = vmatpush1.xpose.msra.mxu0 %v2588
        %2594 = vmatprep.subr.mxu0 0.0
        %2595 = vmatpush1.xpose.msra.mxu0 0.0
        %2596 = vmatprep.subr.mxu0 0.0
        %2597 = vmatpush1.xpose.msra.mxu0 0.0
        %2598 = vmatprep.subr.mxu0 0.0
        %2599 = vmatpush1.xpose.msra.mxu0 0.0
        %2600 = vmatprep.subr.mxu0 0.0
        %2601 = vmatpush1.xpose.msra.mxu0 0.0
        %2602 = vmatprep.subr.mxu0 0.0
        %2603 = vmatpush1.xpose.msra.mxu0 0.0
        %2604 = vmatprep.subr.mxu0 0.0
        %2605 = vmatpush1.xpose.msra.mxu0 0.0
        %2606 = vmatprep.subr.mxu0 0.0
        %2607 = vmatpush1.xpose.msra.mxu0 0.0
        %2608 = vmatprep.subr.mxu0 0.0
        %2609 = vmatpush1.xpose.msra.mxu0 0.0
        %2610 = vmatprep.subr.mxu0 0.0
        %2611 = vmatpush1.xpose.msra.mxu0 0.0
        %2612 = vmatprep.subr.mxu0 0.0
        %2613 = vmatpush1.xpose.msra.mxu0 0.0
        %2614 = vmatprep.subr.mxu0 0.0
        %2615 = vmatpush1.xpose.msra.mxu0 0.0
        %2616 = vmatprep.subr.mxu0 0.0
        %2617 = vmatpush1.xpose.msra.mxu0 0.0
        %2618 = vmatprep.subr.mxu0 0.0
        %2619 = vmatpush1.xpose.msra.mxu0 0.0
        %2620 = vmatprep.subr.mxu0 0.0
        %2621 = vmatpush1.xpose.msra.mxu0 0.0
        %2622 = vmatprep.subr.mxu0 0.0
        %2623 = vmatpush1.xpose.msra.mxu0 0.0
        %2624 = vmatprep.subr.mxu0 0.0
        %2625 = vmatpush1.xpose.msra.mxu0 0.0
        %2626 = vmatprep.subr.mxu0 0.0
        %2627 = vmatpush1.xpose.msra.mxu0 0.0
        %2628 = vmatprep.subr.mxu0 0.0
        %2629 = vmatpush1.xpose.msra.mxu0 0.0
        %2630 = vmatprep.subr.mxu0 0.0
        %2631 = vmatpush1.xpose.msra.mxu0 0.0
        %2632 = vmatprep.subr.mxu0 0.0
        %2633 = vmatpush1.xpose.msra.mxu0 0.0
        %2634 = vmatprep.subr.mxu0 0.0
        %2635 = vmatpush1.xpose.msra.mxu0 0.0
        %2636 = vmatprep.subr.mxu0 0.0
        %2637 = vmatpush1.xpose.msra.mxu0 0.0
        %2638 = vmatprep.subr.mxu0 0.0
        %2639 = vmatpush1.xpose.msra.mxu0 0.0
        %2640 = vmatprep.subr.mxu0 0.0
        %2641 = vmatpush1.xpose.msra.mxu0 0.0
        %2642 = vmatprep.subr.mxu0 0.0
        %2643 = vmatpush1.xpose.msra.mxu0 0.0
        %2644 = vmatprep.subr.mxu0 0.0
        %2645 = vmatpush1.xpose.msra.mxu0 0.0
        %2646 = vmatprep.subr.mxu0 0.0
        %2647 = vmatpush1.xpose.msra.mxu0 0.0
        %2648 = vmatprep.subr.mxu0 0.0
        %2649 = vmatpush1.xpose.msra.mxu0 0.0
        %2650 = vmatprep.subr.mxu0 0.0
        %2651 = vmatpush1.xpose.msra.mxu0 0.0
        %2652 = vmatprep.subr.mxu0 0.0
        %2653 = vmatpush1.xpose.msra.mxu0 0.0
        %2654 = vmatprep.mubr.f32.mxu0 0.0
        %2655 = vmatmul.mubr.f32.gmra.mrb[0].mxu0 %v2584
        %v2656 = vpop.f32.mrb[0].mxu0
        %v2657 = vadd.f32 %v2580, %v2656
        %v2658 = vpop.f32.mrb[0].mxu0
        %2659 = vdwg.mxu0
        %v2660 = vmul.f32 %v2657, 0.125
        %v2661 = vsel %vm1764, %v2660, -1e+30
        %v2662 = vlaneseq
        %v2663 = vshrl.u32 %v2662, 7
        %v2664 = vsub.s32 1, %v2663
        %v2665 = vrot.slane %v1426, %v2664
        %v2666 = vmul.f32 %v2423, %v2665
        %v2667 = vsel %vm1771, %v2666, 0.0
        %2668 = vadd.xlane.f32.xlu0 %v2667
        %v2669 = vpop.xlane.xlu0 %2668
        %v2670 = vlaneseq
        %v2671 = vshrl.u32 %v2670, 7
        %v2672 = vsub.s32 1, %v2671
        %v2673 = vrot.slane %v1416, %v2672
        %v2674 = vmul.f32 %v2417, %v2673
        %v2675 = vsel %vm1771, %v2674, 0.0
        %2676 = vadd.xlane.f32.xlu0 %v2675
        %v2677 = vpop.xlane.xlu0 %2676
        %v2678 = vadd.f32 %v2677, %v2669
        %v2679 = vmul.f32 %v2678, 0.125
        %v2680 = vsel %vm1785, %v2661, %v2679
        %v2681 = vsel %vm1787, %v2680, -inf
        %2682 = vmax.xlane.f32.xlu0 %v2681
        %v2683 = vpop.xlane.xlu0 %2682
        %v2684 = vsub.f32 %v2680, %v2683
        %v2685 = vmul.f32 %v2684, 1.442695
        %v2686 = vpow.pop %v2685
        %v2687 = vsel %vm1787, %v2686, 0.0
        %2688 = vadd.xlane.f32.xlu0 %v2687
        %v2689 = vpop.xlane.xlu0 %2688
        %v2690 = vrcp.pop %v2689
        %v2691 = vmul.f32 %v2686, %v2690
        %v2692 = vpack.c.bf16 %v2691, %v2691
        %2694 = vset.pattern.permute.xlu0 16
        %2695 = vperm.xlu0 %2694, %v2691
        %v2696 = vpop.permute.xlu0 %2695
        %v2698 = vlaneseq
        %v2699 = vshrl.u32 %v2698, 7
        %v2700 = vsub.s32 1, %v2699
        %v2701 = vrot.slane %v1383, %v2700
        %v2702 = vmul.f32 %v2696, %v2701
        %v2703 = vrot.slane %v2050, 1
        %v2704 = vsel %vm1582, %v2051, %v2703
        %v2705 = vrot.slane %v2052, 7
        %v2706 = vsel %vm1584, %v2705, %v2704
        %v2707 = vrot.slane %v2053, 6
        %v2708 = vsel %vm1586, %v2707, %v2706
        %v2709 = vrot.slane %v2054, 5
        %v2710 = vsel %vm1588, %v2709, %v2708
        %v2711 = vrot.slane %v2055, 4
        %v2712 = vsel %vm1590, %v2711, %v2710
        %v2713 = vrot.slane %v2056, 3
        %v2714 = vsel %vm1592, %v2713, %v2712
        %v2715 = vrot.slane %v2057, 2
        %v2716 = vsel %vm1594, %v2715, %v2714
        %v2717 = vrot.slane %v2058, 1
        %v2718 = vsel %vm1582, %v2059, %v2717
        %v2719 = vrot.slane %v2060, 7
        %v2720 = vsel %vm1584, %v2719, %v2718
        %v2721 = vrot.slane %v2061, 6
        %v2722 = vsel %vm1586, %v2721, %v2720
        %v2723 = vrot.slane %v2062, 5
        %v2724 = vsel %vm1588, %v2723, %v2722
        %v2725 = vrot.slane %v2063, 4
        %v2726 = vsel %vm1590, %v2725, %v2724
        %v2727 = vrot.slane %v2064, 3
        %v2728 = vsel %vm1592, %v2727, %v2726
        %v2729 = vrot.slane %v2065, 2
        %v2730 = vsel %vm1594, %v2729, %v2728
        %v2731 = vpack.c.b16 %v2730, %v2716
        %v2734 = vsel %vm1785, %v2692, 0
        %2736 = vmatprep.subr.bf16.mxu0 0
        %2737 = vmatpush1.bf16.msra.mxu0 %v2731
        %2738 = vmatprep.subr.bf16.mxu0 0
        %2739 = vmatpush1.bf16.msra.mxu0 0
        %2740 = vmatprep.subr.bf16.mxu0 0
        %2741 = vmatpush1.bf16.msra.mxu0 0
        %2742 = vmatprep.subr.bf16.mxu0 0
        %2743 = vmatpush1.bf16.msra.mxu0 0
        %2744 = vmatprep.subr.bf16.mxu0 0
        %2745 = vmatpush1.bf16.msra.mxu0 0
        %2746 = vmatprep.subr.bf16.mxu0 0
        %2747 = vmatpush1.bf16.msra.mxu0 0
        %2748 = vmatprep.subr.bf16.mxu0 0
        %2749 = vmatpush1.bf16.msra.mxu0 0
        %2750 = vmatprep.subr.bf16.mxu0 0
        %2751 = vmatpush1.bf16.msra.mxu0 0
        %2752 = vmatprep.subr.bf16.mxu0 0
        %2753 = vmatpush1.bf16.msra.mxu0 0
        %2754 = vmatprep.subr.bf16.mxu0 0
        %2755 = vmatpush1.bf16.msra.mxu0 0
        %2756 = vmatprep.subr.bf16.mxu0 0
        %2757 = vmatpush1.bf16.msra.mxu0 0
        %2758 = vmatprep.subr.bf16.mxu0 0
        %2759 = vmatpush1.bf16.msra.mxu0 0
        %2760 = vmatprep.subr.bf16.mxu0 0
        %2761 = vmatpush1.bf16.msra.mxu0 0
        %2762 = vmatprep.subr.bf16.mxu0 0
        %2763 = vmatpush1.bf16.msra.mxu0 0
        %2764 = vmatprep.subr.bf16.mxu0 0
        %2765 = vmatpush1.bf16.msra.mxu0 0
        %2766 = vmatprep.subr.bf16.mxu0 0
        %2767 = vmatpush1.bf16.msra.mxu0 0
        %2768 = vmatprep.mubr.bf16.mxu0 0
        %2769 = vmatmul.mubr.bf16.gmra.mrb[0].mxu0 %v2734
        %v2770 = vpop.f32.mrb[0].mxu0
        %v2771 = vadd.f32 %v2702, %v2770
        %v2772 = vpop.f32.mrb[0].mxu0
        %v2773 = vpop.f32.mrb[0].mxu0
        %v2774 = vpop.f32.mrb[0].mxu0
        %2775 = vdwg.mxu0
        %2776 = vrot.lane.b32.xlu0 %v2423, 64
        %v2777 = vpop.permute.xlu0 %2776
        %2778 = vrot.lane.b32.xlu0 %v2494, 32
        %v2779 = vpop.permute.xlu0 %2778
        %2780 = vrot.lane.b32.xlu0 %v2501, 32
        %v2781 = vpop.permute.xlu0 %2780
        %v2782 = vsel %vm1607, %v2777, 0
        %v2784 = vsel %vm1607, %v2779, 0
        %v2786 = vsel %vm1607, %v2781, 0
        %2788 = vmatprep.subr.mxu0 0.0
        %2789 = vmatpush1.xpose.msra.mxu0 %v2784
        %2790 = vmatprep.subr.mxu0 0.0
        %2791 = vmatpush1.xpose.msra.mxu0 %v2786
        %2792 = vmatprep.subr.mxu0 0.0
        %2793 = vmatpush1.xpose.msra.mxu0 0.0
        %2794 = vmatprep.subr.mxu0 0.0
        %2795 = vmatpush1.xpose.msra.mxu0 0.0
        %2796 = vmatprep.subr.mxu0 0.0
        %2797 = vmatpush1.xpose.msra.mxu0 0.0
        %2798 = vmatprep.subr.mxu0 0.0
        %2799 = vmatpush1.xpose.msra.mxu0 0.0
        %2800 = vmatprep.subr.mxu0 0.0
        %2801 = vmatpush1.xpose.msra.mxu0 0.0
        %2802 = vmatprep.subr.mxu0 0.0
        %2803 = vmatpush1.xpose.msra.mxu0 0.0
        %2804 = vmatprep.subr.mxu0 0.0
        %2805 = vmatpush1.xpose.msra.mxu0 0.0
        %2806 = vmatprep.subr.mxu0 0.0
        %2807 = vmatpush1.xpose.msra.mxu0 0.0
        %2808 = vmatprep.subr.mxu0 0.0
        %2809 = vmatpush1.xpose.msra.mxu0 0.0
        %2810 = vmatprep.subr.mxu0 0.0
        %2811 = vmatpush1.xpose.msra.mxu0 0.0
        %2812 = vmatprep.subr.mxu0 0.0
        %2813 = vmatpush1.xpose.msra.mxu0 0.0
        %2814 = vmatprep.subr.mxu0 0.0
        %2815 = vmatpush1.xpose.msra.mxu0 0.0
        %2816 = vmatprep.subr.mxu0 0.0
        %2817 = vmatpush1.xpose.msra.mxu0 0.0
        %2818 = vmatprep.subr.mxu0 0.0
        %2819 = vmatpush1.xpose.msra.mxu0 0.0
        %2820 = vmatprep.subr.mxu0 0.0
        %2821 = vmatpush1.xpose.msra.mxu0 0.0
        %2822 = vmatprep.subr.mxu0 0.0
        %2823 = vmatpush1.xpose.msra.mxu0 0.0
        %2824 = vmatprep.subr.mxu0 0.0
        %2825 = vmatpush1.xpose.msra.mxu0 0.0
        %2826 = vmatprep.subr.mxu0 0.0
        %2827 = vmatpush1.xpose.msra.mxu0 0.0
        %2828 = vmatprep.subr.mxu0 0.0
        %2829 = vmatpush1.xpose.msra.mxu0 0.0
        %2830 = vmatprep.subr.mxu0 0.0
        %2831 = vmatpush1.xpose.msra.mxu0 0.0
        %2832 = vmatprep.subr.mxu0 0.0
        %2833 = vmatpush1.xpose.msra.mxu0 0.0
        %2834 = vmatprep.subr.mxu0 0.0
        %2835 = vmatpush1.xpose.msra.mxu0 0.0
        %2836 = vmatprep.subr.mxu0 0.0
        %2837 = vmatpush1.xpose.msra.mxu0 0.0
        %2838 = vmatprep.subr.mxu0 0.0
        %2839 = vmatpush1.xpose.msra.mxu0 0.0
        %2840 = vmatprep.subr.mxu0 0.0
        %2841 = vmatpush1.xpose.msra.mxu0 0.0
        %2842 = vmatprep.subr.mxu0 0.0
        %2843 = vmatpush1.xpose.msra.mxu0 0.0
        %2844 = vmatprep.subr.mxu0 0.0
        %2845 = vmatpush1.xpose.msra.mxu0 0.0
        %2846 = vmatprep.subr.mxu0 0.0
        %2847 = vmatpush1.xpose.msra.mxu0 0.0
        %2848 = vmatprep.subr.mxu0 0.0
        %2849 = vmatpush1.xpose.msra.mxu0 0.0
        %2850 = vmatprep.subr.mxu0 0.0
        %2851 = vmatpush1.xpose.msra.mxu0 0.0
        %2852 = vmatprep.mubr.f32.mxu0 0.0
        %2853 = vmatmul.mubr.f32.gmra.mrb[0].mxu0 %v2782
        %v2854 = vpop.f32.mrb[0].mxu0
        %v2855 = vadd.f32 0.0, %v2854
        %v2856 = vpop.f32.mrb[0].mxu0
        %2857 = vdwg.mxu0
        %2858 = vrot.lane.b32.xlu0 %v2417, 64
        %v2859 = vpop.permute.xlu0 %2858
        %2860 = vrot.lane.b32.xlu0 %v2494, 96
        %v2861 = vpop.permute.xlu0 %2860
        %2862 = vrot.lane.b32.xlu0 %v2501, 96
        %v2863 = vpop.permute.xlu0 %2862
        %v2864 = vsel %vm1607, %v2859, 0
        %v2866 = vsel %vm1607, %v2861, 0
        %v2868 = vsel %vm1607, %v2863, 0
        %2870 = vmatprep.subr.mxu0 0.0
        %2871 = vmatpush1.xpose.msra.mxu0 %v2866
        %2872 = vmatprep.subr.mxu0 0.0
        %2873 = vmatpush1.xpose.msra.mxu0 %v2868
        %2874 = vmatprep.subr.mxu0 0.0
        %2875 = vmatpush1.xpose.msra.mxu0 0.0
        %2876 = vmatprep.subr.mxu0 0.0
        %2877 = vmatpush1.xpose.msra.mxu0 0.0
        %2878 = vmatprep.subr.mxu0 0.0
        %2879 = vmatpush1.xpose.msra.mxu0 0.0
        %2880 = vmatprep.subr.mxu0 0.0
        %2881 = vmatpush1.xpose.msra.mxu0 0.0
        %2882 = vmatprep.subr.mxu0 0.0
        %2883 = vmatpush1.xpose.msra.mxu0 0.0
        %2884 = vmatprep.subr.mxu0 0.0
        %2885 = vmatpush1.xpose.msra.mxu0 0.0
        %2886 = vmatprep.subr.mxu0 0.0
        %2887 = vmatpush1.xpose.msra.mxu0 0.0
        %2888 = vmatprep.subr.mxu0 0.0
        %2889 = vmatpush1.xpose.msra.mxu0 0.0
        %2890 = vmatprep.subr.mxu0 0.0
        %2891 = vmatpush1.xpose.msra.mxu0 0.0
        %2892 = vmatprep.subr.mxu0 0.0
        %2893 = vmatpush1.xpose.msra.mxu0 0.0
        %2894 = vmatprep.subr.mxu0 0.0
        %2895 = vmatpush1.xpose.msra.mxu0 0.0
        %2896 = vmatprep.subr.mxu0 0.0
        %2897 = vmatpush1.xpose.msra.mxu0 0.0
        %2898 = vmatprep.subr.mxu0 0.0
        %2899 = vmatpush1.xpose.msra.mxu0 0.0
        %2900 = vmatprep.subr.mxu0 0.0
        %2901 = vmatpush1.xpose.msra.mxu0 0.0
        %2902 = vmatprep.subr.mxu0 0.0
        %2903 = vmatpush1.xpose.msra.mxu0 0.0
        %2904 = vmatprep.subr.mxu0 0.0
        %2905 = vmatpush1.xpose.msra.mxu0 0.0
        %2906 = vmatprep.subr.mxu0 0.0
        %2907 = vmatpush1.xpose.msra.mxu0 0.0
        %2908 = vmatprep.subr.mxu0 0.0
        %2909 = vmatpush1.xpose.msra.mxu0 0.0
        %2910 = vmatprep.subr.mxu0 0.0
        %2911 = vmatpush1.xpose.msra.mxu0 0.0
        %2912 = vmatprep.subr.mxu0 0.0
        %2913 = vmatpush1.xpose.msra.mxu0 0.0
        %2914 = vmatprep.subr.mxu0 0.0
        %2915 = vmatpush1.xpose.msra.mxu0 0.0
        %2916 = vmatprep.subr.mxu0 0.0
        %2917 = vmatpush1.xpose.msra.mxu0 0.0
        %2918 = vmatprep.subr.mxu0 0.0
        %2919 = vmatpush1.xpose.msra.mxu0 0.0
        %2920 = vmatprep.subr.mxu0 0.0
        %2921 = vmatpush1.xpose.msra.mxu0 0.0
        %2922 = vmatprep.subr.mxu0 0.0
        %2923 = vmatpush1.xpose.msra.mxu0 0.0
        %2924 = vmatprep.subr.mxu0 0.0
        %2925 = vmatpush1.xpose.msra.mxu0 0.0
        %2926 = vmatprep.subr.mxu0 0.0
        %2927 = vmatpush1.xpose.msra.mxu0 0.0
        %2928 = vmatprep.subr.mxu0 0.0
        %2929 = vmatpush1.xpose.msra.mxu0 0.0
        %2930 = vmatprep.subr.mxu0 0.0
        %2931 = vmatpush1.xpose.msra.mxu0 0.0
        %2932 = vmatprep.subr.mxu0 0.0
        %2933 = vmatpush1.xpose.msra.mxu0 0.0
        %2934 = vmatprep.mubr.f32.mxu0 0.0
        %2935 = vmatmul.mubr.f32.gmra.mrb[0].mxu0 %v2864
        %v2936 = vpop.f32.mrb[0].mxu0
        %v2937 = vadd.f32 %v2855, %v2936
        %v2938 = vpop.f32.mrb[0].mxu0
        %2939 = vdwg.mxu0
        %v2940 = vmul.f32 %v2937, 0.125
        %v2941 = vsel %vm1764, %v2940, -1e+30
        %2943 = vrot.lane.b32.xlu0 %v2665, 32
        %v2944 = vpop.permute.xlu0 %2943
        %v2946 = vmul.f32 %v2423, %v2944
        %2948 = vrot.lane.b32.xlu0 %v2946, 64
        %v2949 = vpop.permute.xlu0 %2948
        %v2951 = vsel %vm1771, %v2949, 0.0
        %2952 = vadd.xlane.f32.xlu0 %v2951
        %v2953 = vpop.xlane.xlu0 %2952
        %2955 = vrot.lane.b32.xlu0 %v2673, 32
        %v2956 = vpop.permute.xlu0 %2955
        %v2958 = vmul.f32 %v2417, %v2956
        %2960 = vrot.lane.b32.xlu0 %v2958, 64
        %v2961 = vpop.permute.xlu0 %2960
        %v2963 = vsel %vm1771, %v2961, 0.0
        %2964 = vadd.xlane.f32.xlu0 %v2963
        %v2965 = vpop.xlane.xlu0 %2964
        %v2966 = vadd.f32 %v2965, %v2953
        %v2967 = vmul.f32 %v2966, 0.125
        %v2968 = vsel %vm1785, %v2941, %v2967
        %v2969 = vsel %vm1787, %v2968, -inf
        %2970 = vmax.xlane.f32.xlu0 %v2969
        %v2971 = vpop.xlane.xlu0 %2970
        %v2972 = vsub.f32 %v2968, %v2971
        %v2973 = vmul.f32 %v2972, 1.442695
        %v2974 = vpow.pop %v2973
        %v2975 = vsel %vm1787, %v2974, 0.0
        %2976 = vadd.xlane.f32.xlu0 %v2975
        %v2977 = vpop.xlane.xlu0 %2976
        %v2978 = vrcp.pop %v2977
        %v2979 = vmul.f32 %v2974, %v2978
        %v2980 = vpack.c.bf16 %v2979, %v2979
        %2982 = vset.pattern.permute.xlu0 16
        %2983 = vperm.xlu0 %2982, %v2979
        %v2984 = vpop.permute.xlu0 %2983
        %v2986 = vmul.f32 %v2984, %v2701
        %2987 = vrot.lane.b32.xlu0 %v2731, 64
        %v2988 = vpop.permute.xlu0 %2987
        %2991 = vrot.lane.b32.xlu0 %v2986, 64
        %v2992 = vpop.permute.xlu0 %2991
        %v2995 = vsel %vm1785, %v2980, 0
        %2997 = vmatprep.subr.bf16.mxu0 0
        %2998 = vmatpush1.bf16.msra.mxu0 %v2988
        %2999 = vmatprep.subr.bf16.mxu0 0
        %3000 = vmatpush1.bf16.msra.mxu0 0
        %3001 = vmatprep.subr.bf16.mxu0 0
        %3002 = vmatpush1.bf16.msra.mxu0 0
        %3003 = vmatprep.subr.bf16.mxu0 0
        %3004 = vmatpush1.bf16.msra.mxu0 0
        %3005 = vmatprep.subr.bf16.mxu0 0
        %3006 = vmatpush1.bf16.msra.mxu0 0
        %3007 = vmatprep.subr.bf16.mxu0 0
        %3008 = vmatpush1.bf16.msra.mxu0 0
        %3009 = vmatprep.subr.bf16.mxu0 0
        %3010 = vmatpush1.bf16.msra.mxu0 0
        %3011 = vmatprep.subr.bf16.mxu0 0
        %3012 = vmatpush1.bf16.msra.mxu0 0
        %3013 = vmatprep.subr.bf16.mxu0 0
        %3014 = vmatpush1.bf16.msra.mxu0 0
        %3015 = vmatprep.subr.bf16.mxu0 0
        %3016 = vmatpush1.bf16.msra.mxu0 0
        %3017 = vmatprep.subr.bf16.mxu0 0
        %3018 = vmatpush1.bf16.msra.mxu0 0
        %3019 = vmatprep.subr.bf16.mxu0 0
        %3020 = vmatpush1.bf16.msra.mxu0 0
        %3021 = vmatprep.subr.bf16.mxu0 0
        %3022 = vmatpush1.bf16.msra.mxu0 0
        %3023 = vmatprep.subr.bf16.mxu0 0
        %3024 = vmatpush1.bf16.msra.mxu0 0
        %3025 = vmatprep.subr.bf16.mxu0 0
        %3026 = vmatpush1.bf16.msra.mxu0 0
        %3027 = vmatprep.subr.bf16.mxu0 0
        %3028 = vmatpush1.bf16.msra.mxu0 0
        %3029 = vmatprep.mubr.bf16.mxu0 0
        %3030 = vmatmul.mubr.bf16.gmra.mrb[0].mxu0 %v2995
        %v3031 = vpop.f32.mrb[0].mxu0
        %v3032 = vadd.f32 %v2992, %v3031
        %v3033 = vpop.f32.mrb[0].mxu0
        %v3034 = vpop.f32.mrb[0].mxu0
        %v3035 = vpop.f32.mrb[0].mxu0
        %3036 = vdwg.mxu0
        %v3038 = vrot.slane %v2771, 1
        %3039 = vrot.lane.b32.xlu0 %v3038, 64
        %v3040 = vpop.permute.xlu0 %3039
        %v3043 = vrot.slane %v3032, 1
        %3044 = vrot.lane.b32.xlu0 %v3043, 64
        %v3045 = vpop.permute.xlu0 %3044
        %v3047 = vsel %vm1431, %v2771, %v3040
        %v3048 = vsel %vm1431, %v3032, %v3045
        %v3051 = vrot.slane %v3047, 7
        %v3052 = vrot.slane %v3048, 7
        %v3055 = vsel %vm1494, %v2410, %v3051
        %v3056 = vsel %vm1494, %v2411, %v3052
        %v3057 = vpack.c.bf16 %v3055, %v3055
        %v3058 = vpack.c.bf16 %v3056, %v3056
        %v3059 = vld [vmem:[%s694] sm:$0xff]
        %v3060 = vld [vmem:[%s694 + $0x8] sm:$0xff]
        %v3061 = vld [vmem:[%s694 + $0x10] sm:$0xff]
        %v3062 = vld [vmem:[%s694 + $0x18] sm:$0xff]
        %v3063 = vld [vmem:[%s694 + $0x20] sm:$0xff]
        %v3064 = vld [vmem:[%s694 + $0x28] sm:$0xff]
        %v3065 = vld [vmem:[%s694 + $0x30] sm:$0xff]
        %v3066 = vld [vmem:[%s694 + $0x38] sm:$0xff]
        %v3067 = vld [vmem:[%s694 + $0x40] sm:$0xff]
        %v3068 = vld [vmem:[%s694 + $0x48] sm:$0xff]
        %v3069 = vld [vmem:[%s694 + $0x50] sm:$0xff]
        %v3070 = vld [vmem:[%s694 + $0x58] sm:$0xff]
        %v3071 = vld [vmem:[%s694 + $0x60] sm:$0xff]
        %v3072 = vld [vmem:[%s694 + $0x68] sm:$0xff]
        %v3073 = vld [vmem:[%s694 + $0x70] sm:$0xff]
        %v3074 = vld [vmem:[%s694 + $0x78] sm:$0xff]
        %v3075 = vld [vmem:[%s694 + $0x80] sm:$0xff]
        %v3076 = vld [vmem:[%s694 + $0x88] sm:$0xff]
        %v3077 = vld [vmem:[%s694 + $0x90] sm:$0xff]
        %v3078 = vld [vmem:[%s694 + $0x98] sm:$0xff]
        %v3079 = vld [vmem:[%s694 + $0xa0] sm:$0xff]
        %v3080 = vld [vmem:[%s694 + $0xa8] sm:$0xff]
        %v3081 = vld [vmem:[%s694 + $0xb0] sm:$0xff]
        %v3082 = vld [vmem:[%s694 + $0xb8] sm:$0xff]
        %v3083 = vld [vmem:[%s694 + $0xc0] sm:$0xff]
        %v3084 = vld [vmem:[%s694 + $0xc8] sm:$0xff]
        %v3085 = vld [vmem:[%s694 + $0xd0] sm:$0xff]
        %v3086 = vld [vmem:[%s694 + $0xd8] sm:$0xff]
        %v3087 = vld [vmem:[%s694 + $0xe0] sm:$0xff]
        %v3088 = vld [vmem:[%s694 + $0xe8] sm:$0xff]
        %v3089 = vld [vmem:[%s694 + $0xf0] sm:$0xff]
        %v3090 = vld [vmem:[%s694 + $0xf8] sm:$0xff]
        %v3123 = vunpack.c.l.b16 %v3059
        %v3124 = vunpack.c.h.b16 %v3059
        %v3125 = vunpack.c.l.b16 %v3060
        %v3126 = vunpack.c.h.b16 %v3060
        %v3127 = vunpack.c.l.b16 %v3061
        %v3128 = vunpack.c.h.b16 %v3061
        %v3129 = vunpack.c.l.b16 %v3062
        %v3130 = vunpack.c.h.b16 %v3062
        %v3131 = vunpack.c.l.b16 %v3063
        %v3132 = vunpack.c.h.b16 %v3063
        %v3133 = vunpack.c.l.b16 %v3064
        %v3134 = vunpack.c.h.b16 %v3064
        %v3135 = vunpack.c.l.b16 %v3065
        %v3136 = vunpack.c.h.b16 %v3065
        %v3137 = vunpack.c.l.b16 %v3066
        %v3138 = vunpack.c.h.b16 %v3066
        %v3139 = vunpack.c.l.b16 %v3067
        %v3140 = vunpack.c.h.b16 %v3067
        %v3141 = vunpack.c.l.b16 %v3068
        %v3142 = vunpack.c.h.b16 %v3068
        %v3143 = vunpack.c.l.b16 %v3069
        %v3144 = vunpack.c.h.b16 %v3069
        %v3145 = vunpack.c.l.b16 %v3070
        %v3146 = vunpack.c.h.b16 %v3070
        %v3147 = vunpack.c.l.b16 %v3071
        %v3148 = vunpack.c.h.b16 %v3071
        %v3149 = vunpack.c.l.b16 %v3072
        %v3150 = vunpack.c.h.b16 %v3072
        %v3151 = vunpack.c.l.b16 %v3073
        %v3152 = vunpack.c.h.b16 %v3073
        %v3153 = vunpack.c.l.b16 %v3074
        %v3154 = vunpack.c.h.b16 %v3074
        %v3155 = vunpack.c.l.b16 %v3075
        %v3156 = vunpack.c.h.b16 %v3075
        %v3157 = vunpack.c.l.b16 %v3076
        %v3158 = vunpack.c.h.b16 %v3076
        %v3159 = vunpack.c.l.b16 %v3077
        %v3160 = vunpack.c.h.b16 %v3077
        %v3161 = vunpack.c.l.b16 %v3078
        %v3162 = vunpack.c.h.b16 %v3078
        %v3163 = vunpack.c.l.b16 %v3079
        %v3164 = vunpack.c.h.b16 %v3079
        %v3165 = vunpack.c.l.b16 %v3080
        %v3166 = vunpack.c.h.b16 %v3080
        %v3167 = vunpack.c.l.b16 %v3081
        %v3168 = vunpack.c.h.b16 %v3081
        %v3169 = vunpack.c.l.b16 %v3082
        %v3170 = vunpack.c.h.b16 %v3082
        %v3171 = vunpack.c.l.b16 %v3083
        %v3172 = vunpack.c.h.b16 %v3083
        %v3173 = vunpack.c.l.b16 %v3084
        %v3174 = vunpack.c.h.b16 %v3084
        %v3175 = vunpack.c.l.b16 %v3085
        %v3176 = vunpack.c.h.b16 %v3085
        %v3177 = vunpack.c.l.b16 %v3086
        %v3178 = vunpack.c.h.b16 %v3086
        %v3179 = vunpack.c.l.b16 %v3087
        %v3180 = vunpack.c.h.b16 %v3087
        %v3181 = vunpack.c.l.b16 %v3088
        %v3182 = vunpack.c.h.b16 %v3088
        %v3183 = vunpack.c.l.b16 %v3089
        %v3184 = vunpack.c.h.b16 %v3089
        %v3185 = vunpack.c.l.b16 %v3090
        %v3186 = vunpack.c.h.b16 %v3090
        %v3187 = vpack.c.b16 %v3125, %v3123
        %v3188 = vpack.c.b16 %v3126, %v3124
        %v3189 = vpack.c.b16 %v3129, %v3127
        %v3190 = vpack.c.b16 %v3130, %v3128
        %v3191 = vpack.c.b16 %v3133, %v3131
        %v3192 = vpack.c.b16 %v3134, %v3132
        %v3193 = vpack.c.b16 %v3137, %v3135
        %v3194 = vpack.c.b16 %v3138, %v3136
        %v3195 = vpack.c.b16 %v3141, %v3139
        %v3196 = vpack.c.b16 %v3142, %v3140
        %v3197 = vpack.c.b16 %v3145, %v3143
        %v3198 = vpack.c.b16 %v3146, %v3144
        %v3199 = vpack.c.b16 %v3149, %v3147
        %v3200 = vpack.c.b16 %v3150, %v3148
        %v3201 = vpack.c.b16 %v3153, %v3151
        %v3202 = vpack.c.b16 %v3154, %v3152
        %v3203 = vpack.c.b16 %v3157, %v3155
        %v3204 = vpack.c.b16 %v3158, %v3156
        %v3205 = vpack.c.b16 %v3161, %v3159
        %v3206 = vpack.c.b16 %v3162, %v3160
        %v3207 = vpack.c.b16 %v3165, %v3163
        %v3208 = vpack.c.b16 %v3166, %v3164
        %v3209 = vpack.c.b16 %v3169, %v3167
        %v3210 = vpack.c.b16 %v3170, %v3168
        %v3211 = vpack.c.b16 %v3173, %v3171
        %v3212 = vpack.c.b16 %v3174, %v3172
        %v3213 = vpack.c.b16 %v3177, %v3175
        %v3214 = vpack.c.b16 %v3178, %v3176
        %v3215 = vpack.c.b16 %v3181, %v3179
        %v3216 = vpack.c.b16 %v3182, %v3180
        %v3217 = vpack.c.b16 %v3185, %v3183
        %v3218 = vpack.c.b16 %v3186, %v3184
        %3251 = vmatprep.subr.bf16.mxu0 %v3188
        %3252 = vmatpush1.bf16.msra.mxu0 %v3187
        %3253 = vmatprep.subr.bf16.mxu0 %v3190
        %3254 = vmatpush1.bf16.msra.mxu0 %v3189
        %3255 = vmatprep.subr.bf16.mxu0 %v3192
        %3256 = vmatpush1.bf16.msra.mxu0 %v3191
        %3257 = vmatprep.subr.bf16.mxu0 %v3194
        %3258 = vmatpush1.bf16.msra.mxu0 %v3193
        %3259 = vmatprep.subr.bf16.mxu0 %v3196
        %3260 = vmatpush1.bf16.msra.mxu0 %v3195
        %3261 = vmatprep.subr.bf16.mxu0 %v3198
        %3262 = vmatpush1.bf16.msra.mxu0 %v3197
        %3263 = vmatprep.subr.bf16.mxu0 %v3200
        %3264 = vmatpush1.bf16.msra.mxu0 %v3199
        %3265 = vmatprep.subr.bf16.mxu0 %v3202
        %3266 = vmatpush1.bf16.msra.mxu0 %v3201
        %3267 = vmatprep.subr.bf16.mxu0 %v3204
        %3268 = vmatpush1.bf16.msra.mxu0 %v3203
        %3269 = vmatprep.subr.bf16.mxu0 %v3206
        %3270 = vmatpush1.bf16.msra.mxu0 %v3205
        %3271 = vmatprep.subr.bf16.mxu0 %v3208
        %3272 = vmatpush1.bf16.msra.mxu0 %v3207
        %3273 = vmatprep.subr.bf16.mxu0 %v3210
        %3274 = vmatpush1.bf16.msra.mxu0 %v3209
        %3275 = vmatprep.subr.bf16.mxu0 %v3212
        %3276 = vmatpush1.bf16.msra.mxu0 %v3211
        %3277 = vmatprep.subr.bf16.mxu0 %v3214
        %3278 = vmatpush1.bf16.msra.mxu0 %v3213
        %3279 = vmatprep.subr.bf16.mxu0 %v3216
        %3280 = vmatpush1.bf16.msra.mxu0 %v3215
        %3281 = vmatprep.subr.bf16.mxu0 %v3218
        %3282 = vmatpush1.bf16.msra.mxu0 %v3217
        %3283 = vmatprep.mubr.bf16.mxu0 %v3058
        %3284 = vmatmul.mubr.bf16.gmra.mrb[0].mxu0 %v3057
        %v3285 = vpop.f32.mrb[0].mxu0
        %v3286 = vadd.f32 0.0, %v3285
        %v3287 = vpop.f32.mrb[0].mxu0
        %v3288 = vadd.f32 0.0, %v3287
        %v3289 = vpop.f32.mrb[0].mxu0
        %v3290 = vpop.f32.mrb[0].mxu0
        %3291 = vdwg.mxu0
        %v3294 = vcombine.low %v3286, %v3288
        %v3296 = vunpack.c.l.s4 1983009808
        %v3297 = vunpack.c.0.s8 %v3296
        %v3298 = vlaneseq
        %v3299 = vshrl.u32 %v3298, 7
        %v3300 = vsub.s32 %v3297, %v3299
        %v3301 = vrot.slane %v3294, %v3300
        %v3303 = vadd.f32 %v855, %v3301
        %v3304 = vmul.f32 %v3303, %v3303
        %v3307 = vunpack.c.l.s4 1983009808
        %v3308 = vunpack.c.0.s8 %v3307
        %v3309 = vlaneseq
        %v3310 = vshrl.u32 %v3309, 7
        %v3311 = vsub.s32 %v3308, %v3310
        %v3312 = vrot.slane %v3304, %v3311
        %v3313 = vcombine.high %v3312, %v3312
        %v3316 = vsel %vm868, %v3312, 0.0
        %v3317 = vsel %vm868, %v3313, 0.0
        %v3318 = vadd.f32 %v3316, %v3317
        %3319 = vadd.xlane.f32.xlu0 %v3318
        %v3320 = vpop.xlane.xlu0 %3319
        %v3321 = vmul.f32 %v3320, %v874
        %v3322 = vadd.f32 %v3321, 1e-05
        %v3323 = vrsqrt.pop %v3322
        %v3326 = vunpack.c.l.s4 269488144
        %v3327 = vunpack.c.0.s8 %v3326
        %v3328 = vlaneseq
        %v3329 = vshrl.u32 %v3328, 7
        %v3330 = vsub.s32 %v3327, %v3329
        %v3331 = vrot.slane %v3323, %v3330
        %v3333 = vmul.f32 %v3303, %v3331
        %v3334 = vld [vmem:[%s676] sm:$0x3]
        %v3336 = vlaneseq
        %v3337 = vshrl.u32 %v3336, 7
        %v3338 = vsub.s32 0, %v3337
        %v3339 = vrot.slane %v3334, %v3338
        %v3340 = vlaneseq
        %v3341 = vshrl.u32 %v3340, 7
        %v3342 = vsub.s32 1, %v3341
        %v3343 = vrot.slane %v3334, %v3342
        %v3344 = vcombine.low %v3339, %v3343
        %v3346 = vunpack.c.l.s4 1983009808
        %v3347 = vunpack.c.0.s8 %v3346
        %v3348 = vlaneseq
        %v3349 = vshrl.u32 %v3348, 7
        %v3350 = vsub.s32 %v3347, %v3349
        %v3351 = vrot.slane %v3344, %v3350
        %v3353 = vmul.f32 %v3333, %v3351
        %v3356 = vunpack.c.l.s4 1983009808
        %v3357 = vunpack.c.0.s8 %v3356
        %v3358 = vlaneseq
        %v3359 = vshrl.u32 %v3358, 7
        %v3360 = vsub.s32 %v3357, %v3359
        %v3361 = vrot.slane %v3353, %v3360
        %v3362 = vcombine.high %v3361, %v3361
        %v3365 = vpack.c.bf16 %v3361, %v3361
        %v3366 = vpack.c.bf16 %v3362, %v3362
        %v3367 = vld [vmem:[%s703] sm:$0xff]
        %v3368 = vld [vmem:[%s703 + $0x8] sm:$0xff]
        %v3369 = vld [vmem:[%s703 + $0x10] sm:$0xff]
        %v3370 = vld [vmem:[%s703 + $0x18] sm:$0xff]
        %v3371 = vld [vmem:[%s703 + $0x20] sm:$0xff]
        %v3372 = vld [vmem:[%s703 + $0x28] sm:$0xff]
        %v3373 = vld [vmem:[%s703 + $0x30] sm:$0xff]
        %v3374 = vld [vmem:[%s703 + $0x38] sm:$0xff]
        %v3375 = vld [vmem:[%s703 + $0x40] sm:$0xff]
        %v3376 = vld [vmem:[%s703 + $0x48] sm:$0xff]
        %v3377 = vld [vmem:[%s703 + $0x50] sm:$0xff]
        %v3378 = vld [vmem:[%s703 + $0x58] sm:$0xff]
        %v3379 = vld [vmem:[%s703 + $0x60] sm:$0xff]
        %v3380 = vld [vmem:[%s703 + $0x68] sm:$0xff]
        %v3381 = vld [vmem:[%s703 + $0x70] sm:$0xff]
        %v3382 = vld [vmem:[%s703 + $0x78] sm:$0xff]
        %v3383 = vld [vmem:[%s703 + $0x80] sm:$0xff]
        %v3384 = vld [vmem:[%s703 + $0x88] sm:$0xff]
        %v3385 = vld [vmem:[%s703 + $0x90] sm:$0xff]
        %v3386 = vld [vmem:[%s703 + $0x98] sm:$0xff]
        %v3387 = vld [vmem:[%s703 + $0xa0] sm:$0xff]
        %v3388 = vld [vmem:[%s703 + $0xa8] sm:$0xff]
        %v3389 = vld [vmem:[%s703 + $0xb0] sm:$0xff]
        %v3390 = vld [vmem:[%s703 + $0xb8] sm:$0xff]
        %v3391 = vld [vmem:[%s703 + $0xc0] sm:$0xff]
        %v3392 = vld [vmem:[%s703 + $0xc8] sm:$0xff]
        %v3393 = vld [vmem:[%s703 + $0xd0] sm:$0xff]
        %v3394 = vld [vmem:[%s703 + $0xd8] sm:$0xff]
        %v3395 = vld [vmem:[%s703 + $0xe0] sm:$0xff]
        %v3396 = vld [vmem:[%s703 + $0xe8] sm:$0xff]
        %v3397 = vld [vmem:[%s703 + $0xf0] sm:$0xff]
        %v3398 = vld [vmem:[%s703 + $0xf8] sm:$0xff]
        %v3399 = vld [vmem:[%s703 + $0x100] sm:$0xff]
        %v3400 = vld [vmem:[%s703 + $0x108] sm:$0xff]
        %v3401 = vld [vmem:[%s703 + $0x110] sm:$0xff]
        %v3402 = vld [vmem:[%s703 + $0x118] sm:$0xff]
        %v3403 = vld [vmem:[%s703 + $0x120] sm:$0xff]
        %v3404 = vld [vmem:[%s703 + $0x128] sm:$0xff]
        %v3405 = vld [vmem:[%s703 + $0x130] sm:$0xff]
        %v3406 = vld [vmem:[%s703 + $0x138] sm:$0xff]
        %v3407 = vld [vmem:[%s703 + $0x140] sm:$0xff]
        %v3408 = vld [vmem:[%s703 + $0x148] sm:$0xff]
        %v3409 = vld [vmem:[%s703 + $0x150] sm:$0xff]
        %v3410 = vld [vmem:[%s703 + $0x158] sm:$0xff]
        %v3411 = vld [vmem:[%s703 + $0x160] sm:$0xff]
        %v3412 = vld [vmem:[%s703 + $0x168] sm:$0xff]
        %v3413 = vld [vmem:[%s703 + $0x170] sm:$0xff]
        %v3414 = vld [vmem:[%s703 + $0x178] sm:$0xff]
        %v3415 = vld [vmem:[%s703 + $0x180] sm:$0xff]
        %v3416 = vld [vmem:[%s703 + $0x188] sm:$0xff]
        %v3417 = vld [vmem:[%s703 + $0x190] sm:$0xff]
        %v3418 = vld [vmem:[%s703 + $0x198] sm:$0xff]
        %v3419 = vld [vmem:[%s703 + $0x1a0] sm:$0xff]
        %v3420 = vld [vmem:[%s703 + $0x1a8] sm:$0xff]
        %v3421 = vld [vmem:[%s703 + $0x1b0] sm:$0xff]
        %v3422 = vld [vmem:[%s703 + $0x1b8] sm:$0xff]
        %v3423 = vld [vmem:[%s703 + $0x1c0] sm:$0xff]
        %v3424 = vld [vmem:[%s703 + $0x1c8] sm:$0xff]
        %v3425 = vld [vmem:[%s703 + $0x1d0] sm:$0xff]
        %v3426 = vld [vmem:[%s703 + $0x1d8] sm:$0xff]
        %v3427 = vld [vmem:[%s703 + $0x1e0] sm:$0xff]
        %v3428 = vld [vmem:[%s703 + $0x1e8] sm:$0xff]
        %v3429 = vld [vmem:[%s703 + $0x1f0] sm:$0xff]
        %v3430 = vld [vmem:[%s703 + $0x1f8] sm:$0xff]
        %v3431 = vld [vmem:[%s703 + $0x200] sm:$0xff]
        %v3432 = vld [vmem:[%s703 + $0x208] sm:$0xff]
        %v3433 = vld [vmem:[%s703 + $0x210] sm:$0xff]
        %v3434 = vld [vmem:[%s703 + $0x218] sm:$0xff]
        %v3435 = vld [vmem:[%s703 + $0x220] sm:$0xff]
        %v3436 = vld [vmem:[%s703 + $0x228] sm:$0xff]
        %v3437 = vld [vmem:[%s703 + $0x230] sm:$0xff]
        %v3438 = vld [vmem:[%s703 + $0x238] sm:$0xff]
        %v3439 = vld [vmem:[%s703 + $0x240] sm:$0xff]
        %v3440 = vld [vmem:[%s703 + $0x248] sm:$0xff]
        %v3441 = vld [vmem:[%s703 + $0x250] sm:$0xff]
        %v3442 = vld [vmem:[%s703 + $0x258] sm:$0xff]
        %v3443 = vld [vmem:[%s703 + $0x260] sm:$0xff]
        %v3444 = vld [vmem:[%s703 + $0x268] sm:$0xff]
        %v3445 = vld [vmem:[%s703 + $0x270] sm:$0xff]
        %v3446 = vld [vmem:[%s703 + $0x278] sm:$0xff]
        %v3447 = vld [vmem:[%s703 + $0x280] sm:$0xff]
        %v3448 = vld [vmem:[%s703 + $0x288] sm:$0xff]
        %v3449 = vld [vmem:[%s703 + $0x290] sm:$0xff]
        %v3450 = vld [vmem:[%s703 + $0x298] sm:$0xff]
        %v3451 = vld [vmem:[%s703 + $0x2a0] sm:$0xff]
        %v3452 = vld [vmem:[%s703 + $0x2a8] sm:$0xff]
        %v3453 = vld [vmem:[%s703 + $0x2b0] sm:$0xff]
        %v3454 = vld [vmem:[%s703 + $0x2b8] sm:$0xff]
        %v3455 = vld [vmem:[%s703 + $0x2c0] sm:$0xff]
        %v3456 = vld [vmem:[%s703 + $0x2c8] sm:$0xff]
        %v3457 = vld [vmem:[%s703 + $0x2d0] sm:$0xff]
        %v3458 = vld [vmem:[%s703 + $0x2d8] sm:$0xff]
        %v3459 = vld [vmem:[%s703 + $0x2e0] sm:$0xff]
        %v3460 = vld [vmem:[%s703 + $0x2e8] sm:$0xff]
        %v3461 = vld [vmem:[%s703 + $0x2f0] sm:$0xff]
        %v3462 = vld [vmem:[%s703 + $0x2f8] sm:$0xff]
        %v3463 = vld [vmem:[%s703 + $0x300] sm:$0xff]
        %v3464 = vld [vmem:[%s703 + $0x308] sm:$0xff]
        %v3465 = vld [vmem:[%s703 + $0x310] sm:$0xff]
        %v3466 = vld [vmem:[%s703 + $0x318] sm:$0xff]
        %v3467 = vld [vmem:[%s703 + $0x320] sm:$0xff]
        %v3468 = vld [vmem:[%s703 + $0x328] sm:$0xff]
        %v3469 = vld [vmem:[%s703 + $0x330] sm:$0xff]
        %v3470 = vld [vmem:[%s703 + $0x338] sm:$0xff]
        %v3471 = vld [vmem:[%s703 + $0x340] sm:$0xff]
        %v3472 = vld [vmem:[%s703 + $0x348] sm:$0xff]
        %v3473 = vld [vmem:[%s703 + $0x350] sm:$0xff]
        %v3474 = vld [vmem:[%s703 + $0x358] sm:$0xff]
        %v3475 = vld [vmem:[%s703 + $0x360] sm:$0xff]
        %v3476 = vld [vmem:[%s703 + $0x368] sm:$0xff]
        %v3477 = vld [vmem:[%s703 + $0x370] sm:$0xff]
        %v3478 = vld [vmem:[%s703 + $0x378] sm:$0xff]
        %v3479 = vld [vmem:[%s703 + $0x380] sm:$0xff]
        %v3480 = vld [vmem:[%s703 + $0x388] sm:$0xff]
        %v3481 = vld [vmem:[%s703 + $0x390] sm:$0xff]
        %v3482 = vld [vmem:[%s703 + $0x398] sm:$0xff]
        %v3483 = vld [vmem:[%s703 + $0x3a0] sm:$0xff]
        %v3484 = vld [vmem:[%s703 + $0x3a8] sm:$0xff]
        %v3485 = vld [vmem:[%s703 + $0x3b0] sm:$0xff]
        %v3486 = vld [vmem:[%s703 + $0x3b8] sm:$0xff]
        %v3487 = vld [vmem:[%s703 + $0x3c0] sm:$0xff]
        %v3488 = vld [vmem:[%s703 + $0x3c8] sm:$0xff]
        %v3489 = vld [vmem:[%s703 + $0x3d0] sm:$0xff]
        %v3490 = vld [vmem:[%s703 + $0x3d8] sm:$0xff]
        %v3491 = vld [vmem:[%s703 + $0x3e0] sm:$0xff]
        %v3492 = vld [vmem:[%s703 + $0x3e8] sm:$0xff]
        %v3493 = vld [vmem:[%s703 + $0x3f0] sm:$0xff]
        %v3494 = vld [vmem:[%s703 + $0x3f8] sm:$0xff]
        %v3495 = vld [vmem:[%s703 + $0x400] sm:$0xff]
        %v3496 = vld [vmem:[%s703 + $0x408] sm:$0xff]
        %v3497 = vld [vmem:[%s703 + $0x410] sm:$0xff]
        %v3498 = vld [vmem:[%s703 + $0x418] sm:$0xff]
        %v3499 = vld [vmem:[%s703 + $0x420] sm:$0xff]
        %v3500 = vld [vmem:[%s703 + $0x428] sm:$0xff]
        %v3501 = vld [vmem:[%s703 + $0x430] sm:$0xff]
        %v3502 = vld [vmem:[%s703 + $0x438] sm:$0xff]
        %v3503 = vld [vmem:[%s703 + $0x440] sm:$0xff]
        %v3504 = vld [vmem:[%s703 + $0x448] sm:$0xff]
        %v3505 = vld [vmem:[%s703 + $0x450] sm:$0xff]
        %v3506 = vld [vmem:[%s703 + $0x458] sm:$0xff]
        %v3507 = vld [vmem:[%s703 + $0x460] sm:$0xff]
        %v3508 = vld [vmem:[%s703 + $0x468] sm:$0xff]
        %v3509 = vld [vmem:[%s703 + $0x470] sm:$0xff]
        %v3510 = vld [vmem:[%s703 + $0x478] sm:$0xff]
        %v3511 = vld [vmem:[%s703 + $0x480] sm:$0xff]
        %v3512 = vld [vmem:[%s703 + $0x488] sm:$0xff]
        %v3513 = vld [vmem:[%s703 + $0x490] sm:$0xff]
        %v3514 = vld [vmem:[%s703 + $0x498] sm:$0xff]
        %v3515 = vld [vmem:[%s703 + $0x4a0] sm:$0xff]
        %v3516 = vld [vmem:[%s703 + $0x4a8] sm:$0xff]
        %v3517 = vld [vmem:[%s703 + $0x4b0] sm:$0xff]
        %v3518 = vld [vmem:[%s703 + $0x4b8] sm:$0xff]
        %v3519 = vld [vmem:[%s703 + $0x4c0] sm:$0xff]
        %v3520 = vld [vmem:[%s703 + $0x4c8] sm:$0xff]
        %v3521 = vld [vmem:[%s703 + $0x4d0] sm:$0xff]
        %v3522 = vld [vmem:[%s703 + $0x4d8] sm:$0xff]
        %v3523 = vld [vmem:[%s703 + $0x4e0] sm:$0xff]
        %v3524 = vld [vmem:[%s703 + $0x4e8] sm:$0xff]
        %v3525 = vld [vmem:[%s703 + $0x4f0] sm:$0xff]
        %v3526 = vld [vmem:[%s703 + $0x4f8] sm:$0xff]
        %v3527 = vld [vmem:[%s703 + $0x500] sm:$0xff]
        %v3528 = vld [vmem:[%s703 + $0x508] sm:$0xff]
        %v3529 = vld [vmem:[%s703 + $0x510] sm:$0xff]
        %v3530 = vld [vmem:[%s703 + $0x518] sm:$0xff]
        %v3531 = vld [vmem:[%s703 + $0x520] sm:$0xff]
        %v3532 = vld [vmem:[%s703 + $0x528] sm:$0xff]
        %v3533 = vld [vmem:[%s703 + $0x530] sm:$0xff]
        %v3534 = vld [vmem:[%s703 + $0x538] sm:$0xff]
        %v3535 = vld [vmem:[%s703 + $0x540] sm:$0xff]
        %v3536 = vld [vmem:[%s703 + $0x548] sm:$0xff]
        %v3537 = vld [vmem:[%s703 + $0x550] sm:$0xff]
        %v3538 = vld [vmem:[%s703 + $0x558] sm:$0xff]
        %v3539 = vld [vmem:[%s703 + $0x560] sm:$0xff]
        %v3540 = vld [vmem:[%s703 + $0x568] sm:$0xff]
        %v3541 = vld [vmem:[%s703 + $0x570] sm:$0xff]
        %v3542 = vld [vmem:[%s703 + $0x578] sm:$0xff]
        %v3543 = vld [vmem:[%s703 + $0x580] sm:$0xff]
        %v3544 = vld [vmem:[%s703 + $0x588] sm:$0xff]
        %v3545 = vld [vmem:[%s703 + $0x590] sm:$0xff]
        %v3546 = vld [vmem:[%s703 + $0x598] sm:$0xff]
        %v3547 = vld [vmem:[%s703 + $0x5a0] sm:$0xff]
        %v3548 = vld [vmem:[%s703 + $0x5a8] sm:$0xff]
        %v3549 = vld [vmem:[%s703 + $0x5b0] sm:$0xff]
        %v3550 = vld [vmem:[%s703 + $0x5b8] sm:$0xff]
        %v3551 = vld [vmem:[%s703 + $0x5c0] sm:$0xff]
        %v3552 = vld [vmem:[%s703 + $0x5c8] sm:$0xff]
        %v3553 = vld [vmem:[%s703 + $0x5d0] sm:$0xff]
        %v3554 = vld [vmem:[%s703 + $0x5d8] sm:$0xff]
        %v3555 = vld [vmem:[%s703 + $0x5e0] sm:$0xff]
        %v3556 = vld [vmem:[%s703 + $0x5e8] sm:$0xff]
        %v3557 = vld [vmem:[%s703 + $0x5f0] sm:$0xff]
        %v3558 = vld [vmem:[%s703 + $0x5f8] sm:$0xff]
        %v3751 = vunpack.c.l.b16 %v3367
        %v3752 = vunpack.c.h.b16 %v3367
        %v3753 = vunpack.c.l.b16 %v3368
        %v3754 = vunpack.c.h.b16 %v3368
        %v3755 = vunpack.c.l.b16 %v3369
        %v3756 = vunpack.c.h.b16 %v3369
        %v3757 = vunpack.c.l.b16 %v3370
        %v3758 = vunpack.c.h.b16 %v3370
        %v3759 = vunpack.c.l.b16 %v3371
        %v3760 = vunpack.c.h.b16 %v3371
        %v3761 = vunpack.c.l.b16 %v3372
        %v3762 = vunpack.c.h.b16 %v3372
        %v3763 = vunpack.c.l.b16 %v3373
        %v3764 = vunpack.c.h.b16 %v3373
        %v3765 = vunpack.c.l.b16 %v3374
        %v3766 = vunpack.c.h.b16 %v3374
        %v3767 = vunpack.c.l.b16 %v3375
        %v3768 = vunpack.c.h.b16 %v3375
        %v3769 = vunpack.c.l.b16 %v3376
        %v3770 = vunpack.c.h.b16 %v3376
        %v3771 = vunpack.c.l.b16 %v3377
        %v3772 = vunpack.c.h.b16 %v3377
        %v3773 = vunpack.c.l.b16 %v3378
        %v3774 = vunpack.c.h.b16 %v3378
        %v3775 = vunpack.c.l.b16 %v3379
        %v3776 = vunpack.c.h.b16 %v3379
        %v3777 = vunpack.c.l.b16 %v3380
        %v3778 = vunpack.c.h.b16 %v3380
        %v3779 = vunpack.c.l.b16 %v3381
        %v3780 = vunpack.c.h.b16 %v3381
        %v3781 = vunpack.c.l.b16 %v3382
        %v3782 = vunpack.c.h.b16 %v3382
        %v3783 = vunpack.c.l.b16 %v3383
        %v3784 = vunpack.c.h.b16 %v3383
        %v3785 = vunpack.c.l.b16 %v3384
        %v3786 = vunpack.c.h.b16 %v3384
        %v3787 = vunpack.c.l.b16 %v3385
        %v3788 = vunpack.c.h.b16 %v3385
        %v3789 = vunpack.c.l.b16 %v3386
        %v3790 = vunpack.c.h.b16 %v3386
        %v3791 = vunpack.c.l.b16 %v3387
        %v3792 = vunpack.c.h.b16 %v3387
        %v3793 = vunpack.c.l.b16 %v3388
        %v3794 = vunpack.c.h.b16 %v3388
        %v3795 = vunpack.c.l.b16 %v3389
        %v3796 = vunpack.c.h.b16 %v3389
        %v3797 = vunpack.c.l.b16 %v3390
        %v3798 = vunpack.c.h.b16 %v3390
        %v3799 = vunpack.c.l.b16 %v3391
        %v3800 = vunpack.c.h.b16 %v3391
        %v3801 = vunpack.c.l.b16 %v3392
        %v3802 = vunpack.c.h.b16 %v3392
        %v3803 = vunpack.c.l.b16 %v3393
        %v3804 = vunpack.c.h.b16 %v3393
        %v3805 = vunpack.c.l.b16 %v3394
        %v3806 = vunpack.c.h.b16 %v3394
        %v3807 = vunpack.c.l.b16 %v3395
        %v3808 = vunpack.c.h.b16 %v3395
        %v3809 = vunpack.c.l.b16 %v3396
        %v3810 = vunpack.c.h.b16 %v3396
        %v3811 = vunpack.c.l.b16 %v3397
        %v3812 = vunpack.c.h.b16 %v3397
        %v3813 = vunpack.c.l.b16 %v3398
        %v3814 = vunpack.c.h.b16 %v3398
        %v3815 = vunpack.c.l.b16 %v3399
        %v3816 = vunpack.c.h.b16 %v3399
        %v3817 = vunpack.c.l.b16 %v3400
        %v3818 = vunpack.c.h.b16 %v3400
        %v3819 = vunpack.c.l.b16 %v3401
        %v3820 = vunpack.c.h.b16 %v3401
        %v3821 = vunpack.c.l.b16 %v3402
        %v3822 = vunpack.c.h.b16 %v3402
        %v3823 = vunpack.c.l.b16 %v3403
        %v3824 = vunpack.c.h.b16 %v3403
        %v3825 = vunpack.c.l.b16 %v3404
        %v3826 = vunpack.c.h.b16 %v3404
        %v3827 = vunpack.c.l.b16 %v3405
        %v3828 = vunpack.c.h.b16 %v3405
        %v3829 = vunpack.c.l.b16 %v3406
        %v3830 = vunpack.c.h.b16 %v3406
        %v3831 = vunpack.c.l.b16 %v3407
        %v3832 = vunpack.c.h.b16 %v3407
        %v3833 = vunpack.c.l.b16 %v3408
        %v3834 = vunpack.c.h.b16 %v3408
        %v3835 = vunpack.c.l.b16 %v3409
        %v3836 = vunpack.c.h.b16 %v3409
        %v3837 = vunpack.c.l.b16 %v3410
        %v3838 = vunpack.c.h.b16 %v3410
        %v3839 = vunpack.c.l.b16 %v3411
        %v3840 = vunpack.c.h.b16 %v3411
        %v3841 = vunpack.c.l.b16 %v3412
        %v3842 = vunpack.c.h.b16 %v3412
        %v3843 = vunpack.c.l.b16 %v3413
        %v3844 = vunpack.c.h.b16 %v3413
        %v3845 = vunpack.c.l.b16 %v3414
        %v3846 = vunpack.c.h.b16 %v3414
        %v3847 = vunpack.c.l.b16 %v3415
        %v3848 = vunpack.c.h.b16 %v3415
        %v3849 = vunpack.c.l.b16 %v3416
        %v3850 = vunpack.c.h.b16 %v3416
        %v3851 = vunpack.c.l.b16 %v3417
        %v3852 = vunpack.c.h.b16 %v3417
        %v3853 = vunpack.c.l.b16 %v3418
        %v3854 = vunpack.c.h.b16 %v3418
        %v3855 = vunpack.c.l.b16 %v3419
        %v3856 = vunpack.c.h.b16 %v3419
        %v3857 = vunpack.c.l.b16 %v3420
        %v3858 = vunpack.c.h.b16 %v3420
        %v3859 = vunpack.c.l.b16 %v3421
        %v3860 = vunpack.c.h.b16 %v3421
        %v3861 = vunpack.c.l.b16 %v3422
        %v3862 = vunpack.c.h.b16 %v3422
        %v3863 = vunpack.c.l.b16 %v3423
        %v3864 = vunpack.c.h.b16 %v3423
        %v3865 = vunpack.c.l.b16 %v3424
        %v3866 = vunpack.c.h.b16 %v3424
        %v3867 = vunpack.c.l.b16 %v3425
        %v3868 = vunpack.c.h.b16 %v3425
        %v3869 = vunpack.c.l.b16 %v3426
        %v3870 = vunpack.c.h.b16 %v3426
        %v3871 = vunpack.c.l.b16 %v3427
        %v3872 = vunpack.c.h.b16 %v3427
        %v3873 = vunpack.c.l.b16 %v3428
        %v3874 = vunpack.c.h.b16 %v3428
        %v3875 = vunpack.c.l.b16 %v3429
        %v3876 = vunpack.c.h.b16 %v3429
        %v3877 = vunpack.c.l.b16 %v3430
        %v3878 = vunpack.c.h.b16 %v3430
        %v3879 = vunpack.c.l.b16 %v3431
        %v3880 = vunpack.c.h.b16 %v3431
        %v3881 = vunpack.c.l.b16 %v3432
        %v3882 = vunpack.c.h.b16 %v3432
        %v3883 = vunpack.c.l.b16 %v3433
        %v3884 = vunpack.c.h.b16 %v3433
        %v3885 = vunpack.c.l.b16 %v3434
        %v3886 = vunpack.c.h.b16 %v3434
        %v3887 = vunpack.c.l.b16 %v3435
        %v3888 = vunpack.c.h.b16 %v3435
        %v3889 = vunpack.c.l.b16 %v3436
        %v3890 = vunpack.c.h.b16 %v3436
        %v3891 = vunpack.c.l.b16 %v3437
        %v3892 = vunpack.c.h.b16 %v3437
        %v3893 = vunpack.c.l.b16 %v3438
        %v3894 = vunpack.c.h.b16 %v3438
        %v3895 = vunpack.c.l.b16 %v3439
        %v3896 = vunpack.c.h.b16 %v3439
        %v3897 = vunpack.c.l.b16 %v3440
        %v3898 = vunpack.c.h.b16 %v3440
        %v3899 = vunpack.c.l.b16 %v3441
        %v3900 = vunpack.c.h.b16 %v3441
        %v3901 = vunpack.c.l.b16 %v3442
        %v3902 = vunpack.c.h.b16 %v3442
        %v3903 = vunpack.c.l.b16 %v3443
        %v3904 = vunpack.c.h.b16 %v3443
        %v3905 = vunpack.c.l.b16 %v3444
        %v3906 = vunpack.c.h.b16 %v3444
        %v3907 = vunpack.c.l.b16 %v3445
        %v3908 = vunpack.c.h.b16 %v3445
        %v3909 = vunpack.c.l.b16 %v3446
        %v3910 = vunpack.c.h.b16 %v3446
        %v3911 = vunpack.c.l.b16 %v3447
        %v3912 = vunpack.c.h.b16 %v3447
        %v3913 = vunpack.c.l.b16 %v3448
        %v3914 = vunpack.c.h.b16 %v3448
        %v3915 = vunpack.c.l.b16 %v3449
        %v3916 = vunpack.c.h.b16 %v3449
        %v3917 = vunpack.c.l.b16 %v3450
        %v3918 = vunpack.c.h.b16 %v3450
        %v3919 = vunpack.c.l.b16 %v3451
        %v3920 = vunpack.c.h.b16 %v3451
        %v3921 = vunpack.c.l.b16 %v3452
        %v3922 = vunpack.c.h.b16 %v3452
        %v3923 = vunpack.c.l.b16 %v3453
        %v3924 = vunpack.c.h.b16 %v3453
        %v3925 = vunpack.c.l.b16 %v3454
        %v3926 = vunpack.c.h.b16 %v3454
        %v3927 = vunpack.c.l.b16 %v3455
        %v3928 = vunpack.c.h.b16 %v3455
        %v3929 = vunpack.c.l.b16 %v3456
        %v3930 = vunpack.c.h.b16 %v3456
        %v3931 = vunpack.c.l.b16 %v3457
        %v3932 = vunpack.c.h.b16 %v3457
        %v3933 = vunpack.c.l.b16 %v3458
        %v3934 = vunpack.c.h.b16 %v3458
        %v3935 = vunpack.c.l.b16 %v3459
        %v3936 = vunpack.c.h.b16 %v3459
        %v3937 = vunpack.c.l.b16 %v3460
        %v3938 = vunpack.c.h.b16 %v3460
        %v3939 = vunpack.c.l.b16 %v3461
        %v3940 = vunpack.c.h.b16 %v3461
        %v3941 = vunpack.c.l.b16 %v3462
        %v3942 = vunpack.c.h.b16 %v3462
        %v3943 = vunpack.c.l.b16 %v3463
        %v3944 = vunpack.c.h.b16 %v3463
        %v3945 = vunpack.c.l.b16 %v3464
        %v3946 = vunpack.c.h.b16 %v3464
        %v3947 = vunpack.c.l.b16 %v3465
        %v3948 = vunpack.c.h.b16 %v3465
        %v3949 = vunpack.c.l.b16 %v3466
        %v3950 = vunpack.c.h.b16 %v3466
        %v3951 = vunpack.c.l.b16 %v3467
        %v3952 = vunpack.c.h.b16 %v3467
        %v3953 = vunpack.c.l.b16 %v3468
        %v3954 = vunpack.c.h.b16 %v3468
        %v3955 = vunpack.c.l.b16 %v3469
        %v3956 = vunpack.c.h.b16 %v3469
        %v3957 = vunpack.c.l.b16 %v3470
        %v3958 = vunpack.c.h.b16 %v3470
        %v3959 = vunpack.c.l.b16 %v3471
        %v3960 = vunpack.c.h.b16 %v3471
        %v3961 = vunpack.c.l.b16 %v3472
        %v3962 = vunpack.c.h.b16 %v3472
        %v3963 = vunpack.c.l.b16 %v3473
        %v3964 = vunpack.c.h.b16 %v3473
        %v3965 = vunpack.c.l.b16 %v3474
        %v3966 = vunpack.c.h.b16 %v3474
        %v3967 = vunpack.c.l.b16 %v3475
        %v3968 = vunpack.c.h.b16 %v3475
        %v3969 = vunpack.c.l.b16 %v3476
        %v3970 = vunpack.c.h.b16 %v3476
        %v3971 = vunpack.c.l.b16 %v3477
        %v3972 = vunpack.c.h.b16 %v3477
        %v3973 = vunpack.c.l.b16 %v3478
        %v3974 = vunpack.c.h.b16 %v3478
        %v3975 = vunpack.c.l.b16 %v3479
        %v3976 = vunpack.c.h.b16 %v3479
        %v3977 = vunpack.c.l.b16 %v3480
        %v3978 = vunpack.c.h.b16 %v3480
        %v3979 = vunpack.c.l.b16 %v3481
        %v3980 = vunpack.c.h.b16 %v3481
        %v3981 = vunpack.c.l.b16 %v3482
        %v3982 = vunpack.c.h.b16 %v3482
        %v3983 = vunpack.c.l.b16 %v3483
        %v3984 = vunpack.c.h.b16 %v3483
        %v3985 = vunpack.c.l.b16 %v3484
        %v3986 = vunpack.c.h.b16 %v3484
        %v3987 = vunpack.c.l.b16 %v3485
        %v3988 = vunpack.c.h.b16 %v3485
        %v3989 = vunpack.c.l.b16 %v3486
        %v3990 = vunpack.c.h.b16 %v3486
        %v3991 = vunpack.c.l.b16 %v3487
        %v3992 = vunpack.c.h.b16 %v3487
        %v3993 = vunpack.c.l.b16 %v3488
        %v3994 = vunpack.c.h.b16 %v3488
        %v3995 = vunpack.c.l.b16 %v3489
        %v3996 = vunpack.c.h.b16 %v3489
        %v3997 = vunpack.c.l.b16 %v3490
        %v3998 = vunpack.c.h.b16 %v3490
        %v3999 = vunpack.c.l.b16 %v3491
        %v4000 = vunpack.c.h.b16 %v3491
        %v4001 = vunpack.c.l.b16 %v3492
        %v4002 = vunpack.c.h.b16 %v3492
        %v4003 = vunpack.c.l.b16 %v3493
        %v4004 = vunpack.c.h.b16 %v3493
        %v4005 = vunpack.c.l.b16 %v3494
        %v4006 = vunpack.c.h.b16 %v3494
        %v4007 = vunpack.c.l.b16 %v3495
        %v4008 = vunpack.c.h.b16 %v3495
        %v4009 = vunpack.c.l.b16 %v3496
        %v4010 = vunpack.c.h.b16 %v3496
        %v4011 = vunpack.c.l.b16 %v3497
        %v4012 = vunpack.c.h.b16 %v3497
        %v4013 = vunpack.c.l.b16 %v3498
        %v4014 = vunpack.c.h.b16 %v3498
        %v4015 = vunpack.c.l.b16 %v3499
        %v4016 = vunpack.c.h.b16 %v3499
        %v4017 = vunpack.c.l.b16 %v3500
        %v4018 = vunpack.c.h.b16 %v3500
        %v4019 = vunpack.c.l.b16 %v3501
        %v4020 = vunpack.c.h.b16 %v3501
        %v4021 = vunpack.c.l.b16 %v3502
        %v4022 = vunpack.c.h.b16 %v3502
        %v4023 = vunpack.c.l.b16 %v3503
        %v4024 = vunpack.c.h.b16 %v3503
        %v4025 = vunpack.c.l.b16 %v3504
        %v4026 = vunpack.c.h.b16 %v3504
        %v4027 = vunpack.c.l.b16 %v3505
        %v4028 = vunpack.c.h.b16 %v3505
        %v4029 = vunpack.c.l.b16 %v3506
        %v4030 = vunpack.c.h.b16 %v3506
        %v4031 = vunpack.c.l.b16 %v3507
        %v4032 = vunpack.c.h.b16 %v3507
        %v4033 = vunpack.c.l.b16 %v3508
        %v4034 = vunpack.c.h.b16 %v3508
        %v4035 = vunpack.c.l.b16 %v3509
        %v4036 = vunpack.c.h.b16 %v3509
        %v4037 = vunpack.c.l.b16 %v3510
        %v4038 = vunpack.c.h.b16 %v3510
        %v4039 = vunpack.c.l.b16 %v3511
        %v4040 = vunpack.c.h.b16 %v3511
        %v4041 = vunpack.c.l.b16 %v3512
        %v4042 = vunpack.c.h.b16 %v3512
        %v4043 = vunpack.c.l.b16 %v3513
        %v4044 = vunpack.c.h.b16 %v3513
        %v4045 = vunpack.c.l.b16 %v3514
        %v4046 = vunpack.c.h.b16 %v3514
        %v4047 = vunpack.c.l.b16 %v3515
        %v4048 = vunpack.c.h.b16 %v3515
        %v4049 = vunpack.c.l.b16 %v3516
        %v4050 = vunpack.c.h.b16 %v3516
        %v4051 = vunpack.c.l.b16 %v3517
        %v4052 = vunpack.c.h.b16 %v3517
        %v4053 = vunpack.c.l.b16 %v3518
        %v4054 = vunpack.c.h.b16 %v3518
        %v4055 = vunpack.c.l.b16 %v3519
        %v4056 = vunpack.c.h.b16 %v3519
        %v4057 = vunpack.c.l.b16 %v3520
        %v4058 = vunpack.c.h.b16 %v3520
        %v4059 = vunpack.c.l.b16 %v3521
        %v4060 = vunpack.c.h.b16 %v3521
        %v4061 = vunpack.c.l.b16 %v3522
        %v4062 = vunpack.c.h.b16 %v3522
        %v4063 = vunpack.c.l.b16 %v3523
        %v4064 = vunpack.c.h.b16 %v3523
        %v4065 = vunpack.c.l.b16 %v3524
        %v4066 = vunpack.c.h.b16 %v3524
        %v4067 = vunpack.c.l.b16 %v3525
        %v4068 = vunpack.c.h.b16 %v3525
        %v4069 = vunpack.c.l.b16 %v3526
        %v4070 = vunpack.c.h.b16 %v3526
        %v4071 = vunpack.c.l.b16 %v3527
        %v4072 = vunpack.c.h.b16 %v3527
        %v4073 = vunpack.c.l.b16 %v3528
        %v4074 = vunpack.c.h.b16 %v3528
        %v4075 = vunpack.c.l.b16 %v3529
        %v4076 = vunpack.c.h.b16 %v3529
        %v4077 = vunpack.c.l.b16 %v3530
        %v4078 = vunpack.c.h.b16 %v3530
        %v4079 = vunpack.c.l.b16 %v3531
        %v4080 = vunpack.c.h.b16 %v3531
        %v4081 = vunpack.c.l.b16 %v3532
        %v4082 = vunpack.c.h.b16 %v3532
        %v4083 = vunpack.c.l.b16 %v3533
        %v4084 = vunpack.c.h.b16 %v3533
        %v4085 = vunpack.c.l.b16 %v3534
        %v4086 = vunpack.c.h.b16 %v3534
        %v4087 = vunpack.c.l.b16 %v3535
        %v4088 = vunpack.c.h.b16 %v3535
        %v4089 = vunpack.c.l.b16 %v3536
        %v4090 = vunpack.c.h.b16 %v3536
        %v4091 = vunpack.c.l.b16 %v3537
        %v4092 = vunpack.c.h.b16 %v3537
        %v4093 = vunpack.c.l.b16 %v3538
        %v4094 = vunpack.c.h.b16 %v3538
        %v4095 = vunpack.c.l.b16 %v3539
        %v4096 = vunpack.c.h.b16 %v3539
        %v4097 = vunpack.c.l.b16 %v3540
        %v4098 = vunpack.c.h.b16 %v3540
        %v4099 = vunpack.c.l.b16 %v3541
        %v4100 = vunpack.c.h.b16 %v3541
        %v4101 = vunpack.c.l.b16 %v3542
        %v4102 = vunpack.c.h.b16 %v3542
        %v4103 = vunpack.c.l.b16 %v3543
        %v4104 = vunpack.c.h.b16 %v3543
        %v4105 = vunpack.c.l.b16 %v3544
        %v4106 = vunpack.c.h.b16 %v3544
        %v4107 = vunpack.c.l.b16 %v3545
        %v4108 = vunpack.c.h.b16 %v3545
        %v4109 = vunpack.c.l.b16 %v3546
        %v4110 = vunpack.c.h.b16 %v3546
        %v4111 = vunpack.c.l.b16 %v3547
        %v4112 = vunpack.c.h.b16 %v3547
        %v4113 = vunpack.c.l.b16 %v3548
        %v4114 = vunpack.c.h.b16 %v3548
        %v4115 = vunpack.c.l.b16 %v3549
        %v4116 = vunpack.c.h.b16 %v3549
        %v4117 = vunpack.c.l.b16 %v3550
        %v4118 = vunpack.c.h.b16 %v3550
        %v4119 = vunpack.c.l.b16 %v3551
        %v4120 = vunpack.c.h.b16 %v3551
        %v4121 = vunpack.c.l.b16 %v3552
        %v4122 = vunpack.c.h.b16 %v3552
        %v4123 = vunpack.c.l.b16 %v3553
        %v4124 = vunpack.c.h.b16 %v3553
        %v4125 = vunpack.c.l.b16 %v3554
        %v4126 = vunpack.c.h.b16 %v3554
        %v4127 = vunpack.c.l.b16 %v3555
        %v4128 = vunpack.c.h.b16 %v3555
        %v4129 = vunpack.c.l.b16 %v3556
        %v4130 = vunpack.c.h.b16 %v3556
        %v4131 = vunpack.c.l.b16 %v3557
        %v4132 = vunpack.c.h.b16 %v3557
        %v4133 = vunpack.c.l.b16 %v3558
        %v4134 = vunpack.c.h.b16 %v3558
        %v4135 = vpack.c.b16 %v3763, %v3751
        %v4136 = vpack.c.b16 %v3764, %v3752
        %v4137 = vpack.c.b16 %v3765, %v3753
        %v4138 = vpack.c.b16 %v3766, %v3754
        %v4139 = vpack.c.b16 %v3767, %v3755
        %v4140 = vpack.c.b16 %v3768, %v3756
        %v4141 = vpack.c.b16 %v3769, %v3757
        %v4142 = vpack.c.b16 %v3770, %v3758
        %v4143 = vpack.c.b16 %v3771, %v3759
        %v4144 = vpack.c.b16 %v3772, %v3760
        %v4145 = vpack.c.b16 %v3773, %v3761
        %v4146 = vpack.c.b16 %v3774, %v3762
        %v4147 = vpack.c.b16 %v3787, %v3775
        %v4148 = vpack.c.b16 %v3788, %v3776
        %v4149 = vpack.c.b16 %v3789, %v3777
        %v4150 = vpack.c.b16 %v3790, %v3778
        %v4151 = vpack.c.b16 %v3791, %v3779
        %v4152 = vpack.c.b16 %v3792, %v3780
        %v4153 = vpack.c.b16 %v3793, %v3781
        %v4154 = vpack.c.b16 %v3794, %v3782
        %v4155 = vpack.c.b16 %v3795, %v3783
        %v4156 = vpack.c.b16 %v3796, %v3784
        %v4157 = vpack.c.b16 %v3797, %v3785
        %v4158 = vpack.c.b16 %v3798, %v3786
        %v4159 = vpack.c.b16 %v3811, %v3799
        %v4160 = vpack.c.b16 %v3812, %v3800
        %v4161 = vpack.c.b16 %v3813, %v3801
        %v4162 = vpack.c.b16 %v3814, %v3802
        %v4163 = vpack.c.b16 %v3815, %v3803
        %v4164 = vpack.c.b16 %v3816, %v3804
        %v4165 = vpack.c.b16 %v3817, %v3805
        %v4166 = vpack.c.b16 %v3818, %v3806
        %v4167 = vpack.c.b16 %v3819, %v3807
        %v4168 = vpack.c.b16 %v3820, %v3808
        %v4169 = vpack.c.b16 %v3821, %v3809
        %v4170 = vpack.c.b16 %v3822, %v3810
        %v4171 = vpack.c.b16 %v3835, %v3823
        %v4172 = vpack.c.b16 %v3836, %v3824
        %v4173 = vpack.c.b16 %v3837, %v3825
        %v4174 = vpack.c.b16 %v3838, %v3826
        %v4175 = vpack.c.b16 %v3839, %v3827
        %v4176 = vpack.c.b16 %v3840, %v3828
        %v4177 = vpack.c.b16 %v3841, %v3829
        %v4178 = vpack.c.b16 %v3842, %v3830
        %v4179 = vpack.c.b16 %v3843, %v3831
        %v4180 = vpack.c.b16 %v3844, %v3832
        %v4181 = vpack.c.b16 %v3845, %v3833
        %v4182 = vpack.c.b16 %v3846, %v3834
        %v4183 = vpack.c.b16 %v3859, %v3847
        %v4184 = vpack.c.b16 %v3860, %v3848
        %v4185 = vpack.c.b16 %v3861, %v3849
        %v4186 = vpack.c.b16 %v3862, %v3850
        %v4187 = vpack.c.b16 %v3863, %v3851
        %v4188 = vpack.c.b16 %v3864, %v3852
        %v4189 = vpack.c.b16 %v3865, %v3853
        %v4190 = vpack.c.b16 %v3866, %v3854
        %v4191 = vpack.c.b16 %v3867, %v3855
        %v4192 = vpack.c.b16 %v3868, %v3856
        %v4193 = vpack.c.b16 %v3869, %v3857
        %v4194 = vpack.c.b16 %v3870, %v3858
        %v4195 = vpack.c.b16 %v3883, %v3871
        %v4196 = vpack.c.b16 %v3884, %v3872
        %v4197 = vpack.c.b16 %v3885, %v3873
        %v4198 = vpack.c.b16 %v3886, %v3874
        %v4199 = vpack.c.b16 %v3887, %v3875
        %v4200 = vpack.c.b16 %v3888, %v3876
        %v4201 = vpack.c.b16 %v3889, %v3877
        %v4202 = vpack.c.b16 %v3890, %v3878
        %v4203 = vpack.c.b16 %v3891, %v3879
        %v4204 = vpack.c.b16 %v3892, %v3880
        %v4205 = vpack.c.b16 %v3893, %v3881
        %v4206 = vpack.c.b16 %v3894, %v3882
        %v4207 = vpack.c.b16 %v3907, %v3895
        %v4208 = vpack.c.b16 %v3908, %v3896
        %v4209 = vpack.c.b16 %v3909, %v3897
        %v4210 = vpack.c.b16 %v3910, %v3898
        %v4211 = vpack.c.b16 %v3911, %v3899
        %v4212 = vpack.c.b16 %v3912, %v3900
        %v4213 = vpack.c.b16 %v3913, %v3901
        %v4214 = vpack.c.b16 %v3914, %v3902
        %v4215 = vpack.c.b16 %v3915, %v3903
        %v4216 = vpack.c.b16 %v3916, %v3904
        %v4217 = vpack.c.b16 %v3917, %v3905
        %v4218 = vpack.c.b16 %v3918, %v3906
        %v4219 = vpack.c.b16 %v3931, %v3919
        %v4220 = vpack.c.b16 %v3932, %v3920
        %v4221 = vpack.c.b16 %v3933, %v3921
        %v4222 = vpack.c.b16 %v3934, %v3922
        %v4223 = vpack.c.b16 %v3935, %v3923
        %v4224 = vpack.c.b16 %v3936, %v3924
        %v4225 = vpack.c.b16 %v3937, %v3925
        %v4226 = vpack.c.b16 %v3938, %v3926
        %v4227 = vpack.c.b16 %v3939, %v3927
        %v4228 = vpack.c.b16 %v3940, %v3928
        %v4229 = vpack.c.b16 %v3941, %v3929
        %v4230 = vpack.c.b16 %v3942, %v3930
        %v4231 = vpack.c.b16 %v3955, %v3943
        %v4232 = vpack.c.b16 %v3956, %v3944
        %v4233 = vpack.c.b16 %v3957, %v3945
        %v4234 = vpack.c.b16 %v3958, %v3946
        %v4235 = vpack.c.b16 %v3959, %v3947
        %v4236 = vpack.c.b16 %v3960, %v3948
        %v4237 = vpack.c.b16 %v3961, %v3949
        %v4238 = vpack.c.b16 %v3962, %v3950
        %v4239 = vpack.c.b16 %v3963, %v3951
        %v4240 = vpack.c.b16 %v3964, %v3952
        %v4241 = vpack.c.b16 %v3965, %v3953
        %v4242 = vpack.c.b16 %v3966, %v3954
        %v4243 = vpack.c.b16 %v3979, %v3967
        %v4244 = vpack.c.b16 %v3980, %v3968
        %v4245 = vpack.c.b16 %v3981, %v3969
        %v4246 = vpack.c.b16 %v3982, %v3970
        %v4247 = vpack.c.b16 %v3983, %v3971
        %v4248 = vpack.c.b16 %v3984, %v3972
        %v4249 = vpack.c.b16 %v3985, %v3973
        %v4250 = vpack.c.b16 %v3986, %v3974
        %v4251 = vpack.c.b16 %v3987, %v3975
        %v4252 = vpack.c.b16 %v3988, %v3976
        %v4253 = vpack.c.b16 %v3989, %v3977
        %v4254 = vpack.c.b16 %v3990, %v3978
        %v4255 = vpack.c.b16 %v4003, %v3991
        %v4256 = vpack.c.b16 %v4004, %v3992
        %v4257 = vpack.c.b16 %v4005, %v3993
        %v4258 = vpack.c.b16 %v4006, %v3994
        %v4259 = vpack.c.b16 %v4007, %v3995
        %v4260 = vpack.c.b16 %v4008, %v3996
        %v4261 = vpack.c.b16 %v4009, %v3997
        %v4262 = vpack.c.b16 %v4010, %v3998
        %v4263 = vpack.c.b16 %v4011, %v3999
        %v4264 = vpack.c.b16 %v4012, %v4000
        %v4265 = vpack.c.b16 %v4013, %v4001
        %v4266 = vpack.c.b16 %v4014, %v4002
        %v4267 = vpack.c.b16 %v4027, %v4015
        %v4268 = vpack.c.b16 %v4028, %v4016
        %v4269 = vpack.c.b16 %v4029, %v4017
        %v4270 = vpack.c.b16 %v4030, %v4018
        %v4271 = vpack.c.b16 %v4031, %v4019
        %v4272 = vpack.c.b16 %v4032, %v4020
        %v4273 = vpack.c.b16 %v4033, %v4021
        %v4274 = vpack.c.b16 %v4034, %v4022
        %v4275 = vpack.c.b16 %v4035, %v4023
        %v4276 = vpack.c.b16 %v4036, %v4024
        %v4277 = vpack.c.b16 %v4037, %v4025
        %v4278 = vpack.c.b16 %v4038, %v4026
        %v4279 = vpack.c.b16 %v4051, %v4039
        %v4280 = vpack.c.b16 %v4052, %v4040
        %v4281 = vpack.c.b16 %v4053, %v4041
        %v4282 = vpack.c.b16 %v4054, %v4042
        %v4283 = vpack.c.b16 %v4055, %v4043
        %v4284 = vpack.c.b16 %v4056, %v4044
        %v4285 = vpack.c.b16 %v4057, %v4045
        %v4286 = vpack.c.b16 %v4058, %v4046
        %v4287 = vpack.c.b16 %v4059, %v4047
        %v4288 = vpack.c.b16 %v4060, %v4048
        %v4289 = vpack.c.b16 %v4061, %v4049
        %v4290 = vpack.c.b16 %v4062, %v4050
        %v4291 = vpack.c.b16 %v4075, %v4063
        %v4292 = vpack.c.b16 %v4076, %v4064
        %v4293 = vpack.c.b16 %v4077, %v4065
        %v4294 = vpack.c.b16 %v4078, %v4066
        %v4295 = vpack.c.b16 %v4079, %v4067
        %v4296 = vpack.c.b16 %v4080, %v4068
        %v4297 = vpack.c.b16 %v4081, %v4069
        %v4298 = vpack.c.b16 %v4082, %v4070
        %v4299 = vpack.c.b16 %v4083, %v4071
        %v4300 = vpack.c.b16 %v4084, %v4072
        %v4301 = vpack.c.b16 %v4085, %v4073
        %v4302 = vpack.c.b16 %v4086, %v4074
        %v4303 = vpack.c.b16 %v4099, %v4087
        %v4304 = vpack.c.b16 %v4100, %v4088
        %v4305 = vpack.c.b16 %v4101, %v4089
        %v4306 = vpack.c.b16 %v4102, %v4090
        %v4307 = vpack.c.b16 %v4103, %v4091
        %v4308 = vpack.c.b16 %v4104, %v4092
        %v4309 = vpack.c.b16 %v4105, %v4093
        %v4310 = vpack.c.b16 %v4106, %v4094
        %v4311 = vpack.c.b16 %v4107, %v4095
        %v4312 = vpack.c.b16 %v4108, %v4096
        %v4313 = vpack.c.b16 %v4109, %v4097
        %v4314 = vpack.c.b16 %v4110, %v4098
        %v4315 = vpack.c.b16 %v4123, %v4111
        %v4316 = vpack.c.b16 %v4124, %v4112
        %v4317 = vpack.c.b16 %v4125, %v4113
        %v4318 = vpack.c.b16 %v4126, %v4114
        %v4319 = vpack.c.b16 %v4127, %v4115
        %v4320 = vpack.c.b16 %v4128, %v4116
        %v4321 = vpack.c.b16 %v4129, %v4117
        %v4322 = vpack.c.b16 %v4130, %v4118
        %v4323 = vpack.c.b16 %v4131, %v4119
        %v4324 = vpack.c.b16 %v4132, %v4120
        %v4325 = vpack.c.b16 %v4133, %v4121
        %v4326 = vpack.c.b16 %v4134, %v4122
        %4519 = vmatprep.subr.bf16.mxu0 %v4136
        %4520 = vmatpush1.bf16.msra.mxu0 %v4135
        %4521 = vmatprep.subr.bf16.mxu0 %v4148
        %4522 = vmatpush1.bf16.msra.mxu0 %v4147
        %4523 = vmatprep.subr.bf16.mxu0 %v4160
        %4524 = vmatpush1.bf16.msra.mxu0 %v4159
        %4525 = vmatprep.subr.bf16.mxu0 %v4172
        %4526 = vmatpush1.bf16.msra.mxu0 %v4171
        %4527 = vmatprep.subr.bf16.mxu0 %v4184
        %4528 = vmatpush1.bf16.msra.mxu0 %v4183
        %4529 = vmatprep.subr.bf16.mxu0 %v4196
        %4530 = vmatpush1.bf16.msra.mxu0 %v4195
        %4531 = vmatprep.subr.bf16.mxu0 %v4208
        %4532 = vmatpush1.bf16.msra.mxu0 %v4207
        %4533 = vmatprep.subr.bf16.mxu0 %v4220
        %4534 = vmatpush1.bf16.msra.mxu0 %v4219
        %4535 = vmatprep.subr.bf16.mxu0 %v4232
        %4536 = vmatpush1.bf16.msra.mxu0 %v4231
        %4537 = vmatprep.subr.bf16.mxu0 %v4244
        %4538 = vmatpush1.bf16.msra.mxu0 %v4243
        %4539 = vmatprep.subr.bf16.mxu0 %v4256
        %4540 = vmatpush1.bf16.msra.mxu0 %v4255
        %4541 = vmatprep.subr.bf16.mxu0 %v4268
        %4542 = vmatpush1.bf16.msra.mxu0 %v4267
        %4543 = vmatprep.subr.bf16.mxu0 %v4280
        %4544 = vmatpush1.bf16.msra.mxu0 %v4279
        %4545 = vmatprep.subr.bf16.mxu0 %v4292
        %4546 = vmatpush1.bf16.msra.mxu0 %v4291
        %4547 = vmatprep.subr.bf16.mxu0 %v4304
        %4548 = vmatpush1.bf16.msra.mxu0 %v4303
        %4549 = vmatprep.subr.bf16.mxu0 %v4316
        %4550 = vmatpush1.bf16.msra.mxu0 %v4315
        %4551 = vmatprep.mubr.bf16.mxu0 %v3366
        %4552 = vmatmul.mubr.bf16.gmra.mrb[0].mxu0 %v3365
        %v4553 = vpop.f32.mrb[0].mxu0
        %v4554 = vadd.f32 0.0, %v4553
        %v4555 = vpop.f32.mrb[0].mxu0
        %v4556 = vadd.f32 0.0, %v4555
        %v4557 = vpop.f32.mrb[0].mxu0
        %v4558 = vpop.f32.mrb[0].mxu0
        %4559 = vdwg.mxu0
        %4560 = vmatprep.subr.bf16.mxu0 %v4138
        %4561 = vmatpush1.bf16.msra.mxu0 %v4137
        %4562 = vmatprep.subr.bf16.mxu0 %v4150
        %4563 = vmatpush1.bf16.msra.mxu0 %v4149
        %4564 = vmatprep.subr.bf16.mxu0 %v4162
        %4565 = vmatpush1.bf16.msra.mxu0 %v4161
        %4566 = vmatprep.subr.bf16.mxu0 %v4174
        %4567 = vmatpush1.bf16.msra.mxu0 %v4173
        %4568 = vmatprep.subr.bf16.mxu0 %v4186
        %4569 = vmatpush1.bf16.msra.mxu0 %v4185
        %4570 = vmatprep.subr.bf16.mxu0 %v4198
        %4571 = vmatpush1.bf16.msra.mxu0 %v4197
        %4572 = vmatprep.subr.bf16.mxu0 %v4210
        %4573 = vmatpush1.bf16.msra.mxu0 %v4209
        %4574 = vmatprep.subr.bf16.mxu0 %v4222
        %4575 = vmatpush1.bf16.msra.mxu0 %v4221
        %4576 = vmatprep.subr.bf16.mxu0 %v4234
        %4577 = vmatpush1.bf16.msra.mxu0 %v4233
        %4578 = vmatprep.subr.bf16.mxu0 %v4246
        %4579 = vmatpush1.bf16.msra.mxu0 %v4245
        %4580 = vmatprep.subr.bf16.mxu0 %v4258
        %4581 = vmatpush1.bf16.msra.mxu0 %v4257
        %4582 = vmatprep.subr.bf16.mxu0 %v4270
        %4583 = vmatpush1.bf16.msra.mxu0 %v4269
        %4584 = vmatprep.subr.bf16.mxu0 %v4282
        %4585 = vmatpush1.bf16.msra.mxu0 %v4281
        %4586 = vmatprep.subr.bf16.mxu0 %v4294
        %4587 = vmatpush1.bf16.msra.mxu0 %v4293
        %4588 = vmatprep.subr.bf16.mxu0 %v4306
        %4589 = vmatpush1.bf16.msra.mxu0 %v4305
        %4590 = vmatprep.subr.bf16.mxu0 %v4318
        %4591 = vmatpush1.bf16.msra.mxu0 %v4317
        %4592 = vmatprep.mubr.bf16.mxu0 %v3366
        %4593 = vmatmul.mubr.bf16.gmra.mrb[0].mxu0 %v3365
        %v4594 = vpop.f32.mrb[0].mxu0
        %v4595 = vadd.f32 0.0, %v4594
        %v4596 = vpop.f32.mrb[0].mxu0
        %v4597 = vadd.f32 0.0, %v4596
        %v4598 = vpop.f32.mrb[0].mxu0
        %v4599 = vpop.f32.mrb[0].mxu0
        %4600 = vdwg.mxu0
        %4601 = vmatprep.subr.bf16.mxu0 %v4140
        %4602 = vmatpush1.bf16.msra.mxu0 %v4139
        %4603 = vmatprep.subr.bf16.mxu0 %v4152
        %4604 = vmatpush1.bf16.msra.mxu0 %v4151
        %4605 = vmatprep.subr.bf16.mxu0 %v4164
        %4606 = vmatpush1.bf16.msra.mxu0 %v4163
        %4607 = vmatprep.subr.bf16.mxu0 %v4176
        %4608 = vmatpush1.bf16.msra.mxu0 %v4175
        %4609 = vmatprep.subr.bf16.mxu0 %v4188
        %4610 = vmatpush1.bf16.msra.mxu0 %v4187
        %4611 = vmatprep.subr.bf16.mxu0 %v4200
        %4612 = vmatpush1.bf16.msra.mxu0 %v4199
        %4613 = vmatprep.subr.bf16.mxu0 %v4212
        %4614 = vmatpush1.bf16.msra.mxu0 %v4211
        %4615 = vmatprep.subr.bf16.mxu0 %v4224
        %4616 = vmatpush1.bf16.msra.mxu0 %v4223
        %4617 = vmatprep.subr.bf16.mxu0 %v4236
        %4618 = vmatpush1.bf16.msra.mxu0 %v4235
        %4619 = vmatprep.subr.bf16.mxu0 %v4248
        %4620 = vmatpush1.bf16.msra.mxu0 %v4247
        %4621 = vmatprep.subr.bf16.mxu0 %v4260
        %4622 = vmatpush1.bf16.msra.mxu0 %v4259
        %4623 = vmatprep.subr.bf16.mxu0 %v4272
        %4624 = vmatpush1.bf16.msra.mxu0 %v4271
        %4625 = vmatprep.subr.bf16.mxu0 %v4284
        %4626 = vmatpush1.bf16.msra.mxu0 %v4283
        %4627 = vmatprep.subr.bf16.mxu0 %v4296
        %4628 = vmatpush1.bf16.msra.mxu0 %v4295
        %4629 = vmatprep.subr.bf16.mxu0 %v4308
        %4630 = vmatpush1.bf16.msra.mxu0 %v4307
        %4631 = vmatprep.subr.bf16.mxu0 %v4320
        %4632 = vmatpush1.bf16.msra.mxu0 %v4319
        %4633 = vmatprep.mubr.bf16.mxu0 %v3366
        %4634 = vmatmul.mubr.bf16.gmra.mrb[0].mxu0 %v3365
        %v4635 = vpop.f32.mrb[0].mxu0
        %v4636 = vadd.f32 0.0, %v4635
        %v4637 = vpop.f32.mrb[0].mxu0
        %v4638 = vadd.f32 0.0, %v4637
        %v4639 = vpop.f32.mrb[0].mxu0
        %v4640 = vpop.f32.mrb[0].mxu0
        %4641 = vdwg.mxu0
        %4642 = vmatprep.subr.bf16.mxu0 %v4142
        %4643 = vmatpush1.bf16.msra.mxu0 %v4141
        %4644 = vmatprep.subr.bf16.mxu0 %v4154
        %4645 = vmatpush1.bf16.msra.mxu0 %v4153
        %4646 = vmatprep.subr.bf16.mxu0 %v4166
        %4647 = vmatpush1.bf16.msra.mxu0 %v4165
        %4648 = vmatprep.subr.bf16.mxu0 %v4178
        %4649 = vmatpush1.bf16.msra.mxu0 %v4177
        %4650 = vmatprep.subr.bf16.mxu0 %v4190
        %4651 = vmatpush1.bf16.msra.mxu0 %v4189
        %4652 = vmatprep.subr.bf16.mxu0 %v4202
        %4653 = vmatpush1.bf16.msra.mxu0 %v4201
        %4654 = vmatprep.subr.bf16.mxu0 %v4214
        %4655 = vmatpush1.bf16.msra.mxu0 %v4213
        %4656 = vmatprep.subr.bf16.mxu0 %v4226
        %4657 = vmatpush1.bf16.msra.mxu0 %v4225
        %4658 = vmatprep.subr.bf16.mxu0 %v4238
        %4659 = vmatpush1.bf16.msra.mxu0 %v4237
        %4660 = vmatprep.subr.bf16.mxu0 %v4250
        %4661 = vmatpush1.bf16.msra.mxu0 %v4249
        %4662 = vmatprep.subr.bf16.mxu0 %v4262
        %4663 = vmatpush1.bf16.msra.mxu0 %v4261
        %4664 = vmatprep.subr.bf16.mxu0 %v4274
        %4665 = vmatpush1.bf16.msra.mxu0 %v4273
        %4666 = vmatprep.subr.bf16.mxu0 %v4286
        %4667 = vmatpush1.bf16.msra.mxu0 %v4285
        %4668 = vmatprep.subr.bf16.mxu0 %v4298
        %4669 = vmatpush1.bf16.msra.mxu0 %v4297
        %4670 = vmatprep.subr.bf16.mxu0 %v4310
        %4671 = vmatpush1.bf16.msra.mxu0 %v4309
        %4672 = vmatprep.subr.bf16.mxu0 %v4322
        %4673 = vmatpush1.bf16.msra.mxu0 %v4321
        %4674 = vmatprep.mubr.bf16.mxu0 %v3366
        %4675 = vmatmul.mubr.bf16.gmra.mrb[0].mxu0 %v3365
        %v4676 = vpop.f32.mrb[0].mxu0
        %v4677 = vadd.f32 0.0, %v4676
        %v4678 = vpop.f32.mrb[0].mxu0
        %v4679 = vadd.f32 0.0, %v4678
        %v4680 = vpop.f32.mrb[0].mxu0
        %v4681 = vpop.f32.mrb[0].mxu0
        %4682 = vdwg.mxu0
        %4683 = vmatprep.subr.bf16.mxu0 %v4144
        %4684 = vmatpush1.bf16.msra.mxu0 %v4143
        %4685 = vmatprep.subr.bf16.mxu0 %v4156
        %4686 = vmatpush1.bf16.msra.mxu0 %v4155
        %4687 = vmatprep.subr.bf16.mxu0 %v4168
        %4688 = vmatpush1.bf16.msra.mxu0 %v4167
        %4689 = vmatprep.subr.bf16.mxu0 %v4180
        %4690 = vmatpush1.bf16.msra.mxu0 %v4179
        %4691 = vmatprep.subr.bf16.mxu0 %v4192
        %4692 = vmatpush1.bf16.msra.mxu0 %v4191
        %4693 = vmatprep.subr.bf16.mxu0 %v4204
        %4694 = vmatpush1.bf16.msra.mxu0 %v4203
        %4695 = vmatprep.subr.bf16.mxu0 %v4216
        %4696 = vmatpush1.bf16.msra.mxu0 %v4215
        %4697 = vmatprep.subr.bf16.mxu0 %v4228
        %4698 = vmatpush1.bf16.msra.mxu0 %v4227
        %4699 = vmatprep.subr.bf16.mxu0 %v4240
        %4700 = vmatpush1.bf16.msra.mxu0 %v4239
        %4701 = vmatprep.subr.bf16.mxu0 %v4252
        %4702 = vmatpush1.bf16.msra.mxu0 %v4251
        %4703 = vmatprep.subr.bf16.mxu0 %v4264
        %4704 = vmatpush1.bf16.msra.mxu0 %v4263
        %4705 = vmatprep.subr.bf16.mxu0 %v4276
        %4706 = vmatpush1.bf16.msra.mxu0 %v4275
        %4707 = vmatprep.subr.bf16.mxu0 %v4288
        %4708 = vmatpush1.bf16.msra.mxu0 %v4287
        %4709 = vmatprep.subr.bf16.mxu0 %v4300
        %4710 = vmatpush1.bf16.msra.mxu0 %v4299
        %4711 = vmatprep.subr.bf16.mxu0 %v4312
        %4712 = vmatpush1.bf16.msra.mxu0 %v4311
        %4713 = vmatprep.subr.bf16.mxu0 %v4324
        %4714 = vmatpush1.bf16.msra.mxu0 %v4323
        %4715 = vmatprep.mubr.bf16.mxu0 %v3366
        %4716 = vmatmul.mubr.bf16.gmra.mrb[0].mxu0 %v3365
        %v4717 = vpop.f32.mrb[0].mxu0
        %v4718 = vadd.f32 0.0, %v4717
        %v4719 = vpop.f32.mrb[0].mxu0
        %v4720 = vadd.f32 0.0, %v4719
        %v4721 = vpop.f32.mrb[0].mxu0
        %v4722 = vpop.f32.mrb[0].mxu0
        %4723 = vdwg.mxu0
        %4724 = vmatprep.subr.bf16.mxu0 %v4146
        %4725 = vmatpush1.bf16.msra.mxu0 %v4145
        %4726 = vmatprep.subr.bf16.mxu0 %v4158
        %4727 = vmatpush1.bf16.msra.mxu0 %v4157
        %4728 = vmatprep.subr.bf16.mxu0 %v4170
        %4729 = vmatpush1.bf16.msra.mxu0 %v4169
        %4730 = vmatprep.subr.bf16.mxu0 %v4182
        %4731 = vmatpush1.bf16.msra.mxu0 %v4181
        %4732 = vmatprep.subr.bf16.mxu0 %v4194
        %4733 = vmatpush1.bf16.msra.mxu0 %v4193
        %4734 = vmatprep.subr.bf16.mxu0 %v4206
        %4735 = vmatpush1.bf16.msra.mxu0 %v4205
        %4736 = vmatprep.subr.bf16.mxu0 %v4218
        %4737 = vmatpush1.bf16.msra.mxu0 %v4217
        %4738 = vmatprep.subr.bf16.mxu0 %v4230
        %4739 = vmatpush1.bf16.msra.mxu0 %v4229
        %4740 = vmatprep.subr.bf16.mxu0 %v4242
        %4741 = vmatpush1.bf16.msra.mxu0 %v4241
        %4742 = vmatprep.subr.bf16.mxu0 %v4254
        %4743 = vmatpush1.bf16.msra.mxu0 %v4253
        %4744 = vmatprep.subr.bf16.mxu0 %v4266
        %4745 = vmatpush1.bf16.msra.mxu0 %v4265
        %4746 = vmatprep.subr.bf16.mxu0 %v4278
        %4747 = vmatpush1.bf16.msra.mxu0 %v4277
        %4748 = vmatprep.subr.bf16.mxu0 %v4290
        %4749 = vmatpush1.bf16.msra.mxu0 %v4289
        %4750 = vmatprep.subr.bf16.mxu0 %v4302
        %4751 = vmatpush1.bf16.msra.mxu0 %v4301
        %4752 = vmatprep.subr.bf16.mxu0 %v4314
        %4753 = vmatpush1.bf16.msra.mxu0 %v4313
        %4754 = vmatprep.subr.bf16.mxu0 %v4326
        %4755 = vmatpush1.bf16.msra.mxu0 %v4325
        %4756 = vmatprep.mubr.bf16.mxu0 %v3366
        %4757 = vmatmul.mubr.bf16.gmra.mrb[0].mxu0 %v3365
        %v4758 = vpop.f32.mrb[0].mxu0
        %v4759 = vadd.f32 0.0, %v4758
        %v4760 = vpop.f32.mrb[0].mxu0
        %v4761 = vadd.f32 0.0, %v4760
        %v4762 = vpop.f32.mrb[0].mxu0
        %v4763 = vpop.f32.mrb[0].mxu0
        %4764 = vdwg.mxu0
        %v4765 = vxor.u32 %v4554, 2147483648
        %v4766 = vxor.u32 %v4556, 2147483648
        %v4767 = vxor.u32 %v4595, 2147483648
        %v4768 = vxor.u32 %v4597, 2147483648
        %v4769 = vxor.u32 %v4636, 2147483648
        %v4770 = vxor.u32 %v4638, 2147483648
        %v4771 = vmul.f32 %v4765, 1.442695
        %v4772 = vpow.pop %v4771
        %v4773 = vmul.f32 %v4766, 1.442695
        %v4774 = vpow.pop %v4773
        %v4775 = vmul.f32 %v4767, 1.442695
        %v4776 = vpow.pop %v4775
        %v4777 = vmul.f32 %v4768, 1.442695
        %v4778 = vpow.pop %v4777
        %v4779 = vmul.f32 %v4769, 1.442695
        %v4780 = vpow.pop %v4779
        %v4781 = vmul.f32 %v4770, 1.442695
        %v4782 = vpow.pop %v4781
        %v4783 = vadd.f32 %v4772, 1.0
        %v4784 = vadd.f32 %v4774, 1.0
        %v4785 = vadd.f32 %v4776, 1.0
        %v4786 = vadd.f32 %v4778, 1.0
        %v4787 = vadd.f32 %v4780, 1.0
        %v4788 = vadd.f32 %v4782, 1.0
        %v4789 = vrcp.pop %v4783
        %v4790 = vmul.f32 1.0, %v4789
        %v4791 = vrcp.pop %v4784
        %v4792 = vmul.f32 1.0, %v4791
        %v4793 = vrcp.pop %v4785
        %v4794 = vmul.f32 1.0, %v4793
        %v4795 = vrcp.pop %v4786
        %v4796 = vmul.f32 1.0, %v4795
        %v4797 = vrcp.pop %v4787
        %v4798 = vmul.f32 1.0, %v4797
        %v4799 = vrcp.pop %v4788
        %v4800 = vmul.f32 1.0, %v4799
        %v4801 = vmul.f32 %v4554, %v4790
        %v4802 = vmul.f32 %v4556, %v4792
        %v4803 = vmul.f32 %v4595, %v4794
        %v4804 = vmul.f32 %v4597, %v4796
        %v4805 = vmul.f32 %v4636, %v4798
        %v4806 = vmul.f32 %v4638, %v4800
        %v4807 = vmul.f32 %v4801, %v4677
        %v4808 = vmul.f32 %v4802, %v4679
        %v4809 = vmul.f32 %v4803, %v4718
        %v4810 = vmul.f32 %v4804, %v4720
        %v4811 = vmul.f32 %v4805, %v4759
        %v4812 = vmul.f32 %v4806, %v4761
        %v4813 = vpack.c.bf16 %v4807, %v4807
        %v4814 = vpack.c.bf16 %v4808, %v4808
        %v4815 = vpack.c.bf16 %v4809, %v4809
        %v4816 = vpack.c.bf16 %v4810, %v4810
        %v4817 = vpack.c.bf16 %v4811, %v4811
        %v4818 = vpack.c.bf16 %v4812, %v4812
        %v4819 = vld [vmem:[%s712] sm:$0xff]
        %v4820 = vld [vmem:[%s712 + $0x8] sm:$0xff]
        %v4821 = vld [vmem:[%s712 + $0x10] sm:$0xff]
        %v4822 = vld [vmem:[%s712 + $0x18] sm:$0xff]
        %v4823 = vld [vmem:[%s712 + $0x20] sm:$0xff]
        %v4824 = vld [vmem:[%s712 + $0x28] sm:$0xff]
        %v4825 = vld [vmem:[%s712 + $0x30] sm:$0xff]
        %v4826 = vld [vmem:[%s712 + $0x38] sm:$0xff]
        %v4827 = vld [vmem:[%s712 + $0x40] sm:$0xff]
        %v4828 = vld [vmem:[%s712 + $0x48] sm:$0xff]
        %v4829 = vld [vmem:[%s712 + $0x50] sm:$0xff]
        %v4830 = vld [vmem:[%s712 + $0x58] sm:$0xff]
        %v4831 = vld [vmem:[%s712 + $0x60] sm:$0xff]
        %v4832 = vld [vmem:[%s712 + $0x68] sm:$0xff]
        %v4833 = vld [vmem:[%s712 + $0x70] sm:$0xff]
        %v4834 = vld [vmem:[%s712 + $0x78] sm:$0xff]
        %v4835 = vld [vmem:[%s712 + $0x80] sm:$0xff]
        %v4836 = vld [vmem:[%s712 + $0x88] sm:$0xff]
        %v4837 = vld [vmem:[%s712 + $0x90] sm:$0xff]
        %v4838 = vld [vmem:[%s712 + $0x98] sm:$0xff]
        %v4839 = vld [vmem:[%s712 + $0xa0] sm:$0xff]
        %v4840 = vld [vmem:[%s712 + $0xa8] sm:$0xff]
        %v4841 = vld [vmem:[%s712 + $0xb0] sm:$0xff]
        %v4842 = vld [vmem:[%s712 + $0xb8] sm:$0xff]
        %v4843 = vld [vmem:[%s712 + $0xc0] sm:$0xff]
        %v4844 = vld [vmem:[%s712 + $0xc8] sm:$0xff]
        %v4845 = vld [vmem:[%s712 + $0xd0] sm:$0xff]
        %v4846 = vld [vmem:[%s712 + $0xd8] sm:$0xff]
        %v4847 = vld [vmem:[%s712 + $0xe0] sm:$0xff]
        %v4848 = vld [vmem:[%s712 + $0xe8] sm:$0xff]
        %v4849 = vld [vmem:[%s712 + $0xf0] sm:$0xff]
        %v4850 = vld [vmem:[%s712 + $0xf8] sm:$0xff]
        %v4851 = vld [vmem:[%s712 + $0x100] sm:$0xff]
        %v4852 = vld [vmem:[%s712 + $0x108] sm:$0xff]
        %v4853 = vld [vmem:[%s712 + $0x110] sm:$0xff]
        %v4854 = vld [vmem:[%s712 + $0x118] sm:$0xff]
        %v4855 = vld [vmem:[%s712 + $0x120] sm:$0xff]
        %v4856 = vld [vmem:[%s712 + $0x128] sm:$0xff]
        %v4857 = vld [vmem:[%s712 + $0x130] sm:$0xff]
        %v4858 = vld [vmem:[%s712 + $0x138] sm:$0xff]
        %v4859 = vld [vmem:[%s712 + $0x140] sm:$0xff]
        %v4860 = vld [vmem:[%s712 + $0x148] sm:$0xff]
        %v4861 = vld [vmem:[%s712 + $0x150] sm:$0xff]
        %v4862 = vld [vmem:[%s712 + $0x158] sm:$0xff]
        %v4863 = vld [vmem:[%s712 + $0x160] sm:$0xff]
        %v4864 = vld [vmem:[%s712 + $0x168] sm:$0xff]
        %v4865 = vld [vmem:[%s712 + $0x170] sm:$0xff]
        %v4866 = vld [vmem:[%s712 + $0x178] sm:$0xff]
        %v4867 = vld [vmem:[%s712 + $0x180] sm:$0xff]
        %v4868 = vld [vmem:[%s712 + $0x188] sm:$0xff]
        %v4869 = vld [vmem:[%s712 + $0x190] sm:$0xff]
        %v4870 = vld [vmem:[%s712 + $0x198] sm:$0xff]
        %v4871 = vld [vmem:[%s712 + $0x1a0] sm:$0xff]
        %v4872 = vld [vmem:[%s712 + $0x1a8] sm:$0xff]
        %v4873 = vld [vmem:[%s712 + $0x1b0] sm:$0xff]
        %v4874 = vld [vmem:[%s712 + $0x1b8] sm:$0xff]
        %v4875 = vld [vmem:[%s712 + $0x1c0] sm:$0xff]
        %v4876 = vld [vmem:[%s712 + $0x1c8] sm:$0xff]
        %v4877 = vld [vmem:[%s712 + $0x1d0] sm:$0xff]
        %v4878 = vld [vmem:[%s712 + $0x1d8] sm:$0xff]
        %v4879 = vld [vmem:[%s712 + $0x1e0] sm:$0xff]
        %v4880 = vld [vmem:[%s712 + $0x1e8] sm:$0xff]
        %v4881 = vld [vmem:[%s712 + $0x1f0] sm:$0xff]
        %v4882 = vld [vmem:[%s712 + $0x1f8] sm:$0xff]
        %v4883 = vld [vmem:[%s712 + $0x200] sm:$0xff]
        %v4884 = vld [vmem:[%s712 + $0x208] sm:$0xff]
        %v4885 = vld [vmem:[%s712 + $0x210] sm:$0xff]
        %v4886 = vld [vmem:[%s712 + $0x218] sm:$0xff]
        %v4887 = vld [vmem:[%s712 + $0x220] sm:$0xff]
        %v4888 = vld [vmem:[%s712 + $0x228] sm:$0xff]
        %v4889 = vld [vmem:[%s712 + $0x230] sm:$0xff]
        %v4890 = vld [vmem:[%s712 + $0x238] sm:$0xff]
        %v4891 = vld [vmem:[%s712 + $0x240] sm:$0xff]
        %v4892 = vld [vmem:[%s712 + $0x248] sm:$0xff]
        %v4893 = vld [vmem:[%s712 + $0x250] sm:$0xff]
        %v4894 = vld [vmem:[%s712 + $0x258] sm:$0xff]
        %v4895 = vld [vmem:[%s712 + $0x260] sm:$0xff]
        %v4896 = vld [vmem:[%s712 + $0x268] sm:$0xff]
        %v4897 = vld [vmem:[%s712 + $0x270] sm:$0xff]
        %v4898 = vld [vmem:[%s712 + $0x278] sm:$0xff]
        %v4899 = vld [vmem:[%s712 + $0x280] sm:$0xff]
        %v4900 = vld [vmem:[%s712 + $0x288] sm:$0xff]
        %v4901 = vld [vmem:[%s712 + $0x290] sm:$0xff]
        %v4902 = vld [vmem:[%s712 + $0x298] sm:$0xff]
        %v4903 = vld [vmem:[%s712 + $0x2a0] sm:$0xff]
        %v4904 = vld [vmem:[%s712 + $0x2a8] sm:$0xff]
        %v4905 = vld [vmem:[%s712 + $0x2b0] sm:$0xff]
        %v4906 = vld [vmem:[%s712 + $0x2b8] sm:$0xff]
        %v4907 = vld [vmem:[%s712 + $0x2c0] sm:$0xff]
        %v4908 = vld [vmem:[%s712 + $0x2c8] sm:$0xff]
        %v4909 = vld [vmem:[%s712 + $0x2d0] sm:$0xff]
        %v4910 = vld [vmem:[%s712 + $0x2d8] sm:$0xff]
        %v4911 = vld [vmem:[%s712 + $0x2e0] sm:$0xff]
        %v4912 = vld [vmem:[%s712 + $0x2e8] sm:$0xff]
        %v4913 = vld [vmem:[%s712 + $0x2f0] sm:$0xff]
        %v4914 = vld [vmem:[%s712 + $0x2f8] sm:$0xff]
        %v5011 = vunpack.c.l.b16 %v4819
        %v5012 = vunpack.c.h.b16 %v4819
        %v5013 = vunpack.c.l.b16 %v4820
        %v5014 = vunpack.c.h.b16 %v4820
        %v5015 = vunpack.c.l.b16 %v4821
        %v5016 = vunpack.c.h.b16 %v4821
        %v5017 = vunpack.c.l.b16 %v4822
        %v5018 = vunpack.c.h.b16 %v4822
        %v5019 = vunpack.c.l.b16 %v4823
        %v5020 = vunpack.c.h.b16 %v4823
        %v5021 = vunpack.c.l.b16 %v4824
        %v5022 = vunpack.c.h.b16 %v4824
        %v5023 = vunpack.c.l.b16 %v4825
        %v5024 = vunpack.c.h.b16 %v4825
        %v5025 = vunpack.c.l.b16 %v4826
        %v5026 = vunpack.c.h.b16 %v4826
        %v5027 = vunpack.c.l.b16 %v4827
        %v5028 = vunpack.c.h.b16 %v4827
        %v5029 = vunpack.c.l.b16 %v4828
        %v5030 = vunpack.c.h.b16 %v4828
        %v5031 = vunpack.c.l.b16 %v4829
        %v5032 = vunpack.c.h.b16 %v4829
        %v5033 = vunpack.c.l.b16 %v4830
        %v5034 = vunpack.c.h.b16 %v4830
        %v5035 = vunpack.c.l.b16 %v4831
        %v5036 = vunpack.c.h.b16 %v4831
        %v5037 = vunpack.c.l.b16 %v4832
        %v5038 = vunpack.c.h.b16 %v4832
        %v5039 = vunpack.c.l.b16 %v4833
        %v5040 = vunpack.c.h.b16 %v4833
        %v5041 = vunpack.c.l.b16 %v4834
        %v5042 = vunpack.c.h.b16 %v4834
        %v5043 = vunpack.c.l.b16 %v4835
        %v5044 = vunpack.c.h.b16 %v4835
        %v5045 = vunpack.c.l.b16 %v4836
        %v5046 = vunpack.c.h.b16 %v4836
        %v5047 = vunpack.c.l.b16 %v4837
        %v5048 = vunpack.c.h.b16 %v4837
        %v5049 = vunpack.c.l.b16 %v4838
        %v5050 = vunpack.c.h.b16 %v4838
        %v5051 = vunpack.c.l.b16 %v4839
        %v5052 = vunpack.c.h.b16 %v4839
        %v5053 = vunpack.c.l.b16 %v4840
        %v5054 = vunpack.c.h.b16 %v4840
        %v5055 = vunpack.c.l.b16 %v4841
        %v5056 = vunpack.c.h.b16 %v4841
        %v5057 = vunpack.c.l.b16 %v4842
        %v5058 = vunpack.c.h.b16 %v4842
        %v5059 = vunpack.c.l.b16 %v4843
        %v5060 = vunpack.c.h.b16 %v4843
        %v5061 = vunpack.c.l.b16 %v4844
        %v5062 = vunpack.c.h.b16 %v4844
        %v5063 = vunpack.c.l.b16 %v4845
        %v5064 = vunpack.c.h.b16 %v4845
        %v5065 = vunpack.c.l.b16 %v4846
        %v5066 = vunpack.c.h.b16 %v4846
        %v5067 = vunpack.c.l.b16 %v4847
        %v5068 = vunpack.c.h.b16 %v4847
        %v5069 = vunpack.c.l.b16 %v4848
        %v5070 = vunpack.c.h.b16 %v4848
        %v5071 = vunpack.c.l.b16 %v4849
        %v5072 = vunpack.c.h.b16 %v4849
        %v5073 = vunpack.c.l.b16 %v4850
        %v5074 = vunpack.c.h.b16 %v4850
        %v5075 = vunpack.c.l.b16 %v4851
        %v5076 = vunpack.c.h.b16 %v4851
        %v5077 = vunpack.c.l.b16 %v4852
        %v5078 = vunpack.c.h.b16 %v4852
        %v5079 = vunpack.c.l.b16 %v4853
        %v5080 = vunpack.c.h.b16 %v4853
        %v5081 = vunpack.c.l.b16 %v4854
        %v5082 = vunpack.c.h.b16 %v4854
        %v5083 = vunpack.c.l.b16 %v4855
        %v5084 = vunpack.c.h.b16 %v4855
        %v5085 = vunpack.c.l.b16 %v4856
        %v5086 = vunpack.c.h.b16 %v4856
        %v5087 = vunpack.c.l.b16 %v4857
        %v5088 = vunpack.c.h.b16 %v4857
        %v5089 = vunpack.c.l.b16 %v4858
        %v5090 = vunpack.c.h.b16 %v4858
        %v5091 = vunpack.c.l.b16 %v4859
        %v5092 = vunpack.c.h.b16 %v4859
        %v5093 = vunpack.c.l.b16 %v4860
        %v5094 = vunpack.c.h.b16 %v4860
        %v5095 = vunpack.c.l.b16 %v4861
        %v5096 = vunpack.c.h.b16 %v4861
        %v5097 = vunpack.c.l.b16 %v4862
        %v5098 = vunpack.c.h.b16 %v4862
        %v5099 = vunpack.c.l.b16 %v4863
        %v5100 = vunpack.c.h.b16 %v4863
        %v5101 = vunpack.c.l.b16 %v4864
        %v5102 = vunpack.c.h.b16 %v4864
        %v5103 = vunpack.c.l.b16 %v4865
        %v5104 = vunpack.c.h.b16 %v4865
        %v5105 = vunpack.c.l.b16 %v4866
        %v5106 = vunpack.c.h.b16 %v4866
        %v5107 = vunpack.c.l.b16 %v4867
        %v5108 = vunpack.c.h.b16 %v4867
        %v5109 = vunpack.c.l.b16 %v4868
        %v5110 = vunpack.c.h.b16 %v4868
        %v5111 = vunpack.c.l.b16 %v4869
        %v5112 = vunpack.c.h.b16 %v4869
        %v5113 = vunpack.c.l.b16 %v4870
        %v5114 = vunpack.c.h.b16 %v4870
        %v5115 = vunpack.c.l.b16 %v4871
        %v5116 = vunpack.c.h.b16 %v4871
        %v5117 = vunpack.c.l.b16 %v4872
        %v5118 = vunpack.c.h.b16 %v4872
        %v5119 = vunpack.c.l.b16 %v4873
        %v5120 = vunpack.c.h.b16 %v4873
        %v5121 = vunpack.c.l.b16 %v4874
        %v5122 = vunpack.c.h.b16 %v4874
        %v5123 = vunpack.c.l.b16 %v4875
        %v5124 = vunpack.c.h.b16 %v4875
        %v5125 = vunpack.c.l.b16 %v4876
        %v5126 = vunpack.c.h.b16 %v4876
        %v5127 = vunpack.c.l.b16 %v4877
        %v5128 = vunpack.c.h.b16 %v4877
        %v5129 = vunpack.c.l.b16 %v4878
        %v5130 = vunpack.c.h.b16 %v4878
        %v5131 = vunpack.c.l.b16 %v4879
        %v5132 = vunpack.c.h.b16 %v4879
        %v5133 = vunpack.c.l.b16 %v4880
        %v5134 = vunpack.c.h.b16 %v4880
        %v5135 = vunpack.c.l.b16 %v4881
        %v5136 = vunpack.c.h.b16 %v4881
        %v5137 = vunpack.c.l.b16 %v4882
        %v5138 = vunpack.c.h.b16 %v4882
        %v5139 = vunpack.c.l.b16 %v4883
        %v5140 = vunpack.c.h.b16 %v4883
        %v5141 = vunpack.c.l.b16 %v4884
        %v5142 = vunpack.c.h.b16 %v4884
        %v5143 = vunpack.c.l.b16 %v4885
        %v5144 = vunpack.c.h.b16 %v4885
        %v5145 = vunpack.c.l.b16 %v4886
        %v5146 = vunpack.c.h.b16 %v4886
        %v5147 = vunpack.c.l.b16 %v4887
        %v5148 = vunpack.c.h.b16 %v4887
        %v5149 = vunpack.c.l.b16 %v4888
        %v5150 = vunpack.c.h.b16 %v4888
        %v5151 = vunpack.c.l.b16 %v4889
        %v5152 = vunpack.c.h.b16 %v4889
        %v5153 = vunpack.c.l.b16 %v4890
        %v5154 = vunpack.c.h.b16 %v4890
        %v5155 = vunpack.c.l.b16 %v4891
        %v5156 = vunpack.c.h.b16 %v4891
        %v5157 = vunpack.c.l.b16 %v4892
        %v5158 = vunpack.c.h.b16 %v4892
        %v5159 = vunpack.c.l.b16 %v4893
        %v5160 = vunpack.c.h.b16 %v4893
        %v5161 = vunpack.c.l.b16 %v4894
        %v5162 = vunpack.c.h.b16 %v4894
        %v5163 = vunpack.c.l.b16 %v4895
        %v5164 = vunpack.c.h.b16 %v4895
        %v5165 = vunpack.c.l.b16 %v4896
        %v5166 = vunpack.c.h.b16 %v4896
        %v5167 = vunpack.c.l.b16 %v4897
        %v5168 = vunpack.c.h.b16 %v4897
        %v5169 = vunpack.c.l.b16 %v4898
        %v5170 = vunpack.c.h.b16 %v4898
        %v5171 = vunpack.c.l.b16 %v4899
        %v5172 = vunpack.c.h.b16 %v4899
        %v5173 = vunpack.c.l.b16 %v4900
        %v5174 = vunpack.c.h.b16 %v4900
        %v5175 = vunpack.c.l.b16 %v4901
        %v5176 = vunpack.c.h.b16 %v4901
        %v5177 = vunpack.c.l.b16 %v4902
        %v5178 = vunpack.c.h.b16 %v4902
        %v5179 = vunpack.c.l.b16 %v4903
        %v5180 = vunpack.c.h.b16 %v4903
        %v5181 = vunpack.c.l.b16 %v4904
        %v5182 = vunpack.c.h.b16 %v4904
        %v5183 = vunpack.c.l.b16 %v4905
        %v5184 = vunpack.c.h.b16 %v4905
        %v5185 = vunpack.c.l.b16 %v4906
        %v5186 = vunpack.c.h.b16 %v4906
        %v5187 = vunpack.c.l.b16 %v4907
        %v5188 = vunpack.c.h.b16 %v4907
        %v5189 = vunpack.c.l.b16 %v4908
        %v5190 = vunpack.c.h.b16 %v4908
        %v5191 = vunpack.c.l.b16 %v4909
        %v5192 = vunpack.c.h.b16 %v4909
        %v5193 = vunpack.c.l.b16 %v4910
        %v5194 = vunpack.c.h.b16 %v4910
        %v5195 = vunpack.c.l.b16 %v4911
        %v5196 = vunpack.c.h.b16 %v4911
        %v5197 = vunpack.c.l.b16 %v4912
        %v5198 = vunpack.c.h.b16 %v4912
        %v5199 = vunpack.c.l.b16 %v4913
        %v5200 = vunpack.c.h.b16 %v4913
        %v5201 = vunpack.c.l.b16 %v4914
        %v5202 = vunpack.c.h.b16 %v4914
        %v5203 = vpack.c.b16 %v5013, %v5011
        %v5204 = vpack.c.b16 %v5014, %v5012
        %v5205 = vpack.c.b16 %v5017, %v5015
        %v5206 = vpack.c.b16 %v5018, %v5016
        %v5207 = vpack.c.b16 %v5021, %v5019
        %v5208 = vpack.c.b16 %v5022, %v5020
        %v5209 = vpack.c.b16 %v5025, %v5023
        %v5210 = vpack.c.b16 %v5026, %v5024
        %v5211 = vpack.c.b16 %v5029, %v5027
        %v5212 = vpack.c.b16 %v5030, %v5028
        %v5213 = vpack.c.b16 %v5033, %v5031
        %v5214 = vpack.c.b16 %v5034, %v5032
        %v5215 = vpack.c.b16 %v5037, %v5035
        %v5216 = vpack.c.b16 %v5038, %v5036
        %v5217 = vpack.c.b16 %v5041, %v5039
        %v5218 = vpack.c.b16 %v5042, %v5040
        %v5219 = vpack.c.b16 %v5045, %v5043
        %v5220 = vpack.c.b16 %v5046, %v5044
        %v5221 = vpack.c.b16 %v5049, %v5047
        %v5222 = vpack.c.b16 %v5050, %v5048
        %v5223 = vpack.c.b16 %v5053, %v5051
        %v5224 = vpack.c.b16 %v5054, %v5052
        %v5225 = vpack.c.b16 %v5057, %v5055
        %v5226 = vpack.c.b16 %v5058, %v5056
        %v5227 = vpack.c.b16 %v5061, %v5059
        %v5228 = vpack.c.b16 %v5062, %v5060
        %v5229 = vpack.c.b16 %v5065, %v5063
        %v5230 = vpack.c.b16 %v5066, %v5064
        %v5231 = vpack.c.b16 %v5069, %v5067
        %v5232 = vpack.c.b16 %v5070, %v5068
        %v5233 = vpack.c.b16 %v5073, %v5071
        %v5234 = vpack.c.b16 %v5074, %v5072
        %v5235 = vpack.c.b16 %v5077, %v5075
        %v5236 = vpack.c.b16 %v5078, %v5076
        %v5237 = vpack.c.b16 %v5081, %v5079
        %v5238 = vpack.c.b16 %v5082, %v5080
        %v5239 = vpack.c.b16 %v5085, %v5083
        %v5240 = vpack.c.b16 %v5086, %v5084
        %v5241 = vpack.c.b16 %v5089, %v5087
        %v5242 = vpack.c.b16 %v5090, %v5088
        %v5243 = vpack.c.b16 %v5093, %v5091
        %v5244 = vpack.c.b16 %v5094, %v5092
        %v5245 = vpack.c.b16 %v5097, %v5095
        %v5246 = vpack.c.b16 %v5098, %v5096
        %v5247 = vpack.c.b16 %v5101, %v5099
        %v5248 = vpack.c.b16 %v5102, %v5100
        %v5249 = vpack.c.b16 %v5105, %v5103
        %v5250 = vpack.c.b16 %v5106, %v5104
        %v5251 = vpack.c.b16 %v5109, %v5107
        %v5252 = vpack.c.b16 %v5110, %v5108
        %v5253 = vpack.c.b16 %v5113, %v5111
        %v5254 = vpack.c.b16 %v5114, %v5112
        %v5255 = vpack.c.b16 %v5117, %v5115
        %v5256 = vpack.c.b16 %v5118, %v5116
        %v5257 = vpack.c.b16 %v5121, %v5119
        %v5258 = vpack.c.b16 %v5122, %v5120
        %v5259 = vpack.c.b16 %v5125, %v5123
        %v5260 = vpack.c.b16 %v5126, %v5124
        %v5261 = vpack.c.b16 %v5129, %v5127
        %v5262 = vpack.c.b16 %v5130, %v5128
        %v5263 = vpack.c.b16 %v5133, %v5131
        %v5264 = vpack.c.b16 %v5134, %v5132
        %v5265 = vpack.c.b16 %v5137, %v5135
        %v5266 = vpack.c.b16 %v5138, %v5136
        %v5267 = vpack.c.b16 %v5141, %v5139
        %v5268 = vpack.c.b16 %v5142, %v5140
        %v5269 = vpack.c.b16 %v5145, %v5143
        %v5270 = vpack.c.b16 %v5146, %v5144
        %v5271 = vpack.c.b16 %v5149, %v5147
        %v5272 = vpack.c.b16 %v5150, %v5148
        %v5273 = vpack.c.b16 %v5153, %v5151
        %v5274 = vpack.c.b16 %v5154, %v5152
        %v5275 = vpack.c.b16 %v5157, %v5155
        %v5276 = vpack.c.b16 %v5158, %v5156
        %v5277 = vpack.c.b16 %v5161, %v5159
        %v5278 = vpack.c.b16 %v5162, %v5160
        %v5279 = vpack.c.b16 %v5165, %v5163
        %v5280 = vpack.c.b16 %v5166, %v5164
        %v5281 = vpack.c.b16 %v5169, %v5167
        %v5282 = vpack.c.b16 %v5170, %v5168
        %v5283 = vpack.c.b16 %v5173, %v5171
        %v5284 = vpack.c.b16 %v5174, %v5172
        %v5285 = vpack.c.b16 %v5177, %v5175
        %v5286 = vpack.c.b16 %v5178, %v5176
        %v5287 = vpack.c.b16 %v5181, %v5179
        %v5288 = vpack.c.b16 %v5182, %v5180
        %v5289 = vpack.c.b16 %v5185, %v5183
        %v5290 = vpack.c.b16 %v5186, %v5184
        %v5291 = vpack.c.b16 %v5189, %v5187
        %v5292 = vpack.c.b16 %v5190, %v5188
        %v5293 = vpack.c.b16 %v5193, %v5191
        %v5294 = vpack.c.b16 %v5194, %v5192
        %v5295 = vpack.c.b16 %v5197, %v5195
        %v5296 = vpack.c.b16 %v5198, %v5196
        %v5297 = vpack.c.b16 %v5201, %v5199
        %v5298 = vpack.c.b16 %v5202, %v5200
        %5395 = vmatprep.subr.bf16.mxu0 %v5204
        %5396 = vmatpush1.bf16.msra.mxu0 %v5203
        %5397 = vmatprep.subr.bf16.mxu0 %v5206
        %5398 = vmatpush1.bf16.msra.mxu0 %v5205
        %5399 = vmatprep.subr.bf16.mxu0 %v5208
        %5400 = vmatpush1.bf16.msra.mxu0 %v5207
        %5401 = vmatprep.subr.bf16.mxu0 %v5210
        %5402 = vmatpush1.bf16.msra.mxu0 %v5209
        %5403 = vmatprep.subr.bf16.mxu0 %v5212
        %5404 = vmatpush1.bf16.msra.mxu0 %v5211
        %5405 = vmatprep.subr.bf16.mxu0 %v5214
        %5406 = vmatpush1.bf16.msra.mxu0 %v5213
        %5407 = vmatprep.subr.bf16.mxu0 %v5216
        %5408 = vmatpush1.bf16.msra.mxu0 %v5215
        %5409 = vmatprep.subr.bf16.mxu0 %v5218
        %5410 = vmatpush1.bf16.msra.mxu0 %v5217
        %5411 = vmatprep.subr.bf16.mxu0 %v5220
        %5412 = vmatpush1.bf16.msra.mxu0 %v5219
        %5413 = vmatprep.subr.bf16.mxu0 %v5222
        %5414 = vmatpush1.bf16.msra.mxu0 %v5221
        %5415 = vmatprep.subr.bf16.mxu0 %v5224
        %5416 = vmatpush1.bf16.msra.mxu0 %v5223
        %5417 = vmatprep.subr.bf16.mxu0 %v5226
        %5418 = vmatpush1.bf16.msra.mxu0 %v5225
        %5419 = vmatprep.subr.bf16.mxu0 %v5228
        %5420 = vmatpush1.bf16.msra.mxu0 %v5227
        %5421 = vmatprep.subr.bf16.mxu0 %v5230
        %5422 = vmatpush1.bf16.msra.mxu0 %v5229
        %5423 = vmatprep.subr.bf16.mxu0 %v5232
        %5424 = vmatpush1.bf16.msra.mxu0 %v5231
        %5425 = vmatprep.subr.bf16.mxu0 %v5234
        %5426 = vmatpush1.bf16.msra.mxu0 %v5233
        %5427 = vmatprep.mubr.bf16.mxu0 %v4814
        %5428 = vmatmul.mubr.bf16.gmra.mrb[0].mxu0 %v4813
        %v5429 = vpop.f32.mrb[0].mxu0
        %v5430 = vadd.f32 0.0, %v5429
        %v5431 = vpop.f32.mrb[0].mxu0
        %v5432 = vadd.f32 0.0, %v5431
        %v5433 = vpop.f32.mrb[0].mxu0
        %v5434 = vpop.f32.mrb[0].mxu0
        %5435 = vdwg.mxu0
        %5436 = vmatprep.subr.bf16.mxu0 %v5236
        %5437 = vmatpush1.bf16.msra.mxu0 %v5235
        %5438 = vmatprep.subr.bf16.mxu0 %v5238
        %5439 = vmatpush1.bf16.msra.mxu0 %v5237
        %5440 = vmatprep.subr.bf16.mxu0 %v5240
        %5441 = vmatpush1.bf16.msra.mxu0 %v5239
        %5442 = vmatprep.subr.bf16.mxu0 %v5242
        %5443 = vmatpush1.bf16.msra.mxu0 %v5241
        %5444 = vmatprep.subr.bf16.mxu0 %v5244
        %5445 = vmatpush1.bf16.msra.mxu0 %v5243
        %5446 = vmatprep.subr.bf16.mxu0 %v5246
        %5447 = vmatpush1.bf16.msra.mxu0 %v5245
        %5448 = vmatprep.subr.bf16.mxu0 %v5248
        %5449 = vmatpush1.bf16.msra.mxu0 %v5247
        %5450 = vmatprep.subr.bf16.mxu0 %v5250
        %5451 = vmatpush1.bf16.msra.mxu0 %v5249
        %5452 = vmatprep.subr.bf16.mxu0 %v5252
        %5453 = vmatpush1.bf16.msra.mxu0 %v5251
        %5454 = vmatprep.subr.bf16.mxu0 %v5254
        %5455 = vmatpush1.bf16.msra.mxu0 %v5253
        %5456 = vmatprep.subr.bf16.mxu0 %v5256
        %5457 = vmatpush1.bf16.msra.mxu0 %v5255
        %5458 = vmatprep.subr.bf16.mxu0 %v5258
        %5459 = vmatpush1.bf16.msra.mxu0 %v5257
        %5460 = vmatprep.subr.bf16.mxu0 %v5260
        %5461 = vmatpush1.bf16.msra.mxu0 %v5259
        %5462 = vmatprep.subr.bf16.mxu0 %v5262
        %5463 = vmatpush1.bf16.msra.mxu0 %v5261
        %5464 = vmatprep.subr.bf16.mxu0 %v5264
        %5465 = vmatpush1.bf16.msra.mxu0 %v5263
        %5466 = vmatprep.subr.bf16.mxu0 %v5266
        %5467 = vmatpush1.bf16.msra.mxu0 %v5265
        %5468 = vmatprep.mubr.bf16.mxu0 %v4816
        %5469 = vmatmul.mubr.bf16.gmra.mrb[0].mxu0 %v4815
        %v5470 = vpop.f32.mrb[0].mxu0
        %v5471 = vadd.f32 %v5430, %v5470
        %v5472 = vpop.f32.mrb[0].mxu0
        %v5473 = vadd.f32 %v5432, %v5472
        %v5474 = vpop.f32.mrb[0].mxu0
        %v5475 = vpop.f32.mrb[0].mxu0
        %5476 = vdwg.mxu0
        %5477 = vmatprep.subr.bf16.mxu0 %v5268
        %5478 = vmatpush1.bf16.msra.mxu0 %v5267
        %5479 = vmatprep.subr.bf16.mxu0 %v5270
        %5480 = vmatpush1.bf16.msra.mxu0 %v5269
        %5481 = vmatprep.subr.bf16.mxu0 %v5272
        %5482 = vmatpush1.bf16.msra.mxu0 %v5271
        %5483 = vmatprep.subr.bf16.mxu0 %v5274
        %5484 = vmatpush1.bf16.msra.mxu0 %v5273
        %5485 = vmatprep.subr.bf16.mxu0 %v5276
        %5486 = vmatpush1.bf16.msra.mxu0 %v5275
        %5487 = vmatprep.subr.bf16.mxu0 %v5278
        %5488 = vmatpush1.bf16.msra.mxu0 %v5277
        %5489 = vmatprep.subr.bf16.mxu0 %v5280
        %5490 = vmatpush1.bf16.msra.mxu0 %v5279
        %5491 = vmatprep.subr.bf16.mxu0 %v5282
        %5492 = vmatpush1.bf16.msra.mxu0 %v5281
        %5493 = vmatprep.subr.bf16.mxu0 %v5284
        %5494 = vmatpush1.bf16.msra.mxu0 %v5283
        %5495 = vmatprep.subr.bf16.mxu0 %v5286
        %5496 = vmatpush1.bf16.msra.mxu0 %v5285
        %5497 = vmatprep.subr.bf16.mxu0 %v5288
        %5498 = vmatpush1.bf16.msra.mxu0 %v5287
        %5499 = vmatprep.subr.bf16.mxu0 %v5290
        %5500 = vmatpush1.bf16.msra.mxu0 %v5289
        %5501 = vmatprep.subr.bf16.mxu0 %v5292
        %5502 = vmatpush1.bf16.msra.mxu0 %v5291
        %5503 = vmatprep.subr.bf16.mxu0 %v5294
        %5504 = vmatpush1.bf16.msra.mxu0 %v5293
        %5505 = vmatprep.subr.bf16.mxu0 %v5296
        %5506 = vmatpush1.bf16.msra.mxu0 %v5295
        %5507 = vmatprep.subr.bf16.mxu0 %v5298
        %5508 = vmatpush1.bf16.msra.mxu0 %v5297
        %5509 = vmatprep.mubr.bf16.mxu0 %v4818
        %5510 = vmatmul.mubr.bf16.gmra.mrb[0].mxu0 %v4817
        %v5511 = vpop.f32.mrb[0].mxu0
        %v5512 = vadd.f32 %v5471, %v5511
        %v5513 = vpop.f32.mrb[0].mxu0
        %v5514 = vadd.f32 %v5473, %v5513
        %v5515 = vpop.f32.mrb[0].mxu0
        %v5516 = vpop.f32.mrb[0].mxu0
        %5517 = vdwg.mxu0
        %v5520 = vcombine.low %v5512, %v5514
        %v5522 = vunpack.c.l.s4 1983009808
        %v5523 = vunpack.c.0.s8 %v5522
        %v5524 = vlaneseq
        %v5525 = vshrl.u32 %v5524, 7
        %v5526 = vsub.s32 %v5523, %v5525
        %v5527 = vrot.slane %v5520, %v5526
        %v5529 = vadd.f32 %v3303, %v5527
        %5530 = vst [vmem:[#allocation2] sm:$0xf] %v5529
        %p5531 = scmp.eq.s32.totalorder %s43, 1
        // Predicated region
        $region117: #{transformer_forward.1} parent=71 // pred_check
          %p5532 = pneg %p5531
        $region118: #{transformer_forward.1} parent=71 // pred_check_branch
          %5534 = sbr.rel (%p5532) target = $region120
        $region119: #{transformer_forward.1} parent=71 // pred_region
          %v5535 = vmul.f32 %v5529, %v5529
          %v5538 = vunpack.c.l.s4 1983009808
          %v5539 = vunpack.c.0.s8 %v5538
          %v5540 = vlaneseq
          %v5541 = vshrl.u32 %v5540, 7
          %v5542 = vsub.s32 %v5539, %v5541
          %v5543 = vrot.slane %v5535, %v5542
          %v5544 = vcombine.high %v5543, %v5543
          %v5547 = vsel %vm868, %v5543, 0.0
          %v5548 = vsel %vm868, %v5544, 0.0
          %v5549 = vadd.f32 %v5547, %v5548
          %5550 = vadd.xlane.f32.xlu0 %v5549
          %v5551 = vpop.xlane.xlu0 %5550
          %v5552 = vmul.f32 %v5551, %v874
          %v5553 = vadd.f32 %v5552, 1e-05
          %v5554 = vrsqrt.pop %v5553
          %v5557 = vunpack.c.l.s4 269488144
          %v5558 = vunpack.c.0.s8 %v5557
          %v5559 = vlaneseq
          %v5560 = vshrl.u32 %v5559, 7
          %v5561 = vsub.s32 %v5558, %v5560
          %v5562 = vrot.slane %v5554, %v5561
          %v5564 = vmul.f32 %v5529, %v5562
          %v5565 = vld [vmem:[#allocation18] sm:$0x3]
          %v5567 = vlaneseq
          %v5568 = vshrl.u32 %v5567, 7
          %v5569 = vsub.s32 0, %v5568
          %v5570 = vrot.slane %v5565, %v5569
          %v5571 = vlaneseq
          %v5572 = vshrl.u32 %v5571, 7
          %v5573 = vsub.s32 1, %v5572
          %v5574 = vrot.slane %v5565, %v5573
          %v5575 = vcombine.low %v5570, %v5574
          %v5577 = vunpack.c.l.s4 1983009808
          %v5578 = vunpack.c.0.s8 %v5577
          %v5579 = vlaneseq
          %v5580 = vshrl.u32 %v5579, 7
          %v5581 = vsub.s32 %v5578, %v5580
          %v5582 = vrot.slane %v5575, %v5581
          %v5584 = vmul.f32 %v5564, %v5582
          %v5587 = vunpack.c.l.s4 1983009808
          %v5588 = vunpack.c.0.s8 %v5587
          %v5589 = vlaneseq
          %v5590 = vshrl.u32 %v5589, 7
          %v5591 = vsub.s32 %v5588, %v5590
          %v5592 = vrot.slane %v5584, %v5591
          %v5593 = vcombine.high %v5592, %v5592
          %v5596 = vpack.c.bf16 %v5592, %v5592
          %v5597 = vpack.c.bf16 %v5593, %v5593
          %v5598 = vld [vmem:[#allocation19] sm:$0xff]
          %v5599 = vld [vmem:[#allocation19 + $0x8] sm:$0xff]
          %v5600 = vld [vmem:[#allocation19 + $0x10] sm:$0xff]
          %v5601 = vld [vmem:[#allocation19 + $0x18] sm:$0xff]
          %v5602 = vld [vmem:[#allocation19 + $0x20] sm:$0xff]
          %v5603 = vld [vmem:[#allocation19 + $0x28] sm:$0xff]
          %v5604 = vld [vmem:[#allocation19 + $0x30] sm:$0xff]
          %v5605 = vld [vmem:[#allocation19 + $0x38] sm:$0xff]
          %v5606 = vld [vmem:[#allocation19 + $0x40] sm:$0xff]
          %v5607 = vld [vmem:[#allocation19 + $0x48] sm:$0xff]
          %v5608 = vld [vmem:[#allocation19 + $0x50] sm:$0xff]
          %v5609 = vld [vmem:[#allocation19 + $0x58] sm:$0xff]
          %v5610 = vld [vmem:[#allocation19 + $0x60] sm:$0xff]
          %v5611 = vld [vmem:[#allocation19 + $0x68] sm:$0xff]
          %v5612 = vld [vmem:[#allocation19 + $0x70] sm:$0xff]
          %v5613 = vld [vmem:[#allocation19 + $0x78] sm:$0xff]
          %v5614 = vld [vmem:[#allocation19 + $0x80] sm:$0xff]
          %v5615 = vld [vmem:[#allocation19 + $0x88] sm:$0xff]
          %v5616 = vld [vmem:[#allocation19 + $0x90] sm:$0xff]
          %v5617 = vld [vmem:[#allocation19 + $0x98] sm:$0xff]
          %v5618 = vld [vmem:[#allocation19 + $0xa0] sm:$0xff]
          %v5619 = vld [vmem:[#allocation19 + $0xa8] sm:$0xff]
          %v5620 = vld [vmem:[#allocation19 + $0xb0] sm:$0xff]
          %v5621 = vld [vmem:[#allocation19 + $0xb8] sm:$0xff]
          %v5622 = vld [vmem:[#allocation19 + $0xc0] sm:$0xff]
          %v5623 = vld [vmem:[#allocation19 + $0xc8] sm:$0xff]
          %v5624 = vld [vmem:[#allocation19 + $0xd0] sm:$0xff]
          %v5625 = vld [vmem:[#allocation19 + $0xd8] sm:$0xff]
          %v5626 = vld [vmem:[#allocation19 + $0xe0] sm:$0xff]
          %v5627 = vld [vmem:[#allocation19 + $0xe8] sm:$0xff]
          %v5628 = vld [vmem:[#allocation19 + $0xf0] sm:$0xff]
          %v5629 = vld [vmem:[#allocation19 + $0xf8] sm:$0xff]
          %v5630 = vld [vmem:[#allocation19 + $0x100] sm:$0xff]
          %v5631 = vld [vmem:[#allocation19 + $0x108] sm:$0xff]
          %v5632 = vld [vmem:[#allocation19 + $0x110] sm:$0xff]
          %v5633 = vld [vmem:[#allocation19 + $0x118] sm:$0xff]
          %v5634 = vld [vmem:[#allocation19 + $0x120] sm:$0xff]
          %v5635 = vld [vmem:[#allocation19 + $0x128] sm:$0xff]
          %v5636 = vld [vmem:[#allocation19 + $0x130] sm:$0xff]
          %v5637 = vld [vmem:[#allocation19 + $0x138] sm:$0xff]
          %v5638 = vld [vmem:[#allocation19 + $0x140] sm:$0xff]
          %v5639 = vld [vmem:[#allocation19 + $0x148] sm:$0xff]
          %v5640 = vld [vmem:[#allocation19 + $0x150] sm:$0xff]
          %v5641 = vld [vmem:[#allocation19 + $0x158] sm:$0xff]
          %v5642 = vld [vmem:[#allocation19 + $0x160] sm:$0xff]
          %v5643 = vld [vmem:[#allocation19 + $0x168] sm:$0xff]
          %v5644 = vld [vmem:[#allocation19 + $0x170] sm:$0xff]
          %v5645 = vld [vmem:[#allocation19 + $0x178] sm:$0xff]
          %v5646 = vld [vmem:[#allocation19 + $0x180] sm:$0xff]
          %v5647 = vld [vmem:[#allocation19 + $0x188] sm:$0xff]
          %v5648 = vld [vmem:[#allocation19 + $0x190] sm:$0xff]
          %v5649 = vld [vmem:[#allocation19 + $0x198] sm:$0xff]
          %v5650 = vld [vmem:[#allocation19 + $0x1a0] sm:$0xff]
          %v5651 = vld [vmem:[#allocation19 + $0x1a8] sm:$0xff]
          %v5652 = vld [vmem:[#allocation19 + $0x1b0] sm:$0xff]
          %v5653 = vld [vmem:[#allocation19 + $0x1b8] sm:$0xff]
          %v5654 = vld [vmem:[#allocation19 + $0x1c0] sm:$0xff]
          %v5655 = vld [vmem:[#allocation19 + $0x1c8] sm:$0xff]
          %v5656 = vld [vmem:[#allocation19 + $0x1d0] sm:$0xff]
          %v5657 = vld [vmem:[#allocation19 + $0x1d8] sm:$0xff]
          %v5658 = vld [vmem:[#allocation19 + $0x1e0] sm:$0xff]
          %v5659 = vld [vmem:[#allocation19 + $0x1e8] sm:$0xff]
          %v5660 = vld [vmem:[#allocation19 + $0x1f0] sm:$0xff]
          %v5661 = vld [vmem:[#allocation19 + $0x1f8] sm:$0xff]
          %v5726 = vunpack.c.l.b16 %v5598
          %v5727 = vunpack.c.h.b16 %v5598
          %v5728 = vunpack.c.l.b16 %v5599
          %v5729 = vunpack.c.h.b16 %v5599
          %v5730 = vunpack.c.l.b16 %v5600
          %v5731 = vunpack.c.h.b16 %v5600
          %v5732 = vunpack.c.l.b16 %v5601
          %v5733 = vunpack.c.h.b16 %v5601
          %v5734 = vunpack.c.l.b16 %v5602
          %v5735 = vunpack.c.h.b16 %v5602
          %v5736 = vunpack.c.l.b16 %v5603
          %v5737 = vunpack.c.h.b16 %v5603
          %v5738 = vunpack.c.l.b16 %v5604
          %v5739 = vunpack.c.h.b16 %v5604
          %v5740 = vunpack.c.l.b16 %v5605
          %v5741 = vunpack.c.h.b16 %v5605
          %v5742 = vunpack.c.l.b16 %v5606
          %v5743 = vunpack.c.h.b16 %v5606
          %v5744 = vunpack.c.l.b16 %v5607
          %v5745 = vunpack.c.h.b16 %v5607
          %v5746 = vunpack.c.l.b16 %v5608
          %v5747 = vunpack.c.h.b16 %v5608
          %v5748 = vunpack.c.l.b16 %v5609
          %v5749 = vunpack.c.h.b16 %v5609
          %v5750 = vunpack.c.l.b16 %v5610
          %v5751 = vunpack.c.h.b16 %v5610
          %v5752 = vunpack.c.l.b16 %v5611
          %v5753 = vunpack.c.h.b16 %v5611
          %v5754 = vunpack.c.l.b16 %v5612
          %v5755 = vunpack.c.h.b16 %v5612
          %v5756 = vunpack.c.l.b16 %v5613
          %v5757 = vunpack.c.h.b16 %v5613
          %v5758 = vunpack.c.l.b16 %v5614
          %v5759 = vunpack.c.h.b16 %v5614
          %v5760 = vunpack.c.l.b16 %v5615
          %v5761 = vunpack.c.h.b16 %v5615
          %v5762 = vunpack.c.l.b16 %v5616
          %v5763 = vunpack.c.h.b16 %v5616
          %v5764 = vunpack.c.l.b16 %v5617
          %v5765 = vunpack.c.h.b16 %v5617
          %v5766 = vunpack.c.l.b16 %v5618
          %v5767 = vunpack.c.h.b16 %v5618
          %v5768 = vunpack.c.l.b16 %v5619
          %v5769 = vunpack.c.h.b16 %v5619
          %v5770 = vunpack.c.l.b16 %v5620
          %v5771 = vunpack.c.h.b16 %v5620
          %v5772 = vunpack.c.l.b16 %v5621
          %v5773 = vunpack.c.h.b16 %v5621
          %v5774 = vunpack.c.l.b16 %v5622
          %v5775 = vunpack.c.h.b16 %v5622
          %v5776 = vunpack.c.l.b16 %v5623
          %v5777 = vunpack.c.h.b16 %v5623
          %v5778 = vunpack.c.l.b16 %v5624
          %v5779 = vunpack.c.h.b16 %v5624
          %v5780 = vunpack.c.l.b16 %v5625
          %v5781 = vunpack.c.h.b16 %v5625
          %v5782 = vunpack.c.l.b16 %v5626
          %v5783 = vunpack.c.h.b16 %v5626
          %v5784 = vunpack.c.l.b16 %v5627
          %v5785 = vunpack.c.h.b16 %v5627
          %v5786 = vunpack.c.l.b16 %v5628
          %v5787 = vunpack.c.h.b16 %v5628
          %v5788 = vunpack.c.l.b16 %v5629
          %v5789 = vunpack.c.h.b16 %v5629
          %v5790 = vunpack.c.l.b16 %v5630
          %v5791 = vunpack.c.h.b16 %v5630
          %v5792 = vunpack.c.l.b16 %v5631
          %v5793 = vunpack.c.h.b16 %v5631
          %v5794 = vunpack.c.l.b16 %v5632
          %v5795 = vunpack.c.h.b16 %v5632
          %v5796 = vunpack.c.l.b16 %v5633
          %v5797 = vunpack.c.h.b16 %v5633
          %v5798 = vunpack.c.l.b16 %v5634
          %v5799 = vunpack.c.h.b16 %v5634
          %v5800 = vunpack.c.l.b16 %v5635
          %v5801 = vunpack.c.h.b16 %v5635
          %v5802 = vunpack.c.l.b16 %v5636
          %v5803 = vunpack.c.h.b16 %v5636
          %v5804 = vunpack.c.l.b16 %v5637
          %v5805 = vunpack.c.h.b16 %v5637
          %v5806 = vunpack.c.l.b16 %v5638
          %v5807 = vunpack.c.h.b16 %v5638
          %v5808 = vunpack.c.l.b16 %v5639
          %v5809 = vunpack.c.h.b16 %v5639
          %v5810 = vunpack.c.l.b16 %v5640
          %v5811 = vunpack.c.h.b16 %v5640
          %v5812 = vunpack.c.l.b16 %v5641
          %v5813 = vunpack.c.h.b16 %v5641
          %v5814 = vunpack.c.l.b16 %v5642
          %v5815 = vunpack.c.h.b16 %v5642
          %v5816 = vunpack.c.l.b16 %v5643
          %v5817 = vunpack.c.h.b16 %v5643
          %v5818 = vunpack.c.l.b16 %v5644
          %v5819 = vunpack.c.h.b16 %v5644
          %v5820 = vunpack.c.l.b16 %v5645
          %v5821 = vunpack.c.h.b16 %v5645
          %v5822 = vunpack.c.l.b16 %v5646
          %v5823 = vunpack.c.h.b16 %v5646
          %v5824 = vunpack.c.l.b16 %v5647
          %v5825 = vunpack.c.h.b16 %v5647
          %v5826 = vunpack.c.l.b16 %v5648
          %v5827 = vunpack.c.h.b16 %v5648
          %v5828 = vunpack.c.l.b16 %v5649
          %v5829 = vunpack.c.h.b16 %v5649
          %v5830 = vunpack.c.l.b16 %v5650
          %v5831 = vunpack.c.h.b16 %v5650
          %v5832 = vunpack.c.l.b16 %v5651
          %v5833 = vunpack.c.h.b16 %v5651
          %v5834 = vunpack.c.l.b16 %v5652
          %v5835 = vunpack.c.h.b16 %v5652
          %v5836 = vunpack.c.l.b16 %v5653
          %v5837 = vunpack.c.h.b16 %v5653
          %v5838 = vunpack.c.l.b16 %v5654
          %v5839 = vunpack.c.h.b16 %v5654
          %v5840 = vunpack.c.l.b16 %v5655
          %v5841 = vunpack.c.h.b16 %v5655
          %v5842 = vunpack.c.l.b16 %v5656
          %v5843 = vunpack.c.h.b16 %v5656
          %v5844 = vunpack.c.l.b16 %v5657
          %v5845 = vunpack.c.h.b16 %v5657
          %v5846 = vunpack.c.l.b16 %v5658
          %v5847 = vunpack.c.h.b16 %v5658
          %v5848 = vunpack.c.l.b16 %v5659
          %v5849 = vunpack.c.h.b16 %v5659
          %v5850 = vunpack.c.l.b16 %v5660
          %v5851 = vunpack.c.h.b16 %v5660
          %v5852 = vunpack.c.l.b16 %v5661
          %v5853 = vunpack.c.h.b16 %v5661
          %v5854 = vpack.c.b16 %v5730, %v5726
          %v5855 = vpack.c.b16 %v5731, %v5727
          %v5856 = vpack.c.b16 %v5732, %v5728
          %v5857 = vpack.c.b16 %v5733, %v5729
          %v5858 = vpack.c.b16 %v5738, %v5734
          %v5859 = vpack.c.b16 %v5739, %v5735
          %v5860 = vpack.c.b16 %v5740, %v5736
          %v5861 = vpack.c.b16 %v5741, %v5737
          %v5862 = vpack.c.b16 %v5746, %v5742
          %v5863 = vpack.c.b16 %v5747, %v5743
          %v5864 = vpack.c.b16 %v5748, %v5744
          %v5865 = vpack.c.b16 %v5749, %v5745
          %v5866 = vpack.c.b16 %v5754, %v5750
          %v5867 = vpack.c.b16 %v5755, %v5751
          %v5868 = vpack.c.b16 %v5756, %v5752
          %v5869 = vpack.c.b16 %v5757, %v5753
          %v5870 = vpack.c.b16 %v5762, %v5758
          %v5871 = vpack.c.b16 %v5763, %v5759
          %v5872 = vpack.c.b16 %v5764, %v5760
          %v5873 = vpack.c.b16 %v5765, %v5761
          %v5874 = vpack.c.b16 %v5770, %v5766
          %v5875 = vpack.c.b16 %v5771, %v5767
          %v5876 = vpack.c.b16 %v5772, %v5768
          %v5877 = vpack.c.b16 %v5773, %v5769
          %v5878 = vpack.c.b16 %v5778, %v5774
          %v5879 = vpack.c.b16 %v5779, %v5775
          %v5880 = vpack.c.b16 %v5780, %v5776
          %v5881 = vpack.c.b16 %v5781, %v5777
          %v5882 = vpack.c.b16 %v5786, %v5782
          %v5883 = vpack.c.b16 %v5787, %v5783
          %v5884 = vpack.c.b16 %v5788, %v5784
          %v5885 = vpack.c.b16 %v5789, %v5785
          %v5886 = vpack.c.b16 %v5794, %v5790
          %v5887 = vpack.c.b16 %v5795, %v5791
          %v5888 = vpack.c.b16 %v5796, %v5792
          %v5889 = vpack.c.b16 %v5797, %v5793
          %v5890 = vpack.c.b16 %v5802, %v5798
          %v5891 = vpack.c.b16 %v5803, %v5799
          %v5892 = vpack.c.b16 %v5804, %v5800
          %v5893 = vpack.c.b16 %v5805, %v5801
          %v5894 = vpack.c.b16 %v5810, %v5806
          %v5895 = vpack.c.b16 %v5811, %v5807
          %v5896 = vpack.c.b16 %v5812, %v5808
          %v5897 = vpack.c.b16 %v5813, %v5809
          %v5898 = vpack.c.b16 %v5818, %v5814
          %v5899 = vpack.c.b16 %v5819, %v5815
          %v5900 = vpack.c.b16 %v5820, %v5816
          %v5901 = vpack.c.b16 %v5821, %v5817
          %v5902 = vpack.c.b16 %v5826, %v5822
          %v5903 = vpack.c.b16 %v5827, %v5823
          %v5904 = vpack.c.b16 %v5828, %v5824
          %v5905 = vpack.c.b16 %v5829, %v5825
          %v5906 = vpack.c.b16 %v5834, %v5830
          %v5907 = vpack.c.b16 %v5835, %v5831
          %v5908 = vpack.c.b16 %v5836, %v5832
          %v5909 = vpack.c.b16 %v5837, %v5833
          %v5910 = vpack.c.b16 %v5842, %v5838
          %v5911 = vpack.c.b16 %v5843, %v5839
          %v5912 = vpack.c.b16 %v5844, %v5840
          %v5913 = vpack.c.b16 %v5845, %v5841
          %v5914 = vpack.c.b16 %v5850, %v5846
          %v5915 = vpack.c.b16 %v5851, %v5847
          %v5916 = vpack.c.b16 %v5852, %v5848
          %v5917 = vpack.c.b16 %v5853, %v5849
          %5982 = vmatprep.subr.bf16.mxu0 %v5855
          %5983 = vmatpush1.bf16.msra.mxu0 %v5854
          %5984 = vmatprep.subr.bf16.mxu0 %v5859
          %5985 = vmatpush1.bf16.msra.mxu0 %v5858
          %5986 = vmatprep.subr.bf16.mxu0 %v5863
          %5987 = vmatpush1.bf16.msra.mxu0 %v5862
          %5988 = vmatprep.subr.bf16.mxu0 %v5867
          %5989 = vmatpush1.bf16.msra.mxu0 %v5866
          %5990 = vmatprep.subr.bf16.mxu0 %v5871
          %5991 = vmatpush1.bf16.msra.mxu0 %v5870
          %5992 = vmatprep.subr.bf16.mxu0 %v5875
          %5993 = vmatpush1.bf16.msra.mxu0 %v5874
          %5994 = vmatprep.subr.bf16.mxu0 %v5879
          %5995 = vmatpush1.bf16.msra.mxu0 %v5878
          %5996 = vmatprep.subr.bf16.mxu0 %v5883
          %5997 = vmatpush1.bf16.msra.mxu0 %v5882
          %5998 = vmatprep.subr.bf16.mxu0 %v5887
          %5999 = vmatpush1.bf16.msra.mxu0 %v5886
          %6000 = vmatprep.subr.bf16.mxu0 %v5891
          %6001 = vmatpush1.bf16.msra.mxu0 %v5890
          %6002 = vmatprep.subr.bf16.mxu0 %v5895
          %6003 = vmatpush1.bf16.msra.mxu0 %v5894
          %6004 = vmatprep.subr.bf16.mxu0 %v5899
          %6005 = vmatpush1.bf16.msra.mxu0 %v5898
          %6006 = vmatprep.subr.bf16.mxu0 %v5903
          %6007 = vmatpush1.bf16.msra.mxu0 %v5902
          %6008 = vmatprep.subr.bf16.mxu0 %v5907
          %6009 = vmatpush1.bf16.msra.mxu0 %v5906
          %6010 = vmatprep.subr.bf16.mxu0 %v5911
          %6011 = vmatpush1.bf16.msra.mxu0 %v5910
          %6012 = vmatprep.subr.bf16.mxu0 %v5915
          %6013 = vmatpush1.bf16.msra.mxu0 %v5914
          %6014 = vmatprep.mubr.bf16.mxu0 %v5597
          %6015 = vmatmul.mubr.bf16.gmra.mrb[0].mxu0 %v5596
          %v6016 = vpop.f32.mrb[0].mxu0
          %v6017 = vadd.f32 0.0, %v6016
          %v6018 = vpop.f32.mrb[0].mxu0
          %v6019 = vadd.f32 0.0, %v6018
          %v6020 = vpop.f32.mrb[0].mxu0
          %v6021 = vpop.f32.mrb[0].mxu0
          %6022 = vdwg.mxu0
          %6023 = vmatprep.subr.bf16.mxu0 %v5857
          %6024 = vmatpush1.bf16.msra.mxu0 %v5856
          %6025 = vmatprep.subr.bf16.mxu0 %v5861
          %6026 = vmatpush1.bf16.msra.mxu0 %v5860
          %6027 = vmatprep.subr.bf16.mxu0 %v5865
          %6028 = vmatpush1.bf16.msra.mxu0 %v5864
          %6029 = vmatprep.subr.bf16.mxu0 %v5869
          %6030 = vmatpush1.bf16.msra.mxu0 %v5868
          %6031 = vmatprep.subr.bf16.mxu0 %v5873
          %6032 = vmatpush1.bf16.msra.mxu0 %v5872
          %6033 = vmatprep.subr.bf16.mxu0 %v5877
          %6034 = vmatpush1.bf16.msra.mxu0 %v5876
          %6035 = vmatprep.subr.bf16.mxu0 %v5881
          %6036 = vmatpush1.bf16.msra.mxu0 %v5880
          %6037 = vmatprep.subr.bf16.mxu0 %v5885
          %6038 = vmatpush1.bf16.msra.mxu0 %v5884
          %6039 = vmatprep.subr.bf16.mxu0 %v5889
          %6040 = vmatpush1.bf16.msra.mxu0 %v5888
          %6041 = vmatprep.subr.bf16.mxu0 %v5893
          %6042 = vmatpush1.bf16.msra.mxu0 %v5892
          %6043 = vmatprep.subr.bf16.mxu0 %v5897
          %6044 = vmatpush1.bf16.msra.mxu0 %v5896
          %6045 = vmatprep.subr.bf16.mxu0 %v5901
          %6046 = vmatpush1.bf16.msra.mxu0 %v5900
          %6047 = vmatprep.subr.bf16.mxu0 %v5905
          %6048 = vmatpush1.bf16.msra.mxu0 %v5904
          %6049 = vmatprep.subr.bf16.mxu0 %v5909
          %6050 = vmatpush1.bf16.msra.mxu0 %v5908
          %6051 = vmatprep.subr.bf16.mxu0 %v5913
          %6052 = vmatpush1.bf16.msra.mxu0 %v5912
          %6053 = vmatprep.subr.bf16.mxu0 %v5917
          %6054 = vmatpush1.bf16.msra.mxu0 %v5916
          %6055 = vmatprep.mubr.bf16.mxu0 %v5597
          %6056 = vmatmul.mubr.bf16.gmra.mrb[0].mxu0 %v5596
          %v6057 = vpop.f32.mrb[0].mxu0
          %v6058 = vadd.f32 0.0, %v6057
          %v6059 = vpop.f32.mrb[0].mxu0
          %v6060 = vadd.f32 0.0, %v6059
          %v6061 = vpop.f32.mrb[0].mxu0
          %v6062 = vpop.f32.mrb[0].mxu0
          %6063 = vdwg.mxu0
          %v6068 = vcombine.low %v6017, %v6019
          %v6069 = vcombine.low %v6058, %v6060
          %v6071 = vunpack.c.l.s4 1983009808
          %v6072 = vunpack.c.0.s8 %v6071
          %v6073 = vlaneseq
          %v6074 = vshrl.u32 %v6073, 7
          %v6075 = vsub.s32 %v6072, %v6074
          %v6076 = vrot.slane %v6068, %v6075
          %v6078 = vunpack.c.l.s4 1983009808
          %v6079 = vunpack.c.0.s8 %v6078
          %v6080 = vlaneseq
          %v6081 = vshrl.u32 %v6080, 7
          %v6082 = vsub.s32 %v6079, %v6081
          %v6083 = vrot.slane %v6069, %v6082
          %v6084 = vcombine.low %v6076, %v6083
          %6086 = vst [vmem:[%s14] sm:$0xff] %v6084
        $region120: #{transformer_forward.1} parent=71 // pred_fallthru
          _
        %s6087 = sld [smem:[#allocation4]]
        %p6088 = scmp.lt.s32.totalorder %s43, 1
        %s6089 = scalar_select %p6088, %s43, 1
        %p6090 = scmp.lt.s32.totalorder %s6087, 15
        %s6091 = scalar_select %p6090, %s6087, 15
        %s6092 = smul.addr %s6089, 16
        %s6093 = sadd.s32 %s6091, %s6092
        %s6094 = scalar_lea.vmem %s15, %s6093
        %s6095 = sld [smem:[#allocation4]]
        %p6096 = scmp.lt.s32.totalorder %s43, 1
        %s6097 = scalar_select %p6096, %s43, 1
        %p6098 = scmp.lt.s32.totalorder %s6095, 15
        %s6099 = scalar_select %p6098, %s6095, 15
        %s6100 = smul.addr %s6097, 16
        %s6101 = sadd.s32 %s6099, %s6100
        %s6102 = scalar_lea.vmem %s16, %s6101
        // Predicated region
        $region121: #{transformer_forward.1} parent=71 // pred_check
          %p6103 = pneg %p383
        $region122: #{transformer_forward.1} parent=71 // pred_check_branch
          %6105 = sbr.rel (%p6103) target = $region124
        $region123: #{transformer_forward.1} parent=71 // pred_region
          _
        $region124: #{transformer_forward.1} parent=71 // pred_fallthru
          _
        // Predicated region
        $region125: #{transformer_forward.1} parent=71 // pred_check
          %p6106 = pneg %p413
        $region126: #{transformer_forward.1} parent=71 // pred_check_branch
          %6108 = sbr.rel (%p6106) target = $region128
        $region127: #{transformer_forward.1} parent=71 // pred_region
          %s6109 = sld [smem:[#allocation4]]
        $region128: #{transformer_forward.1} parent=71 // pred_fallthru
          _
        // Predicated region
        $region129: #{transformer_forward.1} parent=71 // pred_check
          %p6110 = pneg %p443
        $region130: #{transformer_forward.1} parent=71 // pred_check_branch
          %6112 = sbr.rel (%p6110) target = $region132
        $region131: #{transformer_forward.1} parent=71 // pred_region
          %s6113 = sld [smem:[#allocation4]]
        $region132: #{transformer_forward.1} parent=71 // pred_fallthru
          _
        // Predicated region
        $region133: #{transformer_forward.1} parent=71 // pred_check
          %p6114 = pneg %p383
        $region134: #{transformer_forward.1} parent=71 // pred_check_branch
          %6116 = sbr.rel (%p6114) target = $region136
        $region135: #{transformer_forward.1} parent=71 // pred_region
          _
        $region136: #{transformer_forward.1} parent=71 // pred_fallthru
          _
      $region72: #{transformer_forward.1} parent=5 // pred_fallthru
        _
      %p6117 = scmp.le.s32.totalorder 2, %s38
      // Predicated region
      $region137: #{transformer_forward.1} parent=5 // pred_check
        %p6118 = pneg %p6117
      $region138: #{transformer_forward.1} parent=5 // pred_check_branch
        %6120 = sbr.rel (%p6118) target = $region140
      $region139: #{transformer_forward.1} parent=5 // pred_region
        %s6121 = ssub.s32 %s38, 2
        // Predicated region
        $region141: #{transformer_forward.1} parent=139 // pred_check
          %p6122 = pneg %p419
        $region142: #{transformer_forward.1} parent=139 // pred_check_branch
          %6124 = sbr.rel (%p6122) target = $region144
        $region143: #{transformer_forward.1} parent=139 // pred_region
          %s6125 = sld [smem:[#allocation4]]
          %p6126 = scmp.lt.s32.totalorder %s44, 1
          %s6127 = scalar_select %p6126, %s44, 1
          %p6128 = scmp.lt.s32.totalorder %s6125, 15
          %s6129 = scalar_select %p6128, %s6125, 15
          %s6130 = smul.addr %s6127, 16
          %s6131 = sadd.s32 %s6129, %s6130
          %s6132 = scalar_lea.vmem %s15, %s6131
        $region144: #{transformer_forward.1} parent=139 // pred_fallthru
          _
        // Predicated region
        $region145: #{transformer_forward.1} parent=139 // pred_check
          %p6133 = pneg %p449
        $region146: #{transformer_forward.1} parent=139 // pred_check_branch
          %6135 = sbr.rel (%p6133) target = $region148
        $region147: #{transformer_forward.1} parent=139 // pred_region
          %s6136 = sld [smem:[#allocation4]]
          %p6137 = scmp.lt.s32.totalorder %s44, 1
          %s6138 = scalar_select %p6137, %s44, 1
          %p6139 = scmp.lt.s32.totalorder %s6136, 15
          %s6140 = scalar_select %p6139, %s6136, 15
          %s6141 = smul.addr %s6138, 16
          %s6142 = sadd.s32 %s6140, %s6141
          %s6143 = scalar_lea.vmem %s16, %s6142
        $region148: #{transformer_forward.1} parent=139 // pred_fallthru
          _
      $region140: #{transformer_forward.1} parent=5 // pred_fallthru
        _
    $region6: #{transformer_forward.1} parent=1 // loop_footer
      %s42 = sadd.s32 1, %s38
    $region7: #{transformer_forward.1} parent=1 // loop_footer_branch
      %37 = sbr.rel target = $region3
    $region8: #{transformer_forward.1} parent=1 // loop_exit
      _
    %6144 = vsyncpa [#allocation6], 1
    %s6145 = scalar_lea.sflag [#allocation6], 1
    %6146 = vsyncpa %s6145, 1
    %6147 = vsyncpa [#allocation8], 1
    %s6148 = scalar_lea.sflag [#allocation8], 1
    %6149 = vsyncpa %s6148, 1
    %6150 = vsyncpa [#allocation11], 1
    %s6151 = scalar_lea.sflag [#allocation11], 1
    %6152 = vsyncpa %s6151, 1
    %6153 = vsyncpa [#allocation14], 1
    %s6154 = scalar_lea.sflag [#allocation14], 1
    %6155 = vsyncpa %s6154, 1
    %6156 = vsyncpa [#allocation17], 1
    %6157 = vsyncpa [#allocation20], 1

</llo_original>
